<compile_context>
chip_gen: v7x
topology: tpu7x:2x2x1
jax: 0.10.0
libtpu: 0.0.40
codegen_flags: <defaults>
</compile_context>

<pallas_src>
import math

import jax
import jax.numpy as jnp
from jax.experimental import pallas as pl
from jax.experimental.pallas import tpu as pltpu

# ----------------------------- config (small but structure-exact) -----------------------------
VOCAB = 1000          # vocab_size (module default 10000; small here)
EMBED = 256           # embed_dim (module default)
NUM_HEADS = 8
HEAD_DIM = EMBED // NUM_HEADS
NUM_LAYERS = 6        # ContractEncoder default
FFN_DIM = 4 * EMBED
MAX_POS = 1000
LN_EPS = 1e-5

BATCH = 2
SEQ = 8

VULN_TYPES = ["reentrancy", "integer_overflow", "access_control",
              "timestamp_dependency", "unchecked_calls"]

# packed per-layer (E,)-sized vectors, padded to 16 sublanes
VEC_ROWS = 16
V_BQ, V_BK, V_BV, V_BO, V_G1, V_BE1, V_G2, V_BE2, V_BF2 = range(9)

# packed big weight: [ wqkv (3E) | wo (E) | w1 (4E) ] along lanes -> 8E = 2048 columns
WO_OFF = 3 * EMBED     # 768
W1_OFF = 4 * EMBED     # 1024
BIGW_COLS = 8 * EMBED  # 2048

# fused detector: hidden = [5 x 128 vuln | 64 risk | 32 conf | pad] -> 768
#                 output = [10 vuln logits | risk | conf | pad]     -> 128 (lane dense)
DET_HID = 768
RISK_HID_OFF = 5 * 128            # 640
CONF_HID_OFF = RISK_HID_OFF + 64  # 704
DET_OUT = 128
RISK_COL = 10
CONF_COL = 11

NEG_BIG = -1e30


# ----------------------------------- in-kernel helpers ---------------------------------------
def _layer_norm(y, gamma, beta):
    mean = jnp.mean(y, axis=-1, keepdims=True)
    var = jnp.mean((y - mean) ** 2, axis=-1, keepdims=True)
    return (y - mean) * jax.lax.rsqrt(var + LN_EPS) * gamma + beta


# --------------------------- fused encoder + detector kernel ---------------------------------
def fused_kernel(x_ref, hmask_ref, bbias_ref, pool_ref,
                 bigw_ref, w2_ref, vec_ref, bf1_ref,
                 dw1_ref, db1_ref, dw2_ref, db2_ref,
                 out_ref, act_ref):
    l = pl.program_id(0)

    # initialize the carried activation from the embedded input at the first layer
    @pl.when(l == 0)
    def _():
        act_ref[...] = x_ref[...]

    x = act_ref[...]                                   # (B*S, E) f32
    BS = x.shape[0]

    vec = vec_ref[0]                                   # (VEC_ROWS, E) f32
    bq = vec[V_BQ:V_BQ + 1]
    bk = vec[V_BK:V_BK + 1]
    bv = vec[V_BV:V_BV + 1]
    bo = vec[V_BO:V_BO + 1]
    g1 = vec[V_G1:V_G1 + 1]
    be1 = vec[V_BE1:V_BE1 + 1]
    g2 = vec[V_G2:V_G2 + 1]
    be2 = vec[V_BE2:V_BE2 + 1]
    bf2 = vec[V_BF2:V_BF2 + 1]

    head_mask = hmask_ref[...]                         # (H, E) f32, hoisted constant
    batch_bias = bbias_ref[...]                        # (B*S*H, B*S) f32, hoisted constant

    # packed weight slices (lane offsets are multiples of 128 -> no relayout)
    wqkv = bigw_ref[0, :, 0:WO_OFF]                    # (E, 3E) bf16
    wo = bigw_ref[0, :, WO_OFF:W1_OFF]                 # (E, E)  bf16
    w1 = bigw_ref[0, :, W1_OFF:BIGW_COLS]              # (E, 4E) bf16

    # fused QKV projection (1/sqrt(head_dim) already folded into Wq / bq at init)
    qkv = jnp.dot(x.astype(jnp.bfloat16), wqkv,
                  preferred_element_type=jnp.float32)  # (B*S, 3E)
    q = qkv[:, :EMBED] + bq
    k = qkv[:, EMBED:2 * EMBED] + bk
    v = qkv[:, 2 * EMBED:] + bv

    # Multi-head attention without per-head slicing/concat:
    # expand q rows per head with a lane mask so every matmul keeps E=256 lanes.
    q_exp = (q[:, None, :] * head_mask[None, :, :]).reshape(BS * NUM_HEADS, EMBED)
    # scores[(b,i,h), (b',j)] = sum_{c in head h} q[b,i,c] * k[b',j,c]; cross-batch pairs masked.
    scores = jax.lax.dot_general(q_exp, k, (((1,), (1,)), ((), ())),
                                 preferred_element_type=jnp.float32)    # (B*S*H, B*S)
    scores = scores + batch_bias
    scores = scores - jnp.max(scores, axis=-1, keepdims=True)
    p = jnp.exp(scores)
    p = p * pl.reciprocal(jnp.sum(p, axis=-1, keepdims=True), approx=True)
    att = jnp.dot(p, v, preferred_element_type=jnp.float32)             # (B*S*H, E)
    attended = jnp.sum(att.reshape(BS, NUM_HEADS, EMBED) * head_mask[None, :, :],
                       axis=1)                                          # (B*S, E)

    attn_out = jnp.dot(attended.astype(jnp.bfloat16), wo,
                       preferred_element_type=jnp.float32) + bo
    y = _layer_norm(x + attn_out, g1, be1)

    # FFN: Linear(E, 4E) -> ReLU -> (Dropout = identity) -> Linear(4E, E)
    h1 = jnp.maximum(
        jnp.dot(y.astype(jnp.bfloat16), w1,
                preferred_element_type=jnp.float32) + bf1_ref[0], 0.0)
    f = jnp.dot(h1.astype(jnp.bfloat16), w2_ref[0],
                preferred_element_type=jnp.float32) + bf2
    z = _layer_norm(y + f, g2, be2)
    act_ref[...] = z

    # fused detector heads after the last layer (mean-pool + fused block-diagonal MLPs)
    @pl.when(l == NUM_LAYERS - 1)
    def _():
        pooled = jnp.dot(pool_ref[...], z,
                         preferred_element_type=jnp.float32)             # (B, E)
        hd = jnp.maximum(
            jnp.dot(pooled.astype(jnp.bfloat16), dw1_ref[...],
                    preferred_element_type=jnp.float32) + db1_ref[...], 0.0)
        logits = jnp.dot(hd.astype(jnp.bfloat16), dw2_ref[...],
                         preferred_element_type=jnp.float32) + db2_ref[...]
        out_ref[...] = logits                                            # (B, 128)


def run_fused_model(x_flat, head_mask, batch_bias, pool_mat, params):
    BS, E = x_flat.shape
    L = NUM_LAYERS
    in_specs = [
        pl.BlockSpec((BS, E), lambda l: (0, 0)),                     # embedded input (fetched once)
        pl.BlockSpec((NUM_HEADS, E), lambda l: (0, 0)),              # per-head lane mask
        pl.BlockSpec((BS * NUM_HEADS, BS), lambda l: (0, 0)),        # cross-batch attention bias
        pl.BlockSpec((BATCH, BS), lambda l: (0, 0)),                 # per-batch mean-pool matrix
        pl.BlockSpec((1, E, BIGW_COLS), lambda l: (l, 0, 0)),        # packed wqkv|wo|w1 (per layer)
        pl.BlockSpec((1, FFN_DIM, E), lambda l: (l, 0, 0)),          # w2
        pl.BlockSpec((1, VEC_ROWS, E), lambda l: (l, 0, 0)),         # packed biases / LN params
        pl.BlockSpec((1, 1, FFN_DIM), lambda l: (l, 0, 0)),          # bf1
        pl.BlockSpec((E, DET_HID), lambda l: (0, 0)),                # detector fused W1
        pl.BlockSpec((1, DET_HID), lambda l: (0, 0)),                # detector fused b1
        pl.BlockSpec((DET_HID, DET_OUT), lambda l: (0, 0)),          # detector fused W2
        pl.BlockSpec((1, DET_OUT), lambda l: (0, 0)),                # detector fused b2
    ]
    out_spec = pl.BlockSpec((BATCH, DET_OUT), lambda l: (0, 0))
    return pl.pallas_call(
        fused_kernel,
        out_shape=jax.ShapeDtypeStruct((BATCH, DET_OUT), jnp.float32),
        grid=(L,),
        in_specs=in_specs,
        out_specs=out_spec,
        scratch_shapes=[pltpu.VMEM((BS, E), jnp.float32)],           # carried activation
        compiler_params=pltpu.CompilerParams(
            dimension_semantics=("arbitrary",)),
    )(x_flat, head_mask, batch_bias, pool_mat,
      params["bigw"], params["w2"], params["vec"], params["bf1"],
      params["dw1"], params["db1"], params["dw2"], params["db2"])


# ------------------------------ parameter initialization -------------------------------------
def init_params(key):
    keys = iter(jax.random.split(key, 64))

    def rnd(shape, scale=0.02):
        return jax.random.normal(next(keys), shape, jnp.float32) * scale

    params = {}
    params["embedding"] = rnd((VOCAB, EMBED))
    params["pos"] = jax.random.normal(next(keys), (MAX_POS, EMBED), jnp.float32)

    L = NUM_LAYERS
    scale = 1.0 / math.sqrt(HEAD_DIM)

    wq = rnd((L, EMBED, EMBED)); wk = rnd((L, EMBED, EMBED)); wv = rnd((L, EMBED, EMBED))
    bq = rnd((L, EMBED)); bk = rnd((L, EMBED)); bv = rnd((L, EMBED))
    wo = rnd((L, EMBED, EMBED)); bo = rnd((L, EMBED))
    w1 = rnd((L, EMBED, FFN_DIM)); bf1 = rnd((L, FFN_DIM))
    w2 = rnd((L, FFN_DIM, EMBED)); bf2 = rnd((L, EMBED))
    g1 = jnp.ones((L, EMBED), jnp.float32); be1 = jnp.zeros((L, EMBED), jnp.float32)
    g2 = jnp.ones((L, EMBED), jnp.float32); be2 = jnp.zeros((L, EMBED), jnp.float32)

    # pack [ Wq*scale | Wk | Wv | Wo | W1 ] along lanes; fold softmax scale into Wq / bq
    bigw = jnp.concatenate([wq * scale, wk, wv, wo, w1], axis=-1)    # (L, E, 8E)

    vec = jnp.zeros((L, VEC_ROWS, EMBED), jnp.float32)
    vec = vec.at[:, V_BQ].set(bq * scale).at[:, V_BK].set(bk).at[:, V_BV].set(bv)
    vec = vec.at[:, V_BO].set(bo).at[:, V_G1].set(g1).at[:, V_BE1].set(be1)
    vec = vec.at[:, V_G2].set(g2).at[:, V_BE2].set(be2).at[:, V_BF2].set(bf2)

    params["bigw"] = bigw.astype(jnp.bfloat16)
    params["w2"] = w2.astype(jnp.bfloat16)
    params["vec"] = vec
    params["bf1"] = bf1[:, None, :]                                   # (L, 1, 4E)

    # ---- fused detector: one (E, 768) first layer, block-diagonal (768, 128) second layer ----
    dw1 = jnp.zeros((EMBED, DET_HID), jnp.float32)
    db1 = jnp.zeros((1, DET_HID), jnp.float32)
    dw2 = jnp.zeros((DET_HID, DET_OUT), jnp.float32)
    db2 = jnp.zeros((1, DET_OUT), jnp.float32)

    for i in range(len(VULN_TYPES)):   # Linear(E,128) -> ReLU -> (Dropout id) -> Linear(128,2)
        w1i = rnd((EMBED, 128)); b1i = rnd((128,))
        w2i = rnd((128, 2)); b2i = rnd((2,))
        dw1 = dw1.at[:, i * 128:(i + 1) * 128].set(w1i)
        db1 = db1.at[0, i * 128:(i + 1) * 128].set(b1i)
        dw2 = dw2.at[i * 128:(i + 1) * 128, 2 * i:2 * i + 2].set(w2i)
        db2 = db2.at[0, 2 * i:2 * i + 2].set(b2i)

    wr1 = rnd((EMBED, 64)); br1 = rnd((64,)); wr2 = rnd((64, 1)); br2 = rnd((1,))
    dw1 = dw1.at[:, RISK_HID_OFF:RISK_HID_OFF + 64].set(wr1)
    db1 = db1.at[0, RISK_HID_OFF:RISK_HID_OFF + 64].set(br1)
    dw2 = dw2.at[RISK_HID_OFF:RISK_HID_OFF + 64, RISK_COL:RISK_COL + 1].set(wr2)
    db2 = db2.at[0, RISK_COL].set(br2[0])

    wc1 = rnd((EMBED, 32)); bc1 = rnd((32,)); wc2 = rnd((32, 1)); bc2 = rnd((1,))
    dw1 = dw1.at[:, CONF_HID_OFF:CONF_HID_OFF + 32].set(wc1)
    db1 = db1.at[0, CONF_HID_OFF:CONF_HID_OFF + 32].set(bc1)
    dw2 = dw2.at[CONF_HID_OFF:CONF_HID_OFF + 32, CONF_COL:CONF_COL + 1].set(wc2)
    db2 = db2.at[0, CONF_COL].set(bc2[0])

    params["dw1"] = dw1.astype(jnp.bfloat16)
    params["db1"] = db1
    params["dw2"] = dw2.astype(jnp.bfloat16)
    params["db2"] = db2
    return params


# ---------------------------- hoisted constant helper arrays -----------------------------------
def make_constants(B, S):
    # per-head lane mask (H, E): head h owns lanes [h*HEAD_DIM, (h+1)*HEAD_DIM)
    lane = jnp.arange(EMBED)[None, :]
    head = jnp.arange(NUM_HEADS)[:, None]
    head_mask = (lane // HEAD_DIM == head).astype(jnp.float32)                 # (H, E)

    # cross-batch attention bias (B*S*H, B*S): 0 within-batch, -1e30 across batches
    row_b = (jnp.arange(B * S * NUM_HEADS) // (S * NUM_HEADS))[:, None]
    col_b = (jnp.arange(B * S) // S)[None, :]
    batch_bias = jnp.where(row_b == col_b, 0.0, NEG_BIG).astype(jnp.float32)   # (B*S*H, B*S)

    # per-batch mean-pool matrix (B, B*S)
    pool_row = jnp.arange(B)[:, None]
    pool_col = (jnp.arange(B * S) // S)[None, :]
    pool_mat = jnp.where(pool_row == pool_col, 1.0 / S, 0.0).astype(jnp.float32)
    return head_mask, batch_bias, pool_mat


# ------------------------------------- full forward -------------------------------------------
def neural_contract_analyzer(x_ids, params):
    B, S = x_ids.shape
    # glue: nn.Embedding gather + learned positional encoding
    x = (params["embedding"][x_ids] + params["pos"][:S][None, :, :]).astype(jnp.float32)
    x_flat = x.reshape(B * S, EMBED)

    head_mask, batch_bias, pool_mat = make_constants(B, S)
    det = run_fused_model(x_flat, head_mask, batch_bias, pool_mat, params)   # (B, 128) lane-dense

    n_v = len(VULN_TYPES)
    vuln_logits = det[:, :2 * n_v].reshape(B, n_v, 2)
    vulnerabilities = {name: vuln_logits[:, i, :] for i, name in enumerate(VULN_TYPES)}
    risk = jax.nn.sigmoid(det[:, RISK_COL:RISK_COL + 1])
    confidence = jax.nn.sigmoid(det[:, CONF_COL:CONF_COL + 1])
    return vulnerabilities, risk, confidence


# ------------------------------------------ main ----------------------------------------------
if __name__ == "__main__":
    key = jax.random.PRNGKey(0)
    pkey, dkey = jax.random.split(key)
    params = init_params(pkey)

    x_ids = jax.random.randint(dkey, (BATCH, SEQ), 0, VOCAB, dtype=jnp.int32)

    analyzer = jax.jit(neural_contract_analyzer)
    vulns, risk, conf = analyzer(x_ids, params)
    jax.block_until_ready((vulns, risk, conf))

    assert set(vulns.keys()) == set(VULN_TYPES)
    for name in VULN_TYPES:
        assert vulns[name].shape == (BATCH, 2)
    assert risk.shape == (BATCH, 1) and conf.shape == (BATCH, 1)
    assert bool(jnp.all((risk >= 0) & (risk <= 1))) and bool(jnp.all((conf >= 0) & (conf <= 1)))

    print("KERNEL_OK")
</pallas_src>

<mosaic_0001>
module attributes {stable_mosaic.version = 11 : i64} {
  func.func @fused_kernel(%arg0: i32, %arg1: memref<16x256xf32, #tpu.memory_space<vmem>>, %arg2: memref<8x256xf32, #tpu.memory_space<vmem>>, %arg3: memref<128x16xf32, #tpu.memory_space<vmem>>, %arg4: memref<2x16xf32, #tpu.memory_space<vmem>>, %arg5: memref<1x256x2048xbf16, #tpu.memory_space<vmem>>, %arg6: memref<1x1024x256xbf16, #tpu.memory_space<vmem>>, %arg7: memref<1x16x256xf32, #tpu.memory_space<vmem>>, %arg8: memref<1x1x1024xf32, #tpu.memory_space<vmem>>, %arg9: memref<256x768xbf16, #tpu.memory_space<vmem>>, %arg10: memref<1x768xf32, #tpu.memory_space<vmem>>, %arg11: memref<768x128xbf16, #tpu.memory_space<vmem>>, %arg12: memref<1x128xf32, #tpu.memory_space<vmem>>, %arg13: memref<2x128xf32, #tpu.memory_space<vmem>>, %arg14: memref<16x256xf32, #tpu.memory_space<vmem>>) attributes {dimension_semantics = [#tpu.dimension_semantics<arbitrary>], iteration_bounds = array<i64: 6>, scalar_prefetch = 0 : i64, scratch_operands = 1 : i64, tpu.core_type = #tpu.core_type<tc>, window_params = [{pipeline_mode = #tpu.pipeline_mode<synchronous>, transform_indices = @transform_0, window_bounds = array<i64: 16, 256>}, {pipeline_mode = #tpu.pipeline_mode<synchronous>, transform_indices = @transform_1, window_bounds = array<i64: 8, 256>}, {pipeline_mode = #tpu.pipeline_mode<synchronous>, transform_indices = @transform_2, window_bounds = array<i64: 128, 16>}, {pipeline_mode = #tpu.pipeline_mode<synchronous>, transform_indices = @transform_3, window_bounds = array<i64: 2, 16>}, {transform_indices = @transform_4, window_bounds = array<i64: 1, 256, 2048>}, {transform_indices = @transform_5, window_bounds = array<i64: 1, 1024, 256>}, {transform_indices = @transform_6, window_bounds = array<i64: 1, 16, 256>}, {transform_indices = @transform_7, window_bounds = array<i64: 1, 1, 1024>}, {pipeline_mode = #tpu.pipeline_mode<synchronous>, transform_indices = @transform_8, window_bounds = array<i64: 256, 768>}, {pipeline_mode = #tpu.pipeline_mode<synchronous>, transform_indices = @transform_9, window_bounds = array<i64: 1, 768>}, {pipeline_mode = #tpu.pipeline_mode<synchronous>, transform_indices = @transform_10, window_bounds = array<i64: 768, 128>}, {pipeline_mode = #tpu.pipeline_mode<synchronous>, transform_indices = @transform_11, window_bounds = array<i64: 1, 128>}, {pipeline_mode = #tpu.pipeline_mode<synchronous>, transform_indices = @transform_12, window_bounds = array<i64: 2, 128>}]} {
    %c0_i32 = arith.constant 0 : i32
    %0 = arith.cmpi eq, %arg0, %c0_i32 : i32
    %1 = arith.extui %0 : i1 to i32
    %c0_i32_0 = arith.constant 0 : i32
    %2 = arith.cmpi ne, %1, %c0_i32_0 : i32
    scf.if %2 {
      %c0_44 = arith.constant 0 : index
      %c0_45 = arith.constant 0 : index
      %126 = vector.load %arg1[%c0_44, %c0_45] : memref<16x256xf32, #tpu.memory_space<vmem>>, vector<16x256xf32>
      %c0_46 = arith.constant 0 : index
      %c0_47 = arith.constant 0 : index
      %127 = vector.load %arg14[%c0_46, %c0_47] : memref<16x256xf32, #tpu.memory_space<vmem>>, vector<16x256xf32>
      tpu.vector_store %arg14[%c0_46, %c0_47], %126 {strides = array<i32>} : memref<16x256xf32, #tpu.memory_space<vmem>>, vector<16x256xf32>,
    } else {
    }
    %c0 = arith.constant 0 : index
    %c0_1 = arith.constant 0 : index
    %3 = vector.load %arg14[%c0, %c0_1] : memref<16x256xf32, #tpu.memory_space<vmem>>, vector<16x256xf32>
    %c0_2 = arith.constant 0 : index
    %c0_3 = arith.constant 0 : index
    %c0_4 = arith.constant 0 : index
    %4 = vector.load %arg7[%c0_2, %c0_3, %c0_4] : memref<1x16x256xf32, #tpu.memory_space<vmem>>, vector<1x16x256xf32>
    %5 = vector.shape_cast %4 : vector<1x16x256xf32> to vector<16x256xf32>
    %6 = vector.extract_strided_slice %5 {offsets = [0, 0], sizes = [1, 256], strides = [1, 1]} : vector<16x256xf32> to vector<1x256xf32>
    %7 = vector.extract_strided_slice %5 {offsets = [1, 0], sizes = [1, 256], strides = [1, 1]} : vector<16x256xf32> to vector<1x256xf32>
    %8 = vector.extract_strided_slice %5 {offsets = [2, 0], sizes = [1, 256], strides = [1, 1]} : vector<16x256xf32> to vector<1x256xf32>
    %9 = vector.extract_strided_slice %5 {offsets = [3, 0], sizes = [1, 256], strides = [1, 1]} : vector<16x256xf32> to vector<1x256xf32>
    %10 = vector.extract_strided_slice %5 {offsets = [4, 0], sizes = [1, 256], strides = [1, 1]} : vector<16x256xf32> to vector<1x256xf32>
    %11 = vector.extract_strided_slice %5 {offsets = [5, 0], sizes = [1, 256], strides = [1, 1]} : vector<16x256xf32> to vector<1x256xf32>
    %12 = vector.extract_strided_slice %5 {offsets = [6, 0], sizes = [1, 256], strides = [1, 1]} : vector<16x256xf32> to vector<1x256xf32>
    %13 = vector.extract_strided_slice %5 {offsets = [7, 0], sizes = [1, 256], strides = [1, 1]} : vector<16x256xf32> to vector<1x256xf32>
    %14 = vector.extract_strided_slice %5 {offsets = [8, 0], sizes = [1, 256], strides = [1, 1]} : vector<16x256xf32> to vector<1x256xf32>
    %c0_5 = arith.constant 0 : index
    %c0_6 = arith.constant 0 : index
    %15 = vector.load %arg2[%c0_5, %c0_6] : memref<8x256xf32, #tpu.memory_space<vmem>>, vector<8x256xf32>
    %c0_7 = arith.constant 0 : index
    %c0_8 = arith.constant 0 : index
    %16 = vector.load %arg3[%c0_7, %c0_8] : memref<128x16xf32, #tpu.memory_space<vmem>>, vector<128x16xf32>
    %c0_9 = arith.constant 0 : index
    %c0_10 = arith.constant 0 : index
    %c0_11 = arith.constant 0 : index
    %17 = vector.load %arg5[%c0_9, %c0_10, %c0_11] : memref<1x256x2048xbf16, #tpu.memory_space<vmem>>, vector<1x256x768xbf16>
    %18 = vector.shape_cast %17 : vector<1x256x768xbf16> to vector<256x768xbf16>
    %c0_12 = arith.constant 0 : index
    %c0_13 = arith.constant 0 : index
    %c768 = arith.constant 768 : index
    %19 = vector.load %arg5[%c0_12, %c0_13, %c768] : memref<1x256x2048xbf16, #tpu.memory_space<vmem>>, vector<1x256x256xbf16>
    %20 = vector.shape_cast %19 : vector<1x256x256xbf16> to vector<256x256xbf16>
    %c0_14 = arith.constant 0 : index
    %c0_15 = arith.constant 0 : index
    %c1024 = arith.constant 1024 : index
    %21 = vector.load %arg5[%c0_14, %c0_15, %c1024] : memref<1x256x2048xbf16, #tpu.memory_space<vmem>>, vector<1x256x1024xbf16>
    %22 = vector.shape_cast %21 : vector<1x256x1024xbf16> to vector<256x1024xbf16>
    %23 = arith.truncf %3 : vector<16x256xf32> to vector<16x256xbf16>
    %cst = arith.constant dense<0.000000e+00> : vector<16x768xf32>
    %24 = tpu.matmul %23, %18, %cst {dimension_numbers = #tpu.dot_dimension_numbers<[1], [0], [0], [1], [0, 0, 1, 1], [], []>} : vector<16x256xbf16>, vector<256x768xbf16>, vector<16x768xf32> -> vector<16x768xf32>
    %25 = vector.extract_strided_slice %24 {offsets = [0, 0], sizes = [16, 256], strides = [1, 1]} : vector<16x768xf32> to vector<16x256xf32>
    %26 = vector.broadcast %6 : vector<1x256xf32> to vector<16x256xf32>
    %27 = arith.addf %25, %26 : vector<16x256xf32>
    %28 = vector.extract_strided_slice %24 {offsets = [0, 256], sizes = [16, 256], strides = [1, 1]} : vector<16x768xf32> to vector<16x256xf32>
    %29 = vector.broadcast %7 : vector<1x256xf32> to vector<16x256xf32>
    %30 = arith.addf %28, %29 : vector<16x256xf32>
    %31 = vector.extract_strided_slice %24 {offsets = [0, 512], sizes = [16, 256], strides = [1, 1]} : vector<16x768xf32> to vector<16x256xf32>
    %32 = vector.broadcast %8 : vector<1x256xf32> to vector<16x256xf32>
    %33 = arith.addf %31, %32 : vector<16x256xf32>
    %34 = vector.shape_cast %27 : vector<16x256xf32> to vector<16x1x256xf32>
    %35 = vector.shape_cast %15 : vector<8x256xf32> to vector<1x8x256xf32>
    %36 = vector.broadcast %34 : vector<16x1x256xf32> to vector<16x8x256xf32>
    %37 = vector.broadcast %35 : vector<1x8x256xf32> to vector<16x8x256xf32>
    %38 = arith.mulf %36, %37 : vector<16x8x256xf32>
    %39 = vector.shape_cast %38 : vector<16x8x256xf32> to vector<128x256xf32>
    %cst_16 = arith.constant dense<0.000000e+00> : vector<128x16xf32>
    %40 = tpu.matmul %39, %30, %cst_16 {dimension_numbers = #tpu.dot_dimension_numbers<[1], [1], [0], [0], [0, 0, 1, 0], [], []>} : vector<128x256xf32>, vector<16x256xf32>, vector<128x16xf32> -> vector<128x16xf32>
    %41 = arith.addf %40, %16 : vector<128x16xf32>
    %cst_17 = arith.constant dense<0xFF800000> : vector<128xf32>
    %42 = vector.multi_reduction <maximumf>, %41, %cst_17 [1] : vector<128x16xf32> to vector<128xf32>
    %43 = vector.shape_cast %42 : vector<128xf32> to vector<128x1xf32>
    %44 = vector.broadcast %43 : vector<128x1xf32> to vector<128x16xf32>
    %45 = arith.subf %41, %44 : vector<128x16xf32>
    %46 = math.exp %45 : vector<128x16xf32>
    %cst_18 = arith.constant dense<0.000000e+00> : vector<128xf32>
    %47 = vector.multi_reduction <add>, %46, %cst_18 [1] : vector<128x16xf32> to vector<128xf32>
    %48 = vector.shape_cast %47 : vector<128xf32> to vector<128x1xf32>
    %49 = tpu.reciprocal %48 {approx = true} : vector<128x1xf32> -> vector<128x1xf32>
    %50 = vector.broadcast %49 : vector<128x1xf32> to vector<128x16xf32>
    %51 = arith.mulf %46, %50 : vector<128x16xf32>
    %cst_19 = arith.constant dense<0.000000e+00> : vector<128x256xf32>
    %52 = tpu.matmul %51, %33, %cst_19 {dimension_numbers = #tpu.dot_dimension_numbers<[1], [0], [0], [1], [0, 0, 1, 1], [], []>} : vector<128x16xf32>, vector<16x256xf32>, vector<128x256xf32> -> vector<128x256xf32>
    %53 = vector.shape_cast %52 : vector<128x256xf32> to vector<16x8x256xf32>
    %54 = vector.shape_cast %15 : vector<8x256xf32> to vector<1x8x256xf32>
    %55 = vector.broadcast %54 : vector<1x8x256xf32> to vector<16x8x256xf32>
    %56 = arith.mulf %53, %55 : vector<16x8x256xf32>
    %cst_20 = arith.constant dense<0.000000e+00> : vector<16x256xf32>
    %57 = vector.multi_reduction <add>, %56, %cst_20 [1] : vector<16x8x256xf32> to vector<16x256xf32>
    %58 = arith.truncf %57 : vector<16x256xf32> to vector<16x256xbf16>
    %cst_21 = arith.constant dense<0.000000e+00> : vector<16x256xf32>
    %59 = tpu.matmul %58, %20, %cst_21 {dimension_numbers = #tpu.dot_dimension_numbers<[1], [0], [0], [1], [0, 0, 1, 1], [], []>} : vector<16x256xbf16>, vector<256x256xbf16>, vector<16x256xf32> -> vector<16x256xf32>
    %60 = vector.broadcast %9 : vector<1x256xf32> to vector<16x256xf32>
    %61 = arith.addf %59, %60 : vector<16x256xf32>
    %62 = arith.addf %3, %61 : vector<16x256xf32>
    %cst_22 = arith.constant dense<0.000000e+00> : vector<16xf32>
    %63 = vector.multi_reduction <add>, %62, %cst_22 [1] : vector<16x256xf32> to vector<16xf32>
    %64 = vector.shape_cast %63 : vector<16xf32> to vector<16x1xf32>
    %cst_23 = arith.constant 2.560000e+02 : f32
    %65 = vector.broadcast %cst_23 : f32 to vector<16x1xf32>
    %66 = arith.divf %64, %65 : vector<16x1xf32>
    %67 = vector.broadcast %66 : vector<16x1xf32> to vector<16x256xf32>
    %68 = arith.subf %62, %67 : vector<16x256xf32>
    %69 = arith.mulf %68, %68 : vector<16x256xf32>
    %cst_24 = arith.constant dense<0.000000e+00> : vector<16xf32>
    %70 = vector.multi_reduction <add>, %69, %cst_24 [1] : vector<16x256xf32> to vector<16xf32>
    %71 = vector.shape_cast %70 : vector<16xf32> to vector<16x1xf32>
    %cst_25 = arith.constant 2.560000e+02 : f32
    %72 = vector.broadcast %cst_25 : f32 to vector<16x1xf32>
    %73 = arith.divf %71, %72 : vector<16x1xf32>
    %74 = vector.broadcast %66 : vector<16x1xf32> to vector<16x256xf32>
    %75 = arith.subf %62, %74 : vector<16x256xf32>
    %cst_26 = arith.constant 9.99999974E-6 : f32
    %76 = vector.broadcast %cst_26 : f32 to vector<16x1xf32>
    %77 = arith.addf %73, %76 : vector<16x1xf32>
    %78 = math.rsqrt %77 : vector<16x1xf32>
    %79 = vector.broadcast %78 : vector<16x1xf32> to vector<16x256xf32>
    %80 = arith.mulf %75, %79 : vector<16x256xf32>
    %81 = vector.broadcast %10 : vector<1x256xf32> to vector<16x256xf32>
    %82 = arith.mulf %80, %81 : vector<16x256xf32>
    %83 = vector.broadcast %11 : vector<1x256xf32> to vector<16x256xf32>
    %84 = arith.addf %82, %83 : vector<16x256xf32>
    %85 = arith.truncf %84 : vector<16x256xf32> to vector<16x256xbf16>
    %cst_27 = arith.constant dense<0.000000e+00> : vector<16x1024xf32>
    %86 = tpu.matmul %85, %22, %cst_27 {dimension_numbers = #tpu.dot_dimension_numbers<[1], [0], [0], [1], [0, 0, 1, 1], [], []>} : vector<16x256xbf16>, vector<256x1024xbf16>, vector<16x1024xf32> -> vector<16x1024xf32>
    %c0_28 = arith.constant 0 : index
    %c0_29 = arith.constant 0 : index
    %c0_30 = arith.constant 0 : index
    %87 = vector.load %arg8[%c0_28, %c0_29, %c0_30] : memref<1x1x1024xf32, #tpu.memory_space<vmem>>, vector<1x1x1024xf32>
    %88 = vector.shape_cast %87 : vector<1x1x1024xf32> to vector<1x1024xf32>
    %89 = vector.broadcast %88 : vector<1x1024xf32> to vector<16x1024xf32>
    %90 = arith.addf %86, %89 : vector<16x1024xf32>
    %cst_31 = arith.constant 0.000000e+00 : f32
    %91 = vector.broadcast %cst_31 : f32 to vector<16x1024xf32>
    %92 = arith.maximumf %90, %91 : vector<16x1024xf32>
    %93 = arith.truncf %92 : vector<16x1024xf32> to vector<16x1024xbf16>
    %c0_32 = arith.constant 0 : index
    %c0_33 = arith.constant 0 : index
    %c0_34 = arith.constant 0 : index
    %94 = vector.load %arg6[%c0_32, %c0_33, %c0_34] : memref<1x1024x256xbf16, #tpu.memory_space<vmem>>, vector<1x1024x256xbf16>
    %95 = vector.shape_cast %94 : vector<1x1024x256xbf16> to vector<1024x256xbf16>
    %cst_35 = arith.constant dense<0.000000e+00> : vector<16x256xf32>
    %96 = tpu.matmul %93, %95, %cst_35 {dimension_numbers = #tpu.dot_dimension_numbers<[1], [0], [0], [1], [0, 0, 1, 1], [], []>} : vector<16x1024xbf16>, vector<1024x256xbf16>, vector<16x256xf32> -> vector<16x256xf32>
    %97 = vector.broadcast %14 : vector<1x256xf32> to vector<16x256xf32>
    %98 = arith.addf %96, %97 : vector<16x256xf32>
    %99 = arith.addf %84, %98 : vector<16x256xf32>
    %cst_36 = arith.constant dense<0.000000e+00> : vector<16xf32>
    %100 = vector.multi_reduction <add>, %99, %cst_36 [1] : vector<16x256xf32> to vector<16xf32>
    %101 = vector.shape_cast %100 : vector<16xf32> to vector<16x1xf32>
    %cst_37 = arith.constant 2.560000e+02 : f32
    %102 = vector.broadcast %cst_37 : f32 to vector<16x1xf32>
    %103 = arith.divf %101, %102 : vector<16x1xf32>
    %104 = vector.broadcast %103 : vector<16x1xf32> to vector<16x256xf32>
    %105 = arith.subf %99, %104 : vector<16x256xf32>
    %106 = arith.mulf %105, %105 : vector<16x256xf32>
    %cst_38 = arith.constant dense<0.000000e+00> : vector<16xf32>
    %107 = vector.multi_reduction <add>, %106, %cst_38 [1] : vector<16x256xf32> to vector<16xf32>
    %108 = vector.shape_cast %107 : vector<16xf32> to vector<16x1xf32>
    %cst_39 = arith.constant 2.560000e+02 : f32
    %109 = vector.broadcast %cst_39 : f32 to vector<16x1xf32>
    %110 = arith.divf %108, %109 : vector<16x1xf32>
    %111 = vector.broadcast %103 : vector<16x1xf32> to vector<16x256xf32>
    %112 = arith.subf %99, %111 : vector<16x256xf32>
    %cst_40 = arith.constant 9.99999974E-6 : f32
    %113 = vector.broadcast %cst_40 : f32 to vector<16x1xf32>
    %114 = arith.addf %110, %113 : vector<16x1xf32>
    %115 = math.rsqrt %114 : vector<16x1xf32>
    %116 = vector.broadcast %115 : vector<16x1xf32> to vector<16x256xf32>
    %117 = arith.mulf %112, %116 : vector<16x256xf32>
    %118 = vector.broadcast %12 : vector<1x256xf32> to vector<16x256xf32>
    %119 = arith.mulf %117, %118 : vector<16x256xf32>
    %120 = vector.broadcast %13 : vector<1x256xf32> to vector<16x256xf32>
    %121 = arith.addf %119, %120 : vector<16x256xf32>
    %c0_41 = arith.constant 0 : index
    %c0_42 = arith.constant 0 : index
    %122 = vector.load %arg14[%c0_41, %c0_42] : memref<16x256xf32, #tpu.memory_space<vmem>>, vector<16x256xf32>
    tpu.vector_store %arg14[%c0_41, %c0_42], %121 {strides = array<i32>} : memref<16x256xf32, #tpu.memory_space<vmem>>, vector<16x256xf32>,
    %c5_i32 = arith.constant 5 : i32
    %123 = arith.cmpi eq, %arg0, %c5_i32 : i32
    %124 = arith.extui %123 : i1 to i32
    %c0_i32_43 = arith.constant 0 : i32
    %125 = arith.cmpi ne, %124, %c0_i32_43 : i32
    scf.if %125 {
      %c0_44 = arith.constant 0 : index
      %c0_45 = arith.constant 0 : index
      %126 = vector.load %arg4[%c0_44, %c0_45] : memref<2x16xf32, #tpu.memory_space<vmem>>, vector<2x16xf32>
      %cst_46 = arith.constant dense<0.000000e+00> : vector<2x256xf32>
      %127 = tpu.matmul %126, %121, %cst_46 {dimension_numbers = #tpu.dot_dimension_numbers<[1], [0], [0], [1], [0, 0, 1, 1], [], []>} : vector<2x16xf32>, vector<16x256xf32>, vector<2x256xf32> -> vector<2x256xf32>
      %128 = arith.truncf %127 : vector<2x256xf32> to vector<2x256xbf16>
      %c0_47 = arith.constant 0 : index
      %c0_48 = arith.constant 0 : index
      %129 = vector.load %arg9[%c0_47, %c0_48] : memref<256x768xbf16, #tpu.memory_space<vmem>>, vector<256x768xbf16>
      %cst_49 = arith.constant dense<0.000000e+00> : vector<2x768xf32>
      %130 = tpu.matmul %128, %129, %cst_49 {dimension_numbers = #tpu.dot_dimension_numbers<[1], [0], [0], [1], [0, 0, 1, 1], [], []>} : vector<2x256xbf16>, vector<256x768xbf16>, vector<2x768xf32> -> vector<2x768xf32>
      %c0_50 = arith.constant 0 : index
      %c0_51 = arith.constant 0 : index
      %131 = vector.load %arg10[%c0_50, %c0_51] : memref<1x768xf32, #tpu.memory_space<vmem>>, vector<1x768xf32>
      %132 = vector.broadcast %131 : vector<1x768xf32> to vector<2x768xf32>
      %133 = arith.addf %130, %132 : vector<2x768xf32>
      %cst_52 = arith.constant 0.000000e+00 : f32
      %134 = vector.broadcast %cst_52 : f32 to vector<2x768xf32>
      %135 = arith.maximumf %133, %134 : vector<2x768xf32>
      %136 = arith.truncf %135 : vector<2x768xf32> to vector<2x768xbf16>
      %c0_53 = arith.constant 0 : index
      %c0_54 = arith.constant 0 : index
      %137 = vector.load %arg11[%c0_53, %c0_54] : memref<768x128xbf16, #tpu.memory_space<vmem>>, vector<768x128xbf16>
      %cst_55 = arith.constant dense<0.000000e+00> : vector<2x128xf32>
      %138 = tpu.matmul %136, %137, %cst_55 {dimension_numbers = #tpu.dot_dimension_numbers<[1], [0], [0], [1], [0, 0, 1, 1], [], []>} : vector<2x768xbf16>, vector<768x128xbf16>, vector<2x128xf32> -> vector<2x128xf32>
      %c0_56 = arith.constant 0 : index
      %c0_57 = arith.constant 0 : index
      %139 = vector.load %arg12[%c0_56, %c0_57] : memref<1x128xf32, #tpu.memory_space<vmem>>, vector<1x128xf32>
      %140 = vector.broadcast %139 : vector<1x128xf32> to vector<2x128xf32>
      %141 = arith.addf %138, %140 : vector<2x128xf32>
      %c0_58 = arith.constant 0 : index
      %c0_59 = arith.constant 0 : index
      %142 = vector.load %arg13[%c0_58, %c0_59] : memref<2x128xf32, #tpu.memory_space<vmem>>, vector<2x128xf32>
      tpu.vector_store %arg13[%c0_58, %c0_59], %141 {strides = array<i32>} : memref<2x128xf32, #tpu.memory_space<vmem>>, vector<2x128xf32>,
    } else {
    }
    return
  }
  func.func @transform_0(%arg0: i32) -> (i32, i32) {
    %c0_i32 = arith.constant 0 : i32
    %c0_i32_0 = arith.constant 0 : i32
    %c0_i32_1 = arith.constant 0 : i32
    return %c0_i32, %c0_i32_0 : i32, i32
  }
  func.func @transform_1(%arg0: i32) -> (i32, i32) {
    %c0_i32 = arith.constant 0 : i32
    %c0_i32_0 = arith.constant 0 : i32
    %c0_i32_1 = arith.constant 0 : i32
    return %c0_i32, %c0_i32_0 : i32, i32
  }
  func.func @transform_2(%arg0: i32) -> (i32, i32) {
    %c0_i32 = arith.constant 0 : i32
    %c0_i32_0 = arith.constant 0 : i32
    %c0_i32_1 = arith.constant 0 : i32
    return %c0_i32, %c0_i32_0 : i32, i32
  }
  func.func @transform_3(%arg0: i32) -> (i32, i32) {
    %c0_i32 = arith.constant 0 : i32
    %c0_i32_0 = arith.constant 0 : i32
    %c0_i32_1 = arith.constant 0 : i32
    return %c0_i32, %c0_i32_0 : i32, i32
  }
  func.func @transform_4(%arg0: i32) -> (i32, i32, i32) {
    %c0_i32 = arith.constant 0 : i32
    %c0_i32_0 = arith.constant 0 : i32
    %c0_i32_1 = arith.constant 0 : i32
    return %arg0, %c0_i32, %c0_i32_0 : i32, i32, i32
  }
  func.func @transform_5(%arg0: i32) -> (i32, i32, i32) {
    %c0_i32 = arith.constant 0 : i32
    %c0_i32_0 = arith.constant 0 : i32
    %c0_i32_1 = arith.constant 0 : i32
    return %arg0, %c0_i32, %c0_i32_0 : i32, i32, i32
  }
  func.func @transform_6(%arg0: i32) -> (i32, i32, i32) {
    %c0_i32 = arith.constant 0 : i32
    %c0_i32_0 = arith.constant 0 : i32
    %c0_i32_1 = arith.constant 0 : i32
    return %arg0, %c0_i32, %c0_i32_0 : i32, i32, i32
  }
  func.func @transform_7(%arg0: i32) -> (i32, i32, i32) {
    %c0_i32 = arith.constant 0 : i32
    %c0_i32_0 = arith.constant 0 : i32
    %c0_i32_1 = arith.constant 0 : i32
    return %arg0, %c0_i32, %c0_i32_0 : i32, i32, i32
  }
  func.func @transform_8(%arg0: i32) -> (i32, i32) {
    %c0_i32 = arith.constant 0 : i32
    %c0_i32_0 = arith.constant 0 : i32
    %c0_i32_1 = arith.constant 0 : i32
    return %c0_i32, %c0_i32_0 : i32, i32
  }
  func.func @transform_9(%arg0: i32) -> (i32, i32) {
    %c0_i32 = arith.constant 0 : i32
    %c0_i32_0 = arith.constant 0 : i32
    %c0_i32_1 = arith.constant 0 : i32
    return %c0_i32, %c0_i32_0 : i32, i32
  }
  func.func @transform_10(%arg0: i32) -> (i32, i32) {
    %c0_i32 = arith.constant 0 : i32
    %c0_i32_0 = arith.constant 0 : i32
    %c0_i32_1 = arith.constant 0 : i32
    return %c0_i32, %c0_i32_0 : i32, i32
  }
  func.func @transform_11(%arg0: i32) -> (i32, i32) {
    %c0_i32 = arith.constant 0 : i32
    %c0_i32_0 = arith.constant 0 : i32
    %c0_i32_1 = arith.constant 0 : i32
    return %c0_i32, %c0_i32_0 : i32, i32
  }
  func.func @transform_12(%arg0: i32) -> (i32, i32) {
    %c0_i32 = arith.constant 0 : i32
    %c0_i32_0 = arith.constant 0 : i32
    %c0_i32_1 = arith.constant 0 : i32
    return %c0_i32, %c0_i32_0 : i32, i32
  }
}

</mosaic_0001>

<llo_original>
// kernel: neural_contract_analyzer.1
$region0: #{neural_contract_analyzer.1}
  #allocation0 [shape = 'u32[]', space=smem, size = 0x4, offset = 0x4, fixed_abs, tag = 'smem constant byte address 0x4 - core index']
  #allocation1 [shape = 'u32[144,128]{1,0:T(1,128)}', space=vmem, size = 0x12000, scoped, tag = 'internal scratch']
  #allocation2 [shape = 'f32[16,256]{1,0:T(8,128)}', space=vmem, size = 0x4000, scoped, tag = 'scratch operand']
  %s0 = inlined_call_operand.vmem [shape: f32[16,256], index: 0, kind: input, shape index: {}]
  %s1 = inlined_call_operand.vmem [shape: f32[8,256], index: 1, kind: input, shape index: {}]
  %s2 = inlined_call_operand.vmem [shape: f32[128,16], index: 2, kind: input, shape index: {}]
  %s3 = inlined_call_operand.vmem [shape: f32[2,16], index: 3, kind: input, shape index: {}]
  %s4 = inlined_call_operand.hbm [shape: bf16[6,256,2048], index: 4, kind: input, shape index: {}]
  %s5 = inlined_call_operand.hbm [shape: bf16[6,1024,256], index: 5, kind: input, shape index: {}]
  %s6 = inlined_call_operand.hbm [shape: f32[6,16,256], index: 6, kind: input, shape index: {}]
  %s7 = inlined_call_operand.hbm [shape: f32[6,1,1024], index: 7, kind: input, shape index: {}]
  %s8 = inlined_call_operand.hbm [shape: bf16[256,768], index: 8, kind: input, shape index: {}]
  %s9 = inlined_call_operand.hbm [shape: f32[1,768], index: 9, kind: input, shape index: {}]
  %s10 = inlined_call_operand.hbm [shape: bf16[768,128], index: 10, kind: input, shape index: {}]
  %s11 = inlined_call_operand.hbm [shape: f32[1,128], index: 11, kind: input, shape index: {}]
  %s12 = inlined_call_operand.vmem [shape: f32[2,128], index: 12, kind: output, shape index: {}]
  %s13 = sld [smem:[#allocation0]]
  $region121: #{neural_contract_analyzer.1} parent=0
    _
  %s15 = ssub.s32 1, %s13
  %s16 = scalar_select 0, %s15, %s13
  $region1: #{neural_contract_analyzer.1} parent=0
    #allocation3 [shape = 'u8[2097152]{0}', space=vmem, size = 0x200000, scoped, tag = 'input window, operand 4']
    #allocation4 [shape = 's32[2]{0}', space=sflag, size = 0x8, scoped, tag = 'scoped memory for neural_contract_analyzer.1']
    #allocation5 [shape = 'u8[1048576]{0}', space=vmem, size = 0x100000, scoped, tag = 'input window, operand 5']
    #allocation6 [shape = 's32[2]{0}', space=sflag, size = 0x8, scoped, tag = 'scoped memory for neural_contract_analyzer.1']
    #allocation7 [shape = 'u8[32768]{0}', space=vmem, size = 0x8000, scoped, tag = 'input window, operand 6']
    #allocation8 [shape = 'u8[8192]{0}', space=vmem, size = 0x2000, scoped, tag = 'input window, operand 7']
    #allocation9 [shape = 's32[2]{0}', space=sflag, size = 0x8, scoped, tag = 'scoped memory for neural_contract_analyzer.1']
    #allocation10 [shape = 'u8[393216]{0}', space=vmem, size = 0x60000, scoped, tag = 'input window, operand 8, single buffered']
    #allocation11 [shape = 'u8[3072]{0}', space=vmem, size = 0xc00, scoped, tag = 'input window, operand 9, single buffered']
    #allocation12 [shape = 's32[1]{0}', space=sflag, size = 0x4, scoped, tag = 'scoped memory for neural_contract_analyzer.1']
    #allocation13 [shape = 'u8[196608]{0}', space=vmem, size = 0x30000, scoped, tag = 'input window, operand 10, single buffered']
    #allocation14 [shape = 'u8[512]{0}', space=vmem, size = 0x400, scoped, tag = 'input window, operand 11, single buffered']
    #allocation15 [shape = 's32[1]{0}', space=sflag, size = 0x4, scoped, tag = 'scoped memory for neural_contract_analyzer.1']
    %17 = vsyncpa [#allocation4], 0
    %s18 = scalar_lea.sflag [#allocation4], 1
    %19 = vsyncpa %s18, 0
    %20 = vsyncpa [#allocation6], 0
    %s21 = scalar_lea.sflag [#allocation6], 1
    %22 = vsyncpa %s21, 0
    %23 = vsyncpa [#allocation9], 0
    %s24 = scalar_lea.sflag [#allocation9], 1
    %25 = vsyncpa %s24, 0
    %26 = vsyncpa [#allocation12], 0
    %27 = vsyncpa [#allocation15], 0
    loop: start=0, step=1, limit=8
    $region2: #{neural_contract_analyzer.1} parent=1 // loop_pre_header
      _
    $region3: #{neural_contract_analyzer.1} parent=1 // loop_header
      %s29 = sphi 0, %s33
      %p30 = scmp.ge.s32.totalorder %s29, 8
      %s37 = sphi 0, %s37
      %s39 = sphi 0, %s37
      %s40 = sphi 0, %s39
      %s54 = sphi 0, %s40
      %s58 = sphi 0, %s58
      %s60 = sphi 0, %s58
      %s61 = sphi 0, %s60
      %s75 = sphi 0, %s61
      %s79 = sphi 0, %s79
      %s81 = sphi 0, %s79
      %s82 = sphi 0, %s81
      %s96 = sphi 0, %s82
      %s100 = sphi 0, %s100
      %s102 = sphi 0, %s100
      %s103 = sphi 0, %s102
      %s117 = sphi 0, %s103
      %s123 = sphi 0, %s125
      %s126 = sphi 0, %s123
      %s127 = sphi 0, %s126
      %s143 = sphi 0, %s127
      %s149 = sphi 0, %s151
      %s152 = sphi 0, %s149
      %s153 = sphi 0, %s152
      %s169 = sphi 0, %s153
      %s175 = sphi 0, %s177
      %s178 = sphi 0, %s175
      %s179 = sphi 0, %s178
      %s195 = sphi 0, %s179
      %s201 = sphi 0, %s203
      %s204 = sphi 0, %s201
      %s205 = sphi 0, %s204
      %s221 = sphi 0, %s205
      %s225 = sphi 0, %s225
      %s227 = sphi 0, %s225
      %s228 = sphi 0, %s227
      %s242 = sphi 0, %s228
      %s246 = sphi 0, %s246
      %s248 = sphi 0, %s246
      %s249 = sphi 0, %s248
      %s263 = sphi 0, %s249
      %s267 = sphi 0, %s267
      %s269 = sphi 0, %s267
      %s270 = sphi 0, %s269
      %s284 = sphi 0, %s270
      %s288 = sphi 0, %s288
      %s290 = sphi 0, %s288
      %s291 = sphi 0, %s290
      %s305 = sphi 0, %s291
      %s309 = sphi 0, %s309
      %s311 = sphi 0, %s309
      %s312 = sphi 0, %s311
      %s326 = sphi 0, %s312
    $region4: #{neural_contract_analyzer.1} parent=1 // loop_header_branch
      %32 = sbr.rel (%p30) target = $region8
    $region5: #{neural_contract_analyzer.1} parent=1 // loop_body
      %s34 = ssub.s32 %s29, 1
      %s35 = ssub.s32 %s29, 2
      %s36 = sadd.s32 %s29, 1
      %s38 = sadd.s32 %s37, 1
      %p41 = scmp.eq.s32.totalorder %s29, 5
      %p42 = scmp.ne.s32.totalorder %s37, %s39
      %p43 = scmp.eq.s32.totalorder %s29, 0
      %p44 = por %p42, %p43
      %p45 = scmp.ne.s32.totalorder %s37, %s39
      %p46 = scmp.eq.s32.totalorder %s34, 5
      %p47 = por %p45, %p46
      %p48 = scmp.ne.s32.totalorder %s39, %s40
      %p49 = scmp.eq.s32.totalorder %s34, 0
      %p50 = por %p48, %p49
      %p51 = scmp.ne.s32.totalorder %s39, %s40
      %p52 = scmp.eq.s32.totalorder %s35, 5
      %p53 = por %p51, %p52
      %p55 = scmp.ne.s32.totalorder %s40, %s54
      %p56 = scmp.eq.s32.totalorder %s35, 0
      %p57 = por %p55, %p56
      %s59 = sadd.s32 %s58, 1
      %p62 = scmp.eq.s32.totalorder %s29, 5
      %p63 = scmp.ne.s32.totalorder %s58, %s60
      %p64 = scmp.eq.s32.totalorder %s29, 0
      %p65 = por %p63, %p64
      %p66 = scmp.ne.s32.totalorder %s58, %s60
      %p67 = scmp.eq.s32.totalorder %s34, 5
      %p68 = por %p66, %p67
      %p69 = scmp.ne.s32.totalorder %s60, %s61
      %p70 = scmp.eq.s32.totalorder %s34, 0
      %p71 = por %p69, %p70
      %p72 = scmp.ne.s32.totalorder %s60, %s61
      %p73 = scmp.eq.s32.totalorder %s35, 5
      %p74 = por %p72, %p73
      %p76 = scmp.ne.s32.totalorder %s61, %s75
      %p77 = scmp.eq.s32.totalorder %s35, 0
      %p78 = por %p76, %p77
      %s80 = sadd.s32 %s79, 1
      %p83 = scmp.eq.s32.totalorder %s29, 5
      %p84 = scmp.ne.s32.totalorder %s79, %s81
      %p85 = scmp.eq.s32.totalorder %s29, 0
      %p86 = por %p84, %p85
      %p87 = scmp.ne.s32.totalorder %s79, %s81
      %p88 = scmp.eq.s32.totalorder %s34, 5
      %p89 = por %p87, %p88
      %p90 = scmp.ne.s32.totalorder %s81, %s82
      %p91 = scmp.eq.s32.totalorder %s34, 0
      %p92 = por %p90, %p91
      %p93 = scmp.ne.s32.totalorder %s81, %s82
      %p94 = scmp.eq.s32.totalorder %s35, 5
      %p95 = por %p93, %p94
      %p97 = scmp.ne.s32.totalorder %s82, %s96
      %p98 = scmp.eq.s32.totalorder %s35, 0
      %p99 = por %p97, %p98
      %s101 = sadd.s32 %s100, 1
      %p104 = scmp.eq.s32.totalorder %s29, 5
      %p105 = scmp.ne.s32.totalorder %s100, %s102
      %p106 = scmp.eq.s32.totalorder %s29, 0
      %p107 = por %p105, %p106
      %p108 = scmp.ne.s32.totalorder %s100, %s102
      %p109 = scmp.eq.s32.totalorder %s34, 5
      %p110 = por %p108, %p109
      %p111 = scmp.ne.s32.totalorder %s102, %s103
      %p112 = scmp.eq.s32.totalorder %s34, 0
      %p113 = por %p111, %p112
      %p114 = scmp.ne.s32.totalorder %s102, %s103
      %p115 = scmp.eq.s32.totalorder %s35, 5
      %p116 = por %p114, %p115
      %p118 = scmp.ne.s32.totalorder %s103, %s117
      %p119 = scmp.eq.s32.totalorder %s35, 0
      %p120 = por %p118, %p119
      %s121 = ssub.s32 %s29, %s36
      %p122 = scmp.eq.s32.totalorder %s121, 0
      %s124 = sadd.s32 %s123, 1
      %s125 = scalar_select %p122, %s123, %s124
      %p128 = pneg %p122
      %p129 = scmp.eq.s32.totalorder %s29, 5
      %p130 = por %p128, %p129
      %p131 = scmp.ne.s32.totalorder %s123, %s126
      %p132 = scmp.eq.s32.totalorder %s29, 0
      %p133 = por %p131, %p132
      %p134 = scmp.ne.s32.totalorder %s123, %s126
      %p135 = scmp.eq.s32.totalorder %s34, 5
      %p136 = por %p134, %p135
      %p137 = scmp.ne.s32.totalorder %s126, %s127
      %p138 = scmp.eq.s32.totalorder %s34, 0
      %p139 = por %p137, %p138
      %p140 = scmp.ne.s32.totalorder %s126, %s127
      %p141 = scmp.eq.s32.totalorder %s35, 5
      %p142 = por %p140, %p141
      %p144 = scmp.ne.s32.totalorder %s127, %s143
      %p145 = scmp.eq.s32.totalorder %s35, 0
      %p146 = por %p144, %p145
      %s147 = ssub.s32 %s29, %s36
      %p148 = scmp.eq.s32.totalorder %s147, 0
      %s150 = sadd.s32 %s149, 1
      %s151 = scalar_select %p148, %s149, %s150
      %p154 = pneg %p148
      %p155 = scmp.eq.s32.totalorder %s29, 5
      %p156 = por %p154, %p155
      %p157 = scmp.ne.s32.totalorder %s149, %s152
      %p158 = scmp.eq.s32.totalorder %s29, 0
      %p159 = por %p157, %p158
      %p160 = scmp.ne.s32.totalorder %s149, %s152
      %p161 = scmp.eq.s32.totalorder %s34, 5
      %p162 = por %p160, %p161
      %p163 = scmp.ne.s32.totalorder %s152, %s153
      %p164 = scmp.eq.s32.totalorder %s34, 0
      %p165 = por %p163, %p164
      %p166 = scmp.ne.s32.totalorder %s152, %s153
      %p167 = scmp.eq.s32.totalorder %s35, 5
      %p168 = por %p166, %p167
      %p170 = scmp.ne.s32.totalorder %s153, %s169
      %p171 = scmp.eq.s32.totalorder %s35, 0
      %p172 = por %p170, %p171
      %s173 = ssub.s32 %s29, %s36
      %p174 = scmp.eq.s32.totalorder %s173, 0
      %s176 = sadd.s32 %s175, 1
      %s177 = scalar_select %p174, %s175, %s176
      %p180 = pneg %p174
      %p181 = scmp.eq.s32.totalorder %s29, 5
      %p182 = por %p180, %p181
      %p183 = scmp.ne.s32.totalorder %s175, %s178
      %p184 = scmp.eq.s32.totalorder %s29, 0
      %p185 = por %p183, %p184
      %p186 = scmp.ne.s32.totalorder %s175, %s178
      %p187 = scmp.eq.s32.totalorder %s34, 5
      %p188 = por %p186, %p187
      %p189 = scmp.ne.s32.totalorder %s178, %s179
      %p190 = scmp.eq.s32.totalorder %s34, 0
      %p191 = por %p189, %p190
      %p192 = scmp.ne.s32.totalorder %s178, %s179
      %p193 = scmp.eq.s32.totalorder %s35, 5
      %p194 = por %p192, %p193
      %p196 = scmp.ne.s32.totalorder %s179, %s195
      %p197 = scmp.eq.s32.totalorder %s35, 0
      %p198 = por %p196, %p197
      %s199 = ssub.s32 %s29, %s36
      %p200 = scmp.eq.s32.totalorder %s199, 0
      %s202 = sadd.s32 %s201, 1
      %s203 = scalar_select %p200, %s201, %s202
      %p206 = pneg %p200
      %p207 = scmp.eq.s32.totalorder %s29, 5
      %p208 = por %p206, %p207
      %p209 = scmp.ne.s32.totalorder %s201, %s204
      %p210 = scmp.eq.s32.totalorder %s29, 0
      %p211 = por %p209, %p210
      %p212 = scmp.ne.s32.totalorder %s201, %s204
      %p213 = scmp.eq.s32.totalorder %s34, 5
      %p214 = por %p212, %p213
      %p215 = scmp.ne.s32.totalorder %s204, %s205
      %p216 = scmp.eq.s32.totalorder %s34, 0
      %p217 = por %p215, %p216
      %p218 = scmp.ne.s32.totalorder %s204, %s205
      %p219 = scmp.eq.s32.totalorder %s35, 5
      %p220 = por %p218, %p219
      %p222 = scmp.ne.s32.totalorder %s205, %s221
      %p223 = scmp.eq.s32.totalorder %s35, 0
      %p224 = por %p222, %p223
      %s226 = sadd.s32 %s225, 1
      %p229 = scmp.eq.s32.totalorder %s29, 5
      %p230 = scmp.ne.s32.totalorder %s225, %s227
      %p231 = scmp.eq.s32.totalorder %s29, 0
      %p232 = por %p230, %p231
      %p233 = scmp.ne.s32.totalorder %s225, %s227
      %p234 = scmp.eq.s32.totalorder %s34, 5
      %p235 = por %p233, %p234
      %p236 = scmp.ne.s32.totalorder %s227, %s228
      %p237 = scmp.eq.s32.totalorder %s34, 0
      %p238 = por %p236, %p237
      %p239 = scmp.ne.s32.totalorder %s227, %s228
      %p240 = scmp.eq.s32.totalorder %s35, 5
      %p241 = por %p239, %p240
      %p243 = scmp.ne.s32.totalorder %s228, %s242
      %p244 = scmp.eq.s32.totalorder %s35, 0
      %p245 = por %p243, %p244
      %s247 = sadd.s32 %s246, 1
      %p250 = scmp.eq.s32.totalorder %s29, 5
      %p251 = scmp.ne.s32.totalorder %s246, %s248
      %p252 = scmp.eq.s32.totalorder %s29, 0
      %p253 = por %p251, %p252
      %p254 = scmp.ne.s32.totalorder %s246, %s248
      %p255 = scmp.eq.s32.totalorder %s34, 5
      %p256 = por %p254, %p255
      %p257 = scmp.ne.s32.totalorder %s248, %s249
      %p258 = scmp.eq.s32.totalorder %s34, 0
      %p259 = por %p257, %p258
      %p260 = scmp.ne.s32.totalorder %s248, %s249
      %p261 = scmp.eq.s32.totalorder %s35, 5
      %p262 = por %p260, %p261
      %p264 = scmp.ne.s32.totalorder %s249, %s263
      %p265 = scmp.eq.s32.totalorder %s35, 0
      %p266 = por %p264, %p265
      %s268 = sadd.s32 %s267, 1
      %p271 = scmp.eq.s32.totalorder %s29, 5
      %p272 = scmp.ne.s32.totalorder %s267, %s269
      %p273 = scmp.eq.s32.totalorder %s29, 0
      %p274 = por %p272, %p273
      %p275 = scmp.ne.s32.totalorder %s267, %s269
      %p276 = scmp.eq.s32.totalorder %s34, 5
      %p277 = por %p275, %p276
      %p278 = scmp.ne.s32.totalorder %s269, %s270
      %p279 = scmp.eq.s32.totalorder %s34, 0
      %p280 = por %p278, %p279
      %p281 = scmp.ne.s32.totalorder %s269, %s270
      %p282 = scmp.eq.s32.totalorder %s35, 5
      %p283 = por %p281, %p282
      %p285 = scmp.ne.s32.totalorder %s270, %s284
      %p286 = scmp.eq.s32.totalorder %s35, 0
      %p287 = por %p285, %p286
      %s289 = sadd.s32 %s288, 1
      %p292 = scmp.eq.s32.totalorder %s29, 5
      %p293 = scmp.ne.s32.totalorder %s288, %s290
      %p294 = scmp.eq.s32.totalorder %s29, 0
      %p295 = por %p293, %p294
      %p296 = scmp.ne.s32.totalorder %s288, %s290
      %p297 = scmp.eq.s32.totalorder %s34, 5
      %p298 = por %p296, %p297
      %p299 = scmp.ne.s32.totalorder %s290, %s291
      %p300 = scmp.eq.s32.totalorder %s34, 0
      %p301 = por %p299, %p300
      %p302 = scmp.ne.s32.totalorder %s290, %s291
      %p303 = scmp.eq.s32.totalorder %s35, 5
      %p304 = por %p302, %p303
      %p306 = scmp.ne.s32.totalorder %s291, %s305
      %p307 = scmp.eq.s32.totalorder %s35, 0
      %p308 = por %p306, %p307
      %s310 = sadd.s32 %s309, 1
      %p313 = scmp.eq.s32.totalorder %s29, 5
      %p314 = scmp.ne.s32.totalorder %s309, %s311
      %p315 = scmp.eq.s32.totalorder %s29, 0
      %p316 = por %p314, %p315
      %p317 = scmp.ne.s32.totalorder %s309, %s311
      %p318 = scmp.eq.s32.totalorder %s34, 5
      %p319 = por %p317, %p318
      %p320 = scmp.ne.s32.totalorder %s311, %s312
      %p321 = scmp.eq.s32.totalorder %s34, 0
      %p322 = por %p320, %p321
      %p323 = scmp.ne.s32.totalorder %s311, %s312
      %p324 = scmp.eq.s32.totalorder %s35, 5
      %p325 = por %p323, %p324
      %p327 = scmp.ne.s32.totalorder %s312, %s326
      %p328 = scmp.eq.s32.totalorder %s35, 0
      %p329 = por %p327, %p328
      %p330 = scmp.le.s32.totalorder 1, %s29
      %p331 = scmp.lt.s32.totalorder %s29, 7
      %p332 = pnand %p330, %p331
      %p333 = pneg %p332
      // Predicated region
      $region9: #{neural_contract_analyzer.1} parent=5 // pred_check
        _
      $region10: #{neural_contract_analyzer.1} parent=5 // pred_check_branch
        %335 = sbr.rel (%p332) target = $region12
      $region11: #{neural_contract_analyzer.1} parent=5 // pred_region
        %s336 = ssub.s32 %s29, 1
        // Predicated region
        $region13: #{neural_contract_analyzer.1} parent=11 // pred_check
          %p337 = pneg %p50
        $region14: #{neural_contract_analyzer.1} parent=11 // pred_check_branch
          %339 = sbr.rel (%p337) target = $region16
        $region15: #{neural_contract_analyzer.1} parent=11 // pred_region
          _
        $region16: #{neural_contract_analyzer.1} parent=11 // pred_fallthru
          _
        // Predicated region
        $region17: #{neural_contract_analyzer.1} parent=11 // pred_check
          %p340 = pneg %p71
        $region18: #{neural_contract_analyzer.1} parent=11 // pred_check_branch
          %342 = sbr.rel (%p340) target = $region20
        $region19: #{neural_contract_analyzer.1} parent=11 // pred_region
          _
        $region20: #{neural_contract_analyzer.1} parent=11 // pred_fallthru
          _
        // Predicated region
        $region21: #{neural_contract_analyzer.1} parent=11 // pred_check
          %p343 = pneg %p92
        $region22: #{neural_contract_analyzer.1} parent=11 // pred_check_branch
          %345 = sbr.rel (%p343) target = $region24
        $region23: #{neural_contract_analyzer.1} parent=11 // pred_region
          _
        $region24: #{neural_contract_analyzer.1} parent=11 // pred_fallthru
          _
        // Predicated region
        $region25: #{neural_contract_analyzer.1} parent=11 // pred_check
          %p346 = pneg %p113
        $region26: #{neural_contract_analyzer.1} parent=11 // pred_check_branch
          %348 = sbr.rel (%p346) target = $region28
        $region27: #{neural_contract_analyzer.1} parent=11 // pred_region
          _
        $region28: #{neural_contract_analyzer.1} parent=11 // pred_fallthru
          _
        // Predicated region
        $region29: #{neural_contract_analyzer.1} parent=11 // pred_check
          %p349 = pneg %p238
        $region30: #{neural_contract_analyzer.1} parent=11 // pred_check_branch
          %351 = sbr.rel (%p349) target = $region32
        $region31: #{neural_contract_analyzer.1} parent=11 // pred_region
          %s353 = ssub.s32 12288, 12288
          %354 = vsyncadd [#allocation9], %s353
          %s355 = sshll.u32 [#allocation10], 4
          %s356 = int_to_ptr.vmem [resolvable:$true] %s355
          %361 = dma.hbm_to_vmem [thread:$0]  %s8, 12288, %s356, [#allocation9], 384, 384, 24
        $region32: #{neural_contract_analyzer.1} parent=11 // pred_fallthru
          _
        // Predicated region
        $region33: #{neural_contract_analyzer.1} parent=11 // pred_check
          %p362 = pneg %p259
        $region34: #{neural_contract_analyzer.1} parent=11 // pred_check_branch
          %364 = sbr.rel (%p362) target = $region36
        $region35: #{neural_contract_analyzer.1} parent=11 // pred_region
          %s366 = ssub.s32 96, 96
          %367 = vsyncadd [#allocation12], %s366
          %s369 = sshll.u32 [#allocation11], 4
          %s370 = int_to_ptr.vmem [resolvable:$true] %s369
          %372 = dma.hbm_to_vmem [thread:$0]  %s9, 96, %s370, [#allocation12]
        $region36: #{neural_contract_analyzer.1} parent=11 // pred_fallthru
          _
        // Predicated region
        $region37: #{neural_contract_analyzer.1} parent=11 // pred_check
          %p373 = pneg %p280
        $region38: #{neural_contract_analyzer.1} parent=11 // pred_check_branch
          %375 = sbr.rel (%p373) target = $region40
        $region39: #{neural_contract_analyzer.1} parent=11 // pred_region
          %s377 = ssub.s32 6144, 6144
          %378 = vsyncadd [#allocation12], %s377
          %s379 = sshll.u32 [#allocation13], 4
          %s380 = int_to_ptr.vmem [resolvable:$true] %s379
          %385 = dma.hbm_to_vmem [thread:$0]  %s10, 6144, %s380, [#allocation12], 64, 64, 4
        $region40: #{neural_contract_analyzer.1} parent=11 // pred_fallthru
          _
        // Predicated region
        $region41: #{neural_contract_analyzer.1} parent=11 // pred_check
          %p386 = pneg %p301
        $region42: #{neural_contract_analyzer.1} parent=11 // pred_check_branch
          %388 = sbr.rel (%p386) target = $region44
        $region43: #{neural_contract_analyzer.1} parent=11 // pred_region
          %s390 = ssub.s32 16, 16
          %391 = vsyncadd [#allocation15], %s390
          %s393 = sshll.u32 [#allocation14], 4
          %s394 = int_to_ptr.vmem [resolvable:$true] %s393
          %396 = dma.hbm_to_vmem [thread:$0]  %s11, 16, %s394, [#allocation15]
        $region44: #{neural_contract_analyzer.1} parent=11 // pred_fallthru
          _
      $region12: #{neural_contract_analyzer.1} parent=5 // pred_fallthru
        _
      %p397 = scmp.lt.s32.totalorder %s29, 6
      // Predicated region
      $region45: #{neural_contract_analyzer.1} parent=5 // pred_check
        %p398 = pneg %p397
      $region46: #{neural_contract_analyzer.1} parent=5 // pred_check_branch
        %400 = sbr.rel (%p398) target = $region48
      $region47: #{neural_contract_analyzer.1} parent=5 // pred_region
        // Predicated region
        $region49: #{neural_contract_analyzer.1} parent=47 // pred_check
          %p401 = pneg %p133
        $region50: #{neural_contract_analyzer.1} parent=47 // pred_check_branch
          %403 = sbr.rel (%p401) target = $region52
        $region51: #{neural_contract_analyzer.1} parent=47 // pred_region
          %s404 = sand.u32 %s123, 1
          %s405 = scalar_lea.sflag [#allocation4], %s404
          %s406 = sand.u32 %s123, 1
          %s407 = smul.addr %s406, 2048
          %s408 = scalar_lea.vmem [#allocation3], %s407
          %s410 = ssub.s32 32768, 32768
          %411 = vsyncadd %s405, %s410
          %s412 = smul.addr %s29, 512
          %s413 = smul.addr %s412, 64
          %s414 = scalar_lea.hbm %s4, %s413
          %s415 = sshll.u32 %s408, 4
          %s416 = int_to_ptr.vmem [resolvable:$true] %s415
          %421 = dma.hbm_to_vmem [thread:$0]  %s414, 32768, %s416, %s405, 1024, 1024, 64
        $region52: #{neural_contract_analyzer.1} parent=47 // pred_fallthru
          _
        // Predicated region
        $region53: #{neural_contract_analyzer.1} parent=47 // pred_check
          %p422 = pneg %p159
        $region54: #{neural_contract_analyzer.1} parent=47 // pred_check_branch
          %424 = sbr.rel (%p422) target = $region56
        $region55: #{neural_contract_analyzer.1} parent=47 // pred_region
          %s425 = sand.u32 %s29, 1
          %s426 = scalar_lea.sflag [#allocation6], %s425
          %s427 = sand.u32 %s149, 1
          %s428 = smul.addr %s427, 1024
          %s429 = scalar_lea.vmem [#allocation5], %s428
          %s431 = ssub.s32 16384, 16384
          %432 = vsyncadd %s426, %s431
          %s433 = smul.addr %s29, 256
          %s434 = smul.addr %s433, 64
          %s435 = scalar_lea.hbm %s5, %s434
          %s436 = sshll.u32 %s429, 4
          %s437 = int_to_ptr.vmem [resolvable:$true] %s436
          %442 = dma.hbm_to_vmem [thread:$0]  %s435, 16384, %s437, %s426, 128, 128, 8
        $region56: #{neural_contract_analyzer.1} parent=47 // pred_fallthru
          _
        // Predicated region
        $region57: #{neural_contract_analyzer.1} parent=47 // pred_check
          %p443 = pneg %p185
        $region58: #{neural_contract_analyzer.1} parent=47 // pred_check_branch
          %445 = sbr.rel (%p443) target = $region60
        $region59: #{neural_contract_analyzer.1} parent=47 // pred_region
          %s446 = sand.u32 %s29, 1
          %s447 = scalar_lea.sflag [#allocation6], %s446
          %s448 = sand.u32 %s175, 1
          %s449 = smul.addr %s448, 32
          %s450 = scalar_lea.vmem [#allocation7], %s449
          %s452 = ssub.s32 512, 512
          %453 = vsyncadd %s447, %s452
          %s454 = smul.addr %s29, 4
          %s455 = smul.addr %s454, 128
          %s456 = scalar_lea.hbm %s6, %s455
          %s457 = sshll.u32 %s450, 4
          %s458 = int_to_ptr.vmem [resolvable:$true] %s457
          %463 = dma.hbm_to_vmem [thread:$0]  %s456, 512, %s458, %s447, 256, 256, 16
        $region60: #{neural_contract_analyzer.1} parent=47 // pred_fallthru
          _
        // Predicated region
        $region61: #{neural_contract_analyzer.1} parent=47 // pred_check
          %p464 = pneg %p211
        $region62: #{neural_contract_analyzer.1} parent=47 // pred_check_branch
          %466 = sbr.rel (%p464) target = $region64
        $region63: #{neural_contract_analyzer.1} parent=47 // pred_region
          %s467 = sand.u32 %s29, 1
          %s468 = scalar_lea.sflag [#allocation9], %s467
          %s469 = sand.u32 %s201, 1
          %s470 = smul.addr %s469, 8
          %s471 = scalar_lea.vmem [#allocation8], %s470
          %s473 = ssub.s32 128, 128
          %474 = vsyncadd %s468, %s473
          %s475 = smul.addr %s29, 8
          %s476 = smul.addr %s475, 16
          %s477 = scalar_lea.hbm %s7, %s476
          %s479 = sshll.u32 %s471, 4
          %s480 = int_to_ptr.vmem [resolvable:$true] %s479
          %482 = dma.hbm_to_vmem [thread:$0]  %s477, 128, %s480, %s468
        $region64: #{neural_contract_analyzer.1} parent=47 // pred_fallthru
          _
      $region48: #{neural_contract_analyzer.1} parent=5 // pred_fallthru
        _
      %p483 = scmp.le.s32.totalorder 1, %s29
      %p484 = scmp.lt.s32.totalorder %s29, 7
      %p485 = pnand %p483, %p484
      %p486 = pneg %p485
      // Predicated region
      $region65: #{neural_contract_analyzer.1} parent=5 // pred_check
        _
      $region66: #{neural_contract_analyzer.1} parent=5 // pred_check_branch
        %488 = sbr.rel (%p485) target = $region68
      $region67: #{neural_contract_analyzer.1} parent=5 // pred_region
        %s489 = ssub.s32 %s29, 1
        %s490 = sand.u32 %s126, 1
        %s491 = scalar_lea.sflag [#allocation4], %s490
        %s492 = sand.u32 %s126, 1
        %s493 = smul.addr %s492, 2048
        %s494 = scalar_lea.vmem [#allocation3], %s493
        // Predicated region
        $region69: #{neural_contract_analyzer.1} parent=67 // pred_check
          %p495 = pneg %p139
        $region70: #{neural_contract_analyzer.1} parent=67 // pred_check_branch
          %497 = sbr.rel (%p495) target = $region72
        $region71: #{neural_contract_analyzer.1} parent=67 // pred_region
          %498 = dma.done %s491, 32768
        $region72: #{neural_contract_analyzer.1} parent=67 // pred_fallthru
          _
        %s499 = sand.u32 %s34, 1
        %s500 = scalar_lea.sflag [#allocation6], %s499
        %s501 = sand.u32 %s152, 1
        %s502 = smul.addr %s501, 1024
        %s503 = scalar_lea.vmem [#allocation5], %s502
        // Predicated region
        $region73: #{neural_contract_analyzer.1} parent=67 // pred_check
          %p504 = pneg %p165
        $region74: #{neural_contract_analyzer.1} parent=67 // pred_check_branch
          %506 = sbr.rel (%p504) target = $region76
        $region75: #{neural_contract_analyzer.1} parent=67 // pred_region
          %507 = dma.done %s500, 16384
        $region76: #{neural_contract_analyzer.1} parent=67 // pred_fallthru
          _
        %s508 = sand.u32 %s34, 1
        %s509 = scalar_lea.sflag [#allocation6], %s508
        %s510 = sand.u32 %s178, 1
        %s511 = smul.addr %s510, 32
        %s512 = scalar_lea.vmem [#allocation7], %s511
        // Predicated region
        $region77: #{neural_contract_analyzer.1} parent=67 // pred_check
          %p513 = pneg %p191
        $region78: #{neural_contract_analyzer.1} parent=67 // pred_check_branch
          %515 = sbr.rel (%p513) target = $region80
        $region79: #{neural_contract_analyzer.1} parent=67 // pred_region
          %516 = dma.done %s509, 512
        $region80: #{neural_contract_analyzer.1} parent=67 // pred_fallthru
          _
        %s517 = sand.u32 %s34, 1
        %s518 = scalar_lea.sflag [#allocation9], %s517
        %s519 = sand.u32 %s204, 1
        %s520 = smul.addr %s519, 8
        %s521 = scalar_lea.vmem [#allocation8], %s520
        // Predicated region
        $region81: #{neural_contract_analyzer.1} parent=67 // pred_check
          %p522 = pneg %p217
        $region82: #{neural_contract_analyzer.1} parent=67 // pred_check_branch
          %524 = sbr.rel (%p522) target = $region84
        $region83: #{neural_contract_analyzer.1} parent=67 // pred_region
          %525 = dma.done %s518, 128
        $region84: #{neural_contract_analyzer.1} parent=67 // pred_fallthru
          _
        // Predicated region
        $region85: #{neural_contract_analyzer.1} parent=67 // pred_check
          %p526 = pneg %p238
        $region86: #{neural_contract_analyzer.1} parent=67 // pred_check_branch
          %528 = sbr.rel (%p526) target = $region88
        $region87: #{neural_contract_analyzer.1} parent=67 // pred_region
          %529 = dma.done [#allocation9], 12288
        $region88: #{neural_contract_analyzer.1} parent=67 // pred_fallthru
          _
        // Predicated region
        $region89: #{neural_contract_analyzer.1} parent=67 // pred_check
          %p530 = pneg %p259
        $region90: #{neural_contract_analyzer.1} parent=67 // pred_check_branch
          %532 = sbr.rel (%p530) target = $region92
        $region91: #{neural_contract_analyzer.1} parent=67 // pred_region
          %533 = dma.done [#allocation12], 96
        $region92: #{neural_contract_analyzer.1} parent=67 // pred_fallthru
          _
        // Predicated region
        $region93: #{neural_contract_analyzer.1} parent=67 // pred_check
          %p534 = pneg %p280
        $region94: #{neural_contract_analyzer.1} parent=67 // pred_check_branch
          %536 = sbr.rel (%p534) target = $region96
        $region95: #{neural_contract_analyzer.1} parent=67 // pred_region
          %537 = dma.done [#allocation12], 6144
        $region96: #{neural_contract_analyzer.1} parent=67 // pred_fallthru
          _
        // Predicated region
        $region97: #{neural_contract_analyzer.1} parent=67 // pred_check
          %p538 = pneg %p301
        $region98: #{neural_contract_analyzer.1} parent=67 // pred_check_branch
          %540 = sbr.rel (%p538) target = $region100
        $region99: #{neural_contract_analyzer.1} parent=67 // pred_region
          %541 = dma.done [#allocation15], 16
        $region100: #{neural_contract_analyzer.1} parent=67 // pred_fallthru
          _
        %p542 = pneg %p50
        %p543 = pneg %p47
        %p544 = pneg %p71
        %p545 = pneg %p68
        %p546 = pneg %p92
        %p547 = pneg %p89
        %p548 = pneg %p113
        %p549 = pneg %p110
        %s550 = sand.u32 %s126, 1
        %s551 = scalar_lea.sflag [#allocation4], %s550
        %s552 = sand.u32 %s126, 1
        %s553 = smul.addr %s552, 2048
        %s554 = scalar_lea.vmem [#allocation3], %s553
        %p555 = pneg %p139
        %p556 = pneg %p136
        %s557 = sand.u32 %s34, 1
        %s558 = scalar_lea.sflag [#allocation6], %s557
        %s559 = sand.u32 %s152, 1
        %s560 = smul.addr %s559, 1024
        %s561 = scalar_lea.vmem [#allocation5], %s560
        %p562 = pneg %p165
        %p563 = pneg %p162
        %s564 = sand.u32 %s34, 1
        %s565 = scalar_lea.sflag [#allocation6], %s564
        %s566 = sand.u32 %s178, 1
        %s567 = smul.addr %s566, 32
        %s568 = scalar_lea.vmem [#allocation7], %s567
        %p569 = pneg %p191
        %p570 = pneg %p188
        %s571 = sand.u32 %s34, 1
        %s572 = scalar_lea.sflag [#allocation9], %s571
        %s573 = sand.u32 %s204, 1
        %s574 = smul.addr %s573, 8
        %s575 = scalar_lea.vmem [#allocation8], %s574
        %p576 = pneg %p217
        %p577 = pneg %p214
        %p578 = pneg %p238
        %p579 = pneg %p235
        %p580 = pneg %p259
        %p581 = pneg %p256
        %p582 = pneg %p280
        %p583 = pneg %p277
        %p584 = pneg %p301
        %p585 = pneg %p298
        %p586 = pneg %p322
        %p587 = pneg %p319
        %p589 = scmp.eq.s32.totalorder %s34, 0
        // Predicated region
        $region101: #{neural_contract_analyzer.1} parent=67 // pred_check
          %p590 = pneg %p589
        $region102: #{neural_contract_analyzer.1} parent=67 // pred_check_branch
          %592 = sbr.rel (%p590) target = $region104
        $region103: #{neural_contract_analyzer.1} parent=67 // pred_region
          %v593 = vld [vmem:[%s0] sm:$0xff]
          %v594 = vld [vmem:[%s0 + $0x8] sm:$0xff]
          %v595 = vld [vmem:[%s0 + $0x10] sm:$0xff]
          %v596 = vld [vmem:[%s0 + $0x18] sm:$0xff]
          %597 = vst [vmem:[#allocation2] sm:$0xff] %v593
          %598 = vst [vmem:[#allocation2 + $0x8] sm:$0xff] %v594
          %599 = vst [vmem:[#allocation2 + $0x10] sm:$0xff] %v595
          %600 = vst [vmem:[#allocation2 + $0x18] sm:$0xff] %v596
        $region104: #{neural_contract_analyzer.1} parent=67 // pred_fallthru
          _
        %v601 = vld [vmem:[#allocation2] sm:$0xff]
        %v602 = vld [vmem:[#allocation2 + $0x8] sm:$0xff]
        %v603 = vld [vmem:[#allocation2 + $0x10] sm:$0xff]
        %v604 = vld [vmem:[#allocation2 + $0x18] sm:$0xff]
        %v605 = vld [vmem:[%s512] sm:$0xff]
        %v606 = vld [vmem:[%s512 + $0x8] sm:$0xff]
        %v607 = vld [vmem:[%s512 + $0x10] sm:$0xff]
        %v608 = vld [vmem:[%s512 + $0x18] sm:$0xff]
        %v609 = vld [vmem:[%s1] sm:$0xff]
        %v610 = vld [vmem:[%s1 + $0x8] sm:$0xff]
        %v611 = vld [vmem:[%s2] sm:$0xff]
        %v612 = vld [vmem:[%s2 + $0x8] sm:$0xff]
        %v613 = vld [vmem:[%s2 + $0x10] sm:$0xff]
        %v614 = vld [vmem:[%s2 + $0x18] sm:$0xff]
        %v615 = vld [vmem:[%s2 + $0x20] sm:$0xff]
        %v616 = vld [vmem:[%s2 + $0x28] sm:$0xff]
        %v617 = vld [vmem:[%s2 + $0x30] sm:$0xff]
        %v618 = vld [vmem:[%s2 + $0x38] sm:$0xff]
        %v619 = vld [vmem:[%s2 + $0x40] sm:$0xff]
        %v620 = vld [vmem:[%s2 + $0x48] sm:$0xff]
        %v621 = vld [vmem:[%s2 + $0x50] sm:$0xff]
        %v622 = vld [vmem:[%s2 + $0x58] sm:$0xff]
        %v623 = vld [vmem:[%s2 + $0x60] sm:$0xff]
        %v624 = vld [vmem:[%s2 + $0x68] sm:$0xff]
        %v625 = vld [vmem:[%s2 + $0x70] sm:$0xff]
        %v626 = vld [vmem:[%s2 + $0x78] sm:$0xff]
        %v627 = vld [vmem:[%s494] sm:$0xff]
        %v628 = vld [vmem:[%s494 + $0x8] sm:$0xff]
        %v629 = vld [vmem:[%s494 + $0x10] sm:$0xff]
        %v630 = vld [vmem:[%s494 + $0x40] sm:$0xff]
        %v631 = vld [vmem:[%s494 + $0x48] sm:$0xff]
        %v632 = vld [vmem:[%s494 + $0x50] sm:$0xff]
        %v633 = vld [vmem:[%s494 + $0x80] sm:$0xff]
        %v634 = vld [vmem:[%s494 + $0x88] sm:$0xff]
        %v635 = vld [vmem:[%s494 + $0x90] sm:$0xff]
        %v636 = vld [vmem:[%s494 + $0xc0] sm:$0xff]
        %v637 = vld [vmem:[%s494 + $0xc8] sm:$0xff]
        %v638 = vld [vmem:[%s494 + $0xd0] sm:$0xff]
        %v639 = vld [vmem:[%s494 + $0x100] sm:$0xff]
        %v640 = vld [vmem:[%s494 + $0x108] sm:$0xff]
        %v641 = vld [vmem:[%s494 + $0x110] sm:$0xff]
        %v642 = vld [vmem:[%s494 + $0x140] sm:$0xff]
        %v643 = vld [vmem:[%s494 + $0x148] sm:$0xff]
        %v644 = vld [vmem:[%s494 + $0x150] sm:$0xff]
        %v645 = vld [vmem:[%s494 + $0x180] sm:$0xff]
        %v646 = vld [vmem:[%s494 + $0x188] sm:$0xff]
        %v647 = vld [vmem:[%s494 + $0x190] sm:$0xff]
        %v648 = vld [vmem:[%s494 + $0x1c0] sm:$0xff]
        %v649 = vld [vmem:[%s494 + $0x1c8] sm:$0xff]
        %v650 = vld [vmem:[%s494 + $0x1d0] sm:$0xff]
        %v651 = vld [vmem:[%s494 + $0x200] sm:$0xff]
        %v652 = vld [vmem:[%s494 + $0x208] sm:$0xff]
        %v653 = vld [vmem:[%s494 + $0x210] sm:$0xff]
        %v654 = vld [vmem:[%s494 + $0x240] sm:$0xff]
        %v655 = vld [vmem:[%s494 + $0x248] sm:$0xff]
        %v656 = vld [vmem:[%s494 + $0x250] sm:$0xff]
        %v657 = vld [vmem:[%s494 + $0x280] sm:$0xff]
        %v658 = vld [vmem:[%s494 + $0x288] sm:$0xff]
        %v659 = vld [vmem:[%s494 + $0x290] sm:$0xff]
        %v660 = vld [vmem:[%s494 + $0x2c0] sm:$0xff]
        %v661 = vld [vmem:[%s494 + $0x2c8] sm:$0xff]
        %v662 = vld [vmem:[%s494 + $0x2d0] sm:$0xff]
        %v663 = vld [vmem:[%s494 + $0x300] sm:$0xff]
        %v664 = vld [vmem:[%s494 + $0x308] sm:$0xff]
        %v665 = vld [vmem:[%s494 + $0x310] sm:$0xff]
        %v666 = vld [vmem:[%s494 + $0x340] sm:$0xff]
        %v667 = vld [vmem:[%s494 + $0x348] sm:$0xff]
        %v668 = vld [vmem:[%s494 + $0x350] sm:$0xff]
        %v669 = vld [vmem:[%s494 + $0x380] sm:$0xff]
        %v670 = vld [vmem:[%s494 + $0x388] sm:$0xff]
        %v671 = vld [vmem:[%s494 + $0x390] sm:$0xff]
        %v672 = vld [vmem:[%s494 + $0x3c0] sm:$0xff]
        %v673 = vld [vmem:[%s494 + $0x3c8] sm:$0xff]
        %v674 = vld [vmem:[%s494 + $0x3d0] sm:$0xff]
        %v675 = vld [vmem:[%s494 + $0x400] sm:$0xff]
        %v676 = vld [vmem:[%s494 + $0x408] sm:$0xff]
        %v677 = vld [vmem:[%s494 + $0x410] sm:$0xff]
        %v678 = vld [vmem:[%s494 + $0x440] sm:$0xff]
        %v679 = vld [vmem:[%s494 + $0x448] sm:$0xff]
        %v680 = vld [vmem:[%s494 + $0x450] sm:$0xff]
        %v681 = vld [vmem:[%s494 + $0x480] sm:$0xff]
        %v682 = vld [vmem:[%s494 + $0x488] sm:$0xff]
        %v683 = vld [vmem:[%s494 + $0x490] sm:$0xff]
        %v684 = vld [vmem:[%s494 + $0x4c0] sm:$0xff]
        %v685 = vld [vmem:[%s494 + $0x4c8] sm:$0xff]
        %v686 = vld [vmem:[%s494 + $0x4d0] sm:$0xff]
        %v687 = vld [vmem:[%s494 + $0x500] sm:$0xff]
        %v688 = vld [vmem:[%s494 + $0x508] sm:$0xff]
        %v689 = vld [vmem:[%s494 + $0x510] sm:$0xff]
        %v690 = vld [vmem:[%s494 + $0x540] sm:$0xff]
        %v691 = vld [vmem:[%s494 + $0x548] sm:$0xff]
        %v692 = vld [vmem:[%s494 + $0x550] sm:$0xff]
        %v693 = vld [vmem:[%s494 + $0x580] sm:$0xff]
        %v694 = vld [vmem:[%s494 + $0x588] sm:$0xff]
        %v695 = vld [vmem:[%s494 + $0x590] sm:$0xff]
        %v696 = vld [vmem:[%s494 + $0x5c0] sm:$0xff]
        %v697 = vld [vmem:[%s494 + $0x5c8] sm:$0xff]
        %v698 = vld [vmem:[%s494 + $0x5d0] sm:$0xff]
        %v699 = vld [vmem:[%s494 + $0x600] sm:$0xff]
        %v700 = vld [vmem:[%s494 + $0x608] sm:$0xff]
        %v701 = vld [vmem:[%s494 + $0x610] sm:$0xff]
        %v702 = vld [vmem:[%s494 + $0x640] sm:$0xff]
        %v703 = vld [vmem:[%s494 + $0x648] sm:$0xff]
        %v704 = vld [vmem:[%s494 + $0x650] sm:$0xff]
        %v705 = vld [vmem:[%s494 + $0x680] sm:$0xff]
        %v706 = vld [vmem:[%s494 + $0x688] sm:$0xff]
        %v707 = vld [vmem:[%s494 + $0x690] sm:$0xff]
        %v708 = vld [vmem:[%s494 + $0x6c0] sm:$0xff]
        %v709 = vld [vmem:[%s494 + $0x6c8] sm:$0xff]
        %v710 = vld [vmem:[%s494 + $0x6d0] sm:$0xff]
        %v711 = vld [vmem:[%s494 + $0x700] sm:$0xff]
        %v712 = vld [vmem:[%s494 + $0x708] sm:$0xff]
        %v713 = vld [vmem:[%s494 + $0x710] sm:$0xff]
        %v714 = vld [vmem:[%s494 + $0x740] sm:$0xff]
        %v715 = vld [vmem:[%s494 + $0x748] sm:$0xff]
        %v716 = vld [vmem:[%s494 + $0x750] sm:$0xff]
        %v717 = vld [vmem:[%s494 + $0x780] sm:$0xff]
        %v718 = vld [vmem:[%s494 + $0x788] sm:$0xff]
        %v719 = vld [vmem:[%s494 + $0x790] sm:$0xff]
        %v720 = vld [vmem:[%s494 + $0x7c0] sm:$0xff]
        %v721 = vld [vmem:[%s494 + $0x7c8] sm:$0xff]
        %v722 = vld [vmem:[%s494 + $0x7d0] sm:$0xff]
        %v723 = vld [vmem:[%s494 + $0x18] sm:$0xff]
        %v724 = vld [vmem:[%s494 + $0x58] sm:$0xff]
        %v725 = vld [vmem:[%s494 + $0x98] sm:$0xff]
        %v726 = vld [vmem:[%s494 + $0xd8] sm:$0xff]
        %v727 = vld [vmem:[%s494 + $0x118] sm:$0xff]
        %v728 = vld [vmem:[%s494 + $0x158] sm:$0xff]
        %v729 = vld [vmem:[%s494 + $0x198] sm:$0xff]
        %v730 = vld [vmem:[%s494 + $0x1d8] sm:$0xff]
        %v731 = vld [vmem:[%s494 + $0x218] sm:$0xff]
        %v732 = vld [vmem:[%s494 + $0x258] sm:$0xff]
        %v733 = vld [vmem:[%s494 + $0x298] sm:$0xff]
        %v734 = vld [vmem:[%s494 + $0x2d8] sm:$0xff]
        %v735 = vld [vmem:[%s494 + $0x318] sm:$0xff]
        %v736 = vld [vmem:[%s494 + $0x358] sm:$0xff]
        %v737 = vld [vmem:[%s494 + $0x398] sm:$0xff]
        %v738 = vld [vmem:[%s494 + $0x3d8] sm:$0xff]
        %v739 = vld [vmem:[%s494 + $0x418] sm:$0xff]
        %v740 = vld [vmem:[%s494 + $0x458] sm:$0xff]
        %v741 = vld [vmem:[%s494 + $0x498] sm:$0xff]
        %v742 = vld [vmem:[%s494 + $0x4d8] sm:$0xff]
        %v743 = vld [vmem:[%s494 + $0x518] sm:$0xff]
        %v744 = vld [vmem:[%s494 + $0x558] sm:$0xff]
        %v745 = vld [vmem:[%s494 + $0x598] sm:$0xff]
        %v746 = vld [vmem:[%s494 + $0x5d8] sm:$0xff]
        %v747 = vld [vmem:[%s494 + $0x618] sm:$0xff]
        %v748 = vld [vmem:[%s494 + $0x658] sm:$0xff]
        %v749 = vld [vmem:[%s494 + $0x698] sm:$0xff]
        %v750 = vld [vmem:[%s494 + $0x6d8] sm:$0xff]
        %v751 = vld [vmem:[%s494 + $0x718] sm:$0xff]
        %v752 = vld [vmem:[%s494 + $0x758] sm:$0xff]
        %v753 = vld [vmem:[%s494 + $0x798] sm:$0xff]
        %v754 = vld [vmem:[%s494 + $0x7d8] sm:$0xff]
        %v755 = vld [vmem:[%s494 + $0x20] sm:$0xff]
        %v756 = vld [vmem:[%s494 + $0x28] sm:$0xff]
        %v757 = vld [vmem:[%s494 + $0x30] sm:$0xff]
        %v758 = vld [vmem:[%s494 + $0x38] sm:$0xff]
        %v759 = vld [vmem:[%s494 + $0x60] sm:$0xff]
        %v760 = vld [vmem:[%s494 + $0x68] sm:$0xff]
        %v761 = vld [vmem:[%s494 + $0x70] sm:$0xff]
        %v762 = vld [vmem:[%s494 + $0x78] sm:$0xff]
        %v763 = vld [vmem:[%s494 + $0xa0] sm:$0xff]
        %v764 = vld [vmem:[%s494 + $0xa8] sm:$0xff]
        %v765 = vld [vmem:[%s494 + $0xb0] sm:$0xff]
        %v766 = vld [vmem:[%s494 + $0xb8] sm:$0xff]
        %v767 = vld [vmem:[%s494 + $0xe0] sm:$0xff]
        %v768 = vld [vmem:[%s494 + $0xe8] sm:$0xff]
        %v769 = vld [vmem:[%s494 + $0xf0] sm:$0xff]
        %v770 = vld [vmem:[%s494 + $0xf8] sm:$0xff]
        %v771 = vld [vmem:[%s494 + $0x120] sm:$0xff]
        %v772 = vld [vmem:[%s494 + $0x128] sm:$0xff]
        %v773 = vld [vmem:[%s494 + $0x130] sm:$0xff]
        %v774 = vld [vmem:[%s494 + $0x138] sm:$0xff]
        %v775 = vld [vmem:[%s494 + $0x160] sm:$0xff]
        %v776 = vld [vmem:[%s494 + $0x168] sm:$0xff]
        %v777 = vld [vmem:[%s494 + $0x170] sm:$0xff]
        %v778 = vld [vmem:[%s494 + $0x178] sm:$0xff]
        %v779 = vld [vmem:[%s494 + $0x1a0] sm:$0xff]
        %v780 = vld [vmem:[%s494 + $0x1a8] sm:$0xff]
        %v781 = vld [vmem:[%s494 + $0x1b0] sm:$0xff]
        %v782 = vld [vmem:[%s494 + $0x1b8] sm:$0xff]
        %v783 = vld [vmem:[%s494 + $0x1e0] sm:$0xff]
        %v784 = vld [vmem:[%s494 + $0x1e8] sm:$0xff]
        %v785 = vld [vmem:[%s494 + $0x1f0] sm:$0xff]
        %v786 = vld [vmem:[%s494 + $0x1f8] sm:$0xff]
        %v787 = vld [vmem:[%s494 + $0x220] sm:$0xff]
        %v788 = vld [vmem:[%s494 + $0x228] sm:$0xff]
        %v789 = vld [vmem:[%s494 + $0x230] sm:$0xff]
        %v790 = vld [vmem:[%s494 + $0x238] sm:$0xff]
        %v791 = vld [vmem:[%s494 + $0x260] sm:$0xff]
        %v792 = vld [vmem:[%s494 + $0x268] sm:$0xff]
        %v793 = vld [vmem:[%s494 + $0x270] sm:$0xff]
        %v794 = vld [vmem:[%s494 + $0x278] sm:$0xff]
        %v795 = vld [vmem:[%s494 + $0x2a0] sm:$0xff]
        %v796 = vld [vmem:[%s494 + $0x2a8] sm:$0xff]
        %v797 = vld [vmem:[%s494 + $0x2b0] sm:$0xff]
        %v798 = vld [vmem:[%s494 + $0x2b8] sm:$0xff]
        %v799 = vld [vmem:[%s494 + $0x2e0] sm:$0xff]
        %v800 = vld [vmem:[%s494 + $0x2e8] sm:$0xff]
        %v801 = vld [vmem:[%s494 + $0x2f0] sm:$0xff]
        %v802 = vld [vmem:[%s494 + $0x2f8] sm:$0xff]
        %v803 = vld [vmem:[%s494 + $0x320] sm:$0xff]
        %v804 = vld [vmem:[%s494 + $0x328] sm:$0xff]
        %v805 = vld [vmem:[%s494 + $0x330] sm:$0xff]
        %v806 = vld [vmem:[%s494 + $0x338] sm:$0xff]
        %v807 = vld [vmem:[%s494 + $0x360] sm:$0xff]
        %v808 = vld [vmem:[%s494 + $0x368] sm:$0xff]
        %v809 = vld [vmem:[%s494 + $0x370] sm:$0xff]
        %v810 = vld [vmem:[%s494 + $0x378] sm:$0xff]
        %v811 = vld [vmem:[%s494 + $0x3a0] sm:$0xff]
        %v812 = vld [vmem:[%s494 + $0x3a8] sm:$0xff]
        %v813 = vld [vmem:[%s494 + $0x3b0] sm:$0xff]
        %v814 = vld [vmem:[%s494 + $0x3b8] sm:$0xff]
        %v815 = vld [vmem:[%s494 + $0x3e0] sm:$0xff]
        %v816 = vld [vmem:[%s494 + $0x3e8] sm:$0xff]
        %v817 = vld [vmem:[%s494 + $0x3f0] sm:$0xff]
        %v818 = vld [vmem:[%s494 + $0x3f8] sm:$0xff]
        %v819 = vld [vmem:[%s494 + $0x420] sm:$0xff]
        %v820 = vld [vmem:[%s494 + $0x428] sm:$0xff]
        %v821 = vld [vmem:[%s494 + $0x430] sm:$0xff]
        %v822 = vld [vmem:[%s494 + $0x438] sm:$0xff]
        %v823 = vld [vmem:[%s494 + $0x460] sm:$0xff]
        %v824 = vld [vmem:[%s494 + $0x468] sm:$0xff]
        %v825 = vld [vmem:[%s494 + $0x470] sm:$0xff]
        %v826 = vld [vmem:[%s494 + $0x478] sm:$0xff]
        %v827 = vld [vmem:[%s494 + $0x4a0] sm:$0xff]
        %v828 = vld [vmem:[%s494 + $0x4a8] sm:$0xff]
        %v829 = vld [vmem:[%s494 + $0x4b0] sm:$0xff]
        %v830 = vld [vmem:[%s494 + $0x4b8] sm:$0xff]
        %v831 = vld [vmem:[%s494 + $0x4e0] sm:$0xff]
        %v832 = vld [vmem:[%s494 + $0x4e8] sm:$0xff]
        %v833 = vld [vmem:[%s494 + $0x4f0] sm:$0xff]
        %v834 = vld [vmem:[%s494 + $0x4f8] sm:$0xff]
        %v835 = vld [vmem:[%s494 + $0x520] sm:$0xff]
        %v836 = vld [vmem:[%s494 + $0x528] sm:$0xff]
        %v837 = vld [vmem:[%s494 + $0x530] sm:$0xff]
        %v838 = vld [vmem:[%s494 + $0x538] sm:$0xff]
        %v839 = vld [vmem:[%s494 + $0x560] sm:$0xff]
        %v840 = vld [vmem:[%s494 + $0x568] sm:$0xff]
        %v841 = vld [vmem:[%s494 + $0x570] sm:$0xff]
        %v842 = vld [vmem:[%s494 + $0x578] sm:$0xff]
        %v843 = vld [vmem:[%s494 + $0x5a0] sm:$0xff]
        %v844 = vld [vmem:[%s494 + $0x5a8] sm:$0xff]
        %v845 = vld [vmem:[%s494 + $0x5b0] sm:$0xff]
        %v846 = vld [vmem:[%s494 + $0x5b8] sm:$0xff]
        %v847 = vld [vmem:[%s494 + $0x5e0] sm:$0xff]
        %v848 = vld [vmem:[%s494 + $0x5e8] sm:$0xff]
        %v849 = vld [vmem:[%s494 + $0x5f0] sm:$0xff]
        %v850 = vld [vmem:[%s494 + $0x5f8] sm:$0xff]
        %v851 = vld [vmem:[%s494 + $0x620] sm:$0xff]
        %v852 = vld [vmem:[%s494 + $0x628] sm:$0xff]
        %v853 = vld [vmem:[%s494 + $0x630] sm:$0xff]
        %v854 = vld [vmem:[%s494 + $0x638] sm:$0xff]
        %v855 = vld [vmem:[%s494 + $0x660] sm:$0xff]
        %v856 = vld [vmem:[%s494 + $0x668] sm:$0xff]
        %v857 = vld [vmem:[%s494 + $0x670] sm:$0xff]
        %v858 = vld [vmem:[%s494 + $0x678] sm:$0xff]
        %v859 = vld [vmem:[%s494 + $0x6a0] sm:$0xff]
        %v860 = vld [vmem:[%s494 + $0x6a8] sm:$0xff]
        %v861 = vld [vmem:[%s494 + $0x6b0] sm:$0xff]
        %v862 = vld [vmem:[%s494 + $0x6b8] sm:$0xff]
        %v863 = vld [vmem:[%s494 + $0x6e0] sm:$0xff]
        %v864 = vld [vmem:[%s494 + $0x6e8] sm:$0xff]
        %v865 = vld [vmem:[%s494 + $0x6f0] sm:$0xff]
        %v866 = vld [vmem:[%s494 + $0x6f8] sm:$0xff]
        %v867 = vld [vmem:[%s494 + $0x720] sm:$0xff]
        %v868 = vld [vmem:[%s494 + $0x728] sm:$0xff]
        %v869 = vld [vmem:[%s494 + $0x730] sm:$0xff]
        %v870 = vld [vmem:[%s494 + $0x738] sm:$0xff]
        %v871 = vld [vmem:[%s494 + $0x760] sm:$0xff]
        %v872 = vld [vmem:[%s494 + $0x768] sm:$0xff]
        %v873 = vld [vmem:[%s494 + $0x770] sm:$0xff]
        %v874 = vld [vmem:[%s494 + $0x778] sm:$0xff]
        %v875 = vld [vmem:[%s494 + $0x7a0] sm:$0xff]
        %v876 = vld [vmem:[%s494 + $0x7a8] sm:$0xff]
        %v877 = vld [vmem:[%s494 + $0x7b0] sm:$0xff]
        %v878 = vld [vmem:[%s494 + $0x7b8] sm:$0xff]
        %v879 = vld [vmem:[%s494 + $0x7e0] sm:$0xff]
        %v880 = vld [vmem:[%s494 + $0x7e8] sm:$0xff]
        %v881 = vld [vmem:[%s494 + $0x7f0] sm:$0xff]
        %v882 = vld [vmem:[%s494 + $0x7f8] sm:$0xff]
        %v883 = vpack.c.bf16 %v603, %v601
        %v884 = vpack.c.bf16 %v604, %v602
        %v981 = vunpack.c.l.b16 %v627
        %v982 = vunpack.c.h.b16 %v627
        %v983 = vunpack.c.l.b16 %v628
        %v984 = vunpack.c.h.b16 %v628
        %v985 = vunpack.c.l.b16 %v629
        %v986 = vunpack.c.h.b16 %v629
        %v987 = vunpack.c.l.b16 %v630
        %v988 = vunpack.c.h.b16 %v630
        %v989 = vunpack.c.l.b16 %v631
        %v990 = vunpack.c.h.b16 %v631
        %v991 = vunpack.c.l.b16 %v632
        %v992 = vunpack.c.h.b16 %v632
        %v993 = vunpack.c.l.b16 %v633
        %v994 = vunpack.c.h.b16 %v633
        %v995 = vunpack.c.l.b16 %v634
        %v996 = vunpack.c.h.b16 %v634
        %v997 = vunpack.c.l.b16 %v635
        %v998 = vunpack.c.h.b16 %v635
        %v999 = vunpack.c.l.b16 %v636
        %v1000 = vunpack.c.h.b16 %v636
        %v1001 = vunpack.c.l.b16 %v637
        %v1002 = vunpack.c.h.b16 %v637
        %v1003 = vunpack.c.l.b16 %v638
        %v1004 = vunpack.c.h.b16 %v638
        %v1005 = vunpack.c.l.b16 %v639
        %v1006 = vunpack.c.h.b16 %v639
        %v1007 = vunpack.c.l.b16 %v640
        %v1008 = vunpack.c.h.b16 %v640
        %v1009 = vunpack.c.l.b16 %v641
        %v1010 = vunpack.c.h.b16 %v641
        %v1011 = vunpack.c.l.b16 %v642
        %v1012 = vunpack.c.h.b16 %v642
        %v1013 = vunpack.c.l.b16 %v643
        %v1014 = vunpack.c.h.b16 %v643
        %v1015 = vunpack.c.l.b16 %v644
        %v1016 = vunpack.c.h.b16 %v644
        %v1017 = vunpack.c.l.b16 %v645
        %v1018 = vunpack.c.h.b16 %v645
        %v1019 = vunpack.c.l.b16 %v646
        %v1020 = vunpack.c.h.b16 %v646
        %v1021 = vunpack.c.l.b16 %v647
        %v1022 = vunpack.c.h.b16 %v647
        %v1023 = vunpack.c.l.b16 %v648
        %v1024 = vunpack.c.h.b16 %v648
        %v1025 = vunpack.c.l.b16 %v649
        %v1026 = vunpack.c.h.b16 %v649
        %v1027 = vunpack.c.l.b16 %v650
        %v1028 = vunpack.c.h.b16 %v650
        %v1029 = vunpack.c.l.b16 %v651
        %v1030 = vunpack.c.h.b16 %v651
        %v1031 = vunpack.c.l.b16 %v652
        %v1032 = vunpack.c.h.b16 %v652
        %v1033 = vunpack.c.l.b16 %v653
        %v1034 = vunpack.c.h.b16 %v653
        %v1035 = vunpack.c.l.b16 %v654
        %v1036 = vunpack.c.h.b16 %v654
        %v1037 = vunpack.c.l.b16 %v655
        %v1038 = vunpack.c.h.b16 %v655
        %v1039 = vunpack.c.l.b16 %v656
        %v1040 = vunpack.c.h.b16 %v656
        %v1041 = vunpack.c.l.b16 %v657
        %v1042 = vunpack.c.h.b16 %v657
        %v1043 = vunpack.c.l.b16 %v658
        %v1044 = vunpack.c.h.b16 %v658
        %v1045 = vunpack.c.l.b16 %v659
        %v1046 = vunpack.c.h.b16 %v659
        %v1047 = vunpack.c.l.b16 %v660
        %v1048 = vunpack.c.h.b16 %v660
        %v1049 = vunpack.c.l.b16 %v661
        %v1050 = vunpack.c.h.b16 %v661
        %v1051 = vunpack.c.l.b16 %v662
        %v1052 = vunpack.c.h.b16 %v662
        %v1053 = vunpack.c.l.b16 %v663
        %v1054 = vunpack.c.h.b16 %v663
        %v1055 = vunpack.c.l.b16 %v664
        %v1056 = vunpack.c.h.b16 %v664
        %v1057 = vunpack.c.l.b16 %v665
        %v1058 = vunpack.c.h.b16 %v665
        %v1059 = vunpack.c.l.b16 %v666
        %v1060 = vunpack.c.h.b16 %v666
        %v1061 = vunpack.c.l.b16 %v667
        %v1062 = vunpack.c.h.b16 %v667
        %v1063 = vunpack.c.l.b16 %v668
        %v1064 = vunpack.c.h.b16 %v668
        %v1065 = vunpack.c.l.b16 %v669
        %v1066 = vunpack.c.h.b16 %v669
        %v1067 = vunpack.c.l.b16 %v670
        %v1068 = vunpack.c.h.b16 %v670
        %v1069 = vunpack.c.l.b16 %v671
        %v1070 = vunpack.c.h.b16 %v671
        %v1071 = vunpack.c.l.b16 %v672
        %v1072 = vunpack.c.h.b16 %v672
        %v1073 = vunpack.c.l.b16 %v673
        %v1074 = vunpack.c.h.b16 %v673
        %v1075 = vunpack.c.l.b16 %v674
        %v1076 = vunpack.c.h.b16 %v674
        %v1077 = vunpack.c.l.b16 %v675
        %v1078 = vunpack.c.h.b16 %v675
        %v1079 = vunpack.c.l.b16 %v676
        %v1080 = vunpack.c.h.b16 %v676
        %v1081 = vunpack.c.l.b16 %v677
        %v1082 = vunpack.c.h.b16 %v677
        %v1083 = vunpack.c.l.b16 %v678
        %v1084 = vunpack.c.h.b16 %v678
        %v1085 = vunpack.c.l.b16 %v679
        %v1086 = vunpack.c.h.b16 %v679
        %v1087 = vunpack.c.l.b16 %v680
        %v1088 = vunpack.c.h.b16 %v680
        %v1089 = vunpack.c.l.b16 %v681
        %v1090 = vunpack.c.h.b16 %v681
        %v1091 = vunpack.c.l.b16 %v682
        %v1092 = vunpack.c.h.b16 %v682
        %v1093 = vunpack.c.l.b16 %v683
        %v1094 = vunpack.c.h.b16 %v683
        %v1095 = vunpack.c.l.b16 %v684
        %v1096 = vunpack.c.h.b16 %v684
        %v1097 = vunpack.c.l.b16 %v685
        %v1098 = vunpack.c.h.b16 %v685
        %v1099 = vunpack.c.l.b16 %v686
        %v1100 = vunpack.c.h.b16 %v686
        %v1101 = vunpack.c.l.b16 %v687
        %v1102 = vunpack.c.h.b16 %v687
        %v1103 = vunpack.c.l.b16 %v688
        %v1104 = vunpack.c.h.b16 %v688
        %v1105 = vunpack.c.l.b16 %v689
        %v1106 = vunpack.c.h.b16 %v689
        %v1107 = vunpack.c.l.b16 %v690
        %v1108 = vunpack.c.h.b16 %v690
        %v1109 = vunpack.c.l.b16 %v691
        %v1110 = vunpack.c.h.b16 %v691
        %v1111 = vunpack.c.l.b16 %v692
        %v1112 = vunpack.c.h.b16 %v692
        %v1113 = vunpack.c.l.b16 %v693
        %v1114 = vunpack.c.h.b16 %v693
        %v1115 = vunpack.c.l.b16 %v694
        %v1116 = vunpack.c.h.b16 %v694
        %v1117 = vunpack.c.l.b16 %v695
        %v1118 = vunpack.c.h.b16 %v695
        %v1119 = vunpack.c.l.b16 %v696
        %v1120 = vunpack.c.h.b16 %v696
        %v1121 = vunpack.c.l.b16 %v697
        %v1122 = vunpack.c.h.b16 %v697
        %v1123 = vunpack.c.l.b16 %v698
        %v1124 = vunpack.c.h.b16 %v698
        %v1125 = vunpack.c.l.b16 %v699
        %v1126 = vunpack.c.h.b16 %v699
        %v1127 = vunpack.c.l.b16 %v700
        %v1128 = vunpack.c.h.b16 %v700
        %v1129 = vunpack.c.l.b16 %v701
        %v1130 = vunpack.c.h.b16 %v701
        %v1131 = vunpack.c.l.b16 %v702
        %v1132 = vunpack.c.h.b16 %v702
        %v1133 = vunpack.c.l.b16 %v703
        %v1134 = vunpack.c.h.b16 %v703
        %v1135 = vunpack.c.l.b16 %v704
        %v1136 = vunpack.c.h.b16 %v704
        %v1137 = vunpack.c.l.b16 %v705
        %v1138 = vunpack.c.h.b16 %v705
        %v1139 = vunpack.c.l.b16 %v706
        %v1140 = vunpack.c.h.b16 %v706
        %v1141 = vunpack.c.l.b16 %v707
        %v1142 = vunpack.c.h.b16 %v707
        %v1143 = vunpack.c.l.b16 %v708
        %v1144 = vunpack.c.h.b16 %v708
        %v1145 = vunpack.c.l.b16 %v709
        %v1146 = vunpack.c.h.b16 %v709
        %v1147 = vunpack.c.l.b16 %v710
        %v1148 = vunpack.c.h.b16 %v710
        %v1149 = vunpack.c.l.b16 %v711
        %v1150 = vunpack.c.h.b16 %v711
        %v1151 = vunpack.c.l.b16 %v712
        %v1152 = vunpack.c.h.b16 %v712
        %v1153 = vunpack.c.l.b16 %v713
        %v1154 = vunpack.c.h.b16 %v713
        %v1155 = vunpack.c.l.b16 %v714
        %v1156 = vunpack.c.h.b16 %v714
        %v1157 = vunpack.c.l.b16 %v715
        %v1158 = vunpack.c.h.b16 %v715
        %v1159 = vunpack.c.l.b16 %v716
        %v1160 = vunpack.c.h.b16 %v716
        %v1161 = vunpack.c.l.b16 %v717
        %v1162 = vunpack.c.h.b16 %v717
        %v1163 = vunpack.c.l.b16 %v718
        %v1164 = vunpack.c.h.b16 %v718
        %v1165 = vunpack.c.l.b16 %v719
        %v1166 = vunpack.c.h.b16 %v719
        %v1167 = vunpack.c.l.b16 %v720
        %v1168 = vunpack.c.h.b16 %v720
        %v1169 = vunpack.c.l.b16 %v721
        %v1170 = vunpack.c.h.b16 %v721
        %v1171 = vunpack.c.l.b16 %v722
        %v1172 = vunpack.c.h.b16 %v722
        %v1173 = vpack.c.b16 %v987, %v981
        %v1174 = vpack.c.b16 %v988, %v982
        %v1175 = vpack.c.b16 %v989, %v983
        %v1176 = vpack.c.b16 %v990, %v984
        %v1177 = vpack.c.b16 %v991, %v985
        %v1178 = vpack.c.b16 %v992, %v986
        %v1179 = vpack.c.b16 %v999, %v993
        %v1180 = vpack.c.b16 %v1000, %v994
        %v1181 = vpack.c.b16 %v1001, %v995
        %v1182 = vpack.c.b16 %v1002, %v996
        %v1183 = vpack.c.b16 %v1003, %v997
        %v1184 = vpack.c.b16 %v1004, %v998
        %v1185 = vpack.c.b16 %v1011, %v1005
        %v1186 = vpack.c.b16 %v1012, %v1006
        %v1187 = vpack.c.b16 %v1013, %v1007
        %v1188 = vpack.c.b16 %v1014, %v1008
        %v1189 = vpack.c.b16 %v1015, %v1009
        %v1190 = vpack.c.b16 %v1016, %v1010
        %v1191 = vpack.c.b16 %v1023, %v1017
        %v1192 = vpack.c.b16 %v1024, %v1018
        %v1193 = vpack.c.b16 %v1025, %v1019
        %v1194 = vpack.c.b16 %v1026, %v1020
        %v1195 = vpack.c.b16 %v1027, %v1021
        %v1196 = vpack.c.b16 %v1028, %v1022
        %v1197 = vpack.c.b16 %v1035, %v1029
        %v1198 = vpack.c.b16 %v1036, %v1030
        %v1199 = vpack.c.b16 %v1037, %v1031
        %v1200 = vpack.c.b16 %v1038, %v1032
        %v1201 = vpack.c.b16 %v1039, %v1033
        %v1202 = vpack.c.b16 %v1040, %v1034
        %v1203 = vpack.c.b16 %v1047, %v1041
        %v1204 = vpack.c.b16 %v1048, %v1042
        %v1205 = vpack.c.b16 %v1049, %v1043
        %v1206 = vpack.c.b16 %v1050, %v1044
        %v1207 = vpack.c.b16 %v1051, %v1045
        %v1208 = vpack.c.b16 %v1052, %v1046
        %v1209 = vpack.c.b16 %v1059, %v1053
        %v1210 = vpack.c.b16 %v1060, %v1054
        %v1211 = vpack.c.b16 %v1061, %v1055
        %v1212 = vpack.c.b16 %v1062, %v1056
        %v1213 = vpack.c.b16 %v1063, %v1057
        %v1214 = vpack.c.b16 %v1064, %v1058
        %v1215 = vpack.c.b16 %v1071, %v1065
        %v1216 = vpack.c.b16 %v1072, %v1066
        %v1217 = vpack.c.b16 %v1073, %v1067
        %v1218 = vpack.c.b16 %v1074, %v1068
        %v1219 = vpack.c.b16 %v1075, %v1069
        %v1220 = vpack.c.b16 %v1076, %v1070
        %v1221 = vpack.c.b16 %v1083, %v1077
        %v1222 = vpack.c.b16 %v1084, %v1078
        %v1223 = vpack.c.b16 %v1085, %v1079
        %v1224 = vpack.c.b16 %v1086, %v1080
        %v1225 = vpack.c.b16 %v1087, %v1081
        %v1226 = vpack.c.b16 %v1088, %v1082
        %v1227 = vpack.c.b16 %v1095, %v1089
        %v1228 = vpack.c.b16 %v1096, %v1090
        %v1229 = vpack.c.b16 %v1097, %v1091
        %v1230 = vpack.c.b16 %v1098, %v1092
        %v1231 = vpack.c.b16 %v1099, %v1093
        %v1232 = vpack.c.b16 %v1100, %v1094
        %v1233 = vpack.c.b16 %v1107, %v1101
        %v1234 = vpack.c.b16 %v1108, %v1102
        %v1235 = vpack.c.b16 %v1109, %v1103
        %v1236 = vpack.c.b16 %v1110, %v1104
        %v1237 = vpack.c.b16 %v1111, %v1105
        %v1238 = vpack.c.b16 %v1112, %v1106
        %v1239 = vpack.c.b16 %v1119, %v1113
        %v1240 = vpack.c.b16 %v1120, %v1114
        %v1241 = vpack.c.b16 %v1121, %v1115
        %v1242 = vpack.c.b16 %v1122, %v1116
        %v1243 = vpack.c.b16 %v1123, %v1117
        %v1244 = vpack.c.b16 %v1124, %v1118
        %v1245 = vpack.c.b16 %v1131, %v1125
        %v1246 = vpack.c.b16 %v1132, %v1126
        %v1247 = vpack.c.b16 %v1133, %v1127
        %v1248 = vpack.c.b16 %v1134, %v1128
        %v1249 = vpack.c.b16 %v1135, %v1129
        %v1250 = vpack.c.b16 %v1136, %v1130
        %v1251 = vpack.c.b16 %v1143, %v1137
        %v1252 = vpack.c.b16 %v1144, %v1138
        %v1253 = vpack.c.b16 %v1145, %v1139
        %v1254 = vpack.c.b16 %v1146, %v1140
        %v1255 = vpack.c.b16 %v1147, %v1141
        %v1256 = vpack.c.b16 %v1148, %v1142
        %v1257 = vpack.c.b16 %v1155, %v1149
        %v1258 = vpack.c.b16 %v1156, %v1150
        %v1259 = vpack.c.b16 %v1157, %v1151
        %v1260 = vpack.c.b16 %v1158, %v1152
        %v1261 = vpack.c.b16 %v1159, %v1153
        %v1262 = vpack.c.b16 %v1160, %v1154
        %v1263 = vpack.c.b16 %v1167, %v1161
        %v1264 = vpack.c.b16 %v1168, %v1162
        %v1265 = vpack.c.b16 %v1169, %v1163
        %v1266 = vpack.c.b16 %v1170, %v1164
        %v1267 = vpack.c.b16 %v1171, %v1165
        %v1268 = vpack.c.b16 %v1172, %v1166
        %1365 = vmatprep.subr.bf16.mxu0 %v1174
        %1366 = vmatpush1.bf16.msra.mxu0 %v1173
        %1367 = vmatprep.subr.bf16.mxu0 %v1180
        %1368 = vmatpush1.bf16.msra.mxu0 %v1179
        %1369 = vmatprep.subr.bf16.mxu0 %v1186
        %1370 = vmatpush1.bf16.msra.mxu0 %v1185
        %1371 = vmatprep.subr.bf16.mxu0 %v1192
        %1372 = vmatpush1.bf16.msra.mxu0 %v1191
        %1373 = vmatprep.subr.bf16.mxu0 %v1198
        %1374 = vmatpush1.bf16.msra.mxu0 %v1197
        %1375 = vmatprep.subr.bf16.mxu0 %v1204
        %1376 = vmatpush1.bf16.msra.mxu0 %v1203
        %1377 = vmatprep.subr.bf16.mxu0 %v1210
        %1378 = vmatpush1.bf16.msra.mxu0 %v1209
        %1379 = vmatprep.subr.bf16.mxu0 %v1216
        %1380 = vmatpush1.bf16.msra.mxu0 %v1215
        %1381 = vmatprep.subr.bf16.mxu0 %v1222
        %1382 = vmatpush1.bf16.msra.mxu0 %v1221
        %1383 = vmatprep.subr.bf16.mxu0 %v1228
        %1384 = vmatpush1.bf16.msra.mxu0 %v1227
        %1385 = vmatprep.subr.bf16.mxu0 %v1234
        %1386 = vmatpush1.bf16.msra.mxu0 %v1233
        %1387 = vmatprep.subr.bf16.mxu0 %v1240
        %1388 = vmatpush1.bf16.msra.mxu0 %v1239
        %1389 = vmatprep.subr.bf16.mxu0 %v1246
        %1390 = vmatpush1.bf16.msra.mxu0 %v1245
        %1391 = vmatprep.subr.bf16.mxu0 %v1252
        %1392 = vmatpush1.bf16.msra.mxu0 %v1251
        %1393 = vmatprep.subr.bf16.mxu0 %v1258
        %1394 = vmatpush1.bf16.msra.mxu0 %v1257
        %1395 = vmatprep.subr.bf16.mxu0 %v1264
        %1396 = vmatpush1.bf16.msra.mxu0 %v1263
        %1397 = vmatprep.mubr.bf16.mxu0 %v884
        %1398 = vmatmul.mubr.bf16.gmra.mrb[0].mxu0 %v883
        %v1399 = vpop.f32.mrb[0].mxu0
        %v1400 = vadd.f32 0.0, %v1399
        %v1401 = vpop.f32.mrb[0].mxu0
        %v1402 = vadd.f32 0.0, %v1401
        %v1403 = vpop.f32.mrb[0].mxu0
        %v1404 = vadd.f32 0.0, %v1403
        %v1405 = vpop.f32.mrb[0].mxu0
        %v1406 = vadd.f32 0.0, %v1405
        %1407 = vdwg.mxu0
        %1408 = vmatprep.subr.bf16.mxu0 %v1176
        %1409 = vmatpush1.bf16.msra.mxu0 %v1175
        %1410 = vmatprep.subr.bf16.mxu0 %v1182
        %1411 = vmatpush1.bf16.msra.mxu0 %v1181
        %1412 = vmatprep.subr.bf16.mxu0 %v1188
        %1413 = vmatpush1.bf16.msra.mxu0 %v1187
        %1414 = vmatprep.subr.bf16.mxu0 %v1194
        %1415 = vmatpush1.bf16.msra.mxu0 %v1193
        %1416 = vmatprep.subr.bf16.mxu0 %v1200
        %1417 = vmatpush1.bf16.msra.mxu0 %v1199
        %1418 = vmatprep.subr.bf16.mxu0 %v1206
        %1419 = vmatpush1.bf16.msra.mxu0 %v1205
        %1420 = vmatprep.subr.bf16.mxu0 %v1212
        %1421 = vmatpush1.bf16.msra.mxu0 %v1211
        %1422 = vmatprep.subr.bf16.mxu0 %v1218
        %1423 = vmatpush1.bf16.msra.mxu0 %v1217
        %1424 = vmatprep.subr.bf16.mxu0 %v1224
        %1425 = vmatpush1.bf16.msra.mxu0 %v1223
        %1426 = vmatprep.subr.bf16.mxu0 %v1230
        %1427 = vmatpush1.bf16.msra.mxu0 %v1229
        %1428 = vmatprep.subr.bf16.mxu0 %v1236
        %1429 = vmatpush1.bf16.msra.mxu0 %v1235
        %1430 = vmatprep.subr.bf16.mxu0 %v1242
        %1431 = vmatpush1.bf16.msra.mxu0 %v1241
        %1432 = vmatprep.subr.bf16.mxu0 %v1248
        %1433 = vmatpush1.bf16.msra.mxu0 %v1247
        %1434 = vmatprep.subr.bf16.mxu0 %v1254
        %1435 = vmatpush1.bf16.msra.mxu0 %v1253
        %1436 = vmatprep.subr.bf16.mxu0 %v1260
        %1437 = vmatpush1.bf16.msra.mxu0 %v1259
        %1438 = vmatprep.subr.bf16.mxu0 %v1266
        %1439 = vmatpush1.bf16.msra.mxu0 %v1265
        %1440 = vmatprep.mubr.bf16.mxu0 %v884
        %1441 = vmatmul.mubr.bf16.gmra.mrb[0].mxu0 %v883
        %v1442 = vpop.f32.mrb[0].mxu0
        %v1443 = vadd.f32 0.0, %v1442
        %v1444 = vpop.f32.mrb[0].mxu0
        %v1445 = vadd.f32 0.0, %v1444
        %v1446 = vpop.f32.mrb[0].mxu0
        %v1447 = vadd.f32 0.0, %v1446
        %v1448 = vpop.f32.mrb[0].mxu0
        %v1449 = vadd.f32 0.0, %v1448
        %1450 = vdwg.mxu0
        %1451 = vmatprep.subr.bf16.mxu0 %v1178
        %1452 = vmatpush1.bf16.msra.mxu0 %v1177
        %1453 = vmatprep.subr.bf16.mxu0 %v1184
        %1454 = vmatpush1.bf16.msra.mxu0 %v1183
        %1455 = vmatprep.subr.bf16.mxu0 %v1190
        %1456 = vmatpush1.bf16.msra.mxu0 %v1189
        %1457 = vmatprep.subr.bf16.mxu0 %v1196
        %1458 = vmatpush1.bf16.msra.mxu0 %v1195
        %1459 = vmatprep.subr.bf16.mxu0 %v1202
        %1460 = vmatpush1.bf16.msra.mxu0 %v1201
        %1461 = vmatprep.subr.bf16.mxu0 %v1208
        %1462 = vmatpush1.bf16.msra.mxu0 %v1207
        %1463 = vmatprep.subr.bf16.mxu0 %v1214
        %1464 = vmatpush1.bf16.msra.mxu0 %v1213
        %1465 = vmatprep.subr.bf16.mxu0 %v1220
        %1466 = vmatpush1.bf16.msra.mxu0 %v1219
        %1467 = vmatprep.subr.bf16.mxu0 %v1226
        %1468 = vmatpush1.bf16.msra.mxu0 %v1225
        %1469 = vmatprep.subr.bf16.mxu0 %v1232
        %1470 = vmatpush1.bf16.msra.mxu0 %v1231
        %1471 = vmatprep.subr.bf16.mxu0 %v1238
        %1472 = vmatpush1.bf16.msra.mxu0 %v1237
        %1473 = vmatprep.subr.bf16.mxu0 %v1244
        %1474 = vmatpush1.bf16.msra.mxu0 %v1243
        %1475 = vmatprep.subr.bf16.mxu0 %v1250
        %1476 = vmatpush1.bf16.msra.mxu0 %v1249
        %1477 = vmatprep.subr.bf16.mxu0 %v1256
        %1478 = vmatpush1.bf16.msra.mxu0 %v1255
        %1479 = vmatprep.subr.bf16.mxu0 %v1262
        %1480 = vmatpush1.bf16.msra.mxu0 %v1261
        %1481 = vmatprep.subr.bf16.mxu0 %v1268
        %1482 = vmatpush1.bf16.msra.mxu0 %v1267
        %1483 = vmatprep.mubr.bf16.mxu0 %v884
        %1484 = vmatmul.mubr.bf16.gmra.mrb[0].mxu0 %v883
        %v1485 = vpop.f32.mrb[0].mxu0
        %v1486 = vadd.f32 0.0, %v1485
        %v1487 = vpop.f32.mrb[0].mxu0
        %v1488 = vadd.f32 0.0, %v1487
        %v1489 = vpop.f32.mrb[0].mxu0
        %v1490 = vadd.f32 0.0, %v1489
        %v1491 = vpop.f32.mrb[0].mxu0
        %v1492 = vadd.f32 0.0, %v1491
        %1493 = vdwg.mxu0
        %v1494 = vlaneseq
        %v1495 = vshrl.u32 %v1494, 7
        %v1496 = vsub.s32 0, %v1495
        %v1497 = vrot.slane %v605, %v1496
        %v1498 = vlaneseq
        %v1499 = vshrl.u32 %v1498, 7
        %v1500 = vsub.s32 0, %v1499
        %v1501 = vrot.slane %v606, %v1500
        %v1502 = vadd.f32 %v1400, %v1497
        %v1503 = vadd.f32 %v1402, %v1501
        %v1504 = vadd.f32 %v1404, %v1497
        %v1505 = vadd.f32 %v1406, %v1501
        %v1506 = vlaneseq
        %v1507 = vshrl.u32 %v1506, 7
        %v1508 = vsub.s32 1, %v1507
        %v1509 = vrot.slane %v605, %v1508
        %v1510 = vlaneseq
        %v1511 = vshrl.u32 %v1510, 7
        %v1512 = vsub.s32 1, %v1511
        %v1513 = vrot.slane %v606, %v1512
        %v1514 = vadd.f32 %v1443, %v1509
        %v1515 = vadd.f32 %v1445, %v1513
        %v1516 = vadd.f32 %v1447, %v1509
        %v1517 = vadd.f32 %v1449, %v1513
        %v1518 = vlaneseq
        %v1519 = vshrl.u32 %v1518, 7
        %v1520 = vsub.s32 2, %v1519
        %v1521 = vrot.slane %v605, %v1520
        %v1522 = vlaneseq
        %v1523 = vshrl.u32 %v1522, 7
        %v1524 = vsub.s32 2, %v1523
        %v1525 = vrot.slane %v606, %v1524
        %v1526 = vadd.f32 %v1486, %v1521
        %v1527 = vadd.f32 %v1488, %v1525
        %v1528 = vadd.f32 %v1490, %v1521
        %v1529 = vadd.f32 %v1492, %v1525
        %v1534 = vcombine.low %v1502, %v1503
        %v1535 = vcombine.high %v1502, %v1503
        %v1537 = vunpack.c.l.s4 1966171168
        %v1538 = vunpack.c.0.s8 %v1537
        %v1539 = vlaneseq
        %v1540 = vshrl.u32 %v1539, 7
        %v1541 = vsub.s32 %v1538, %v1540
        %v1542 = vrot.slane %v1534, %v1541
        %v1544 = vunpack.c.l.s4 1966171168
        %v1545 = vunpack.c.0.s8 %v1544
        %v1546 = vlaneseq
        %v1547 = vshrl.u32 %v1546, 7
        %v1548 = vsub.s32 %v1545, %v1547
        %v1549 = vrot.slane %v1535, %v1548
        %v1550 = vcombine.high %v1542, %v1542
        %v1551 = vcombine.high %v1549, %v1549
        %v1553 = vunpack.c.l.s4 1966171168
        %v1554 = vunpack.c.0.s8 %v1553
        %v1555 = vlaneseq
        %v1556 = vshrl.u32 %v1555, 7
        %v1557 = vsub.s32 %v1554, %v1556
        %v1558 = vrot.slane %v1542, %v1557
        %v1560 = vunpack.c.l.s4 1966171168
        %v1561 = vunpack.c.0.s8 %v1560
        %v1562 = vlaneseq
        %v1563 = vshrl.u32 %v1562, 7
        %v1564 = vsub.s32 %v1561, %v1563
        %v1565 = vrot.slane %v1549, %v1564
        %v1567 = vunpack.c.l.s4 1966171168
        %v1568 = vunpack.c.0.s8 %v1567
        %v1569 = vlaneseq
        %v1570 = vshrl.u32 %v1569, 7
        %v1571 = vsub.s32 %v1568, %v1570
        %v1572 = vrot.slane %v1550, %v1571
        %v1574 = vunpack.c.l.s4 1966171168
        %v1575 = vunpack.c.0.s8 %v1574
        %v1576 = vlaneseq
        %v1577 = vshrl.u32 %v1576, 7
        %v1578 = vsub.s32 %v1575, %v1577
        %v1579 = vrot.slane %v1551, %v1578
        %v1580 = vcombine.high %v1558, %v1558
        %v1581 = vcombine.high %v1565, %v1565
        %v1582 = vcombine.high %v1572, %v1572
        %v1583 = vcombine.high %v1579, %v1579
        %v1584 = vcombine.low %v1504, %v1505
        %v1585 = vcombine.high %v1504, %v1505
        %v1587 = vunpack.c.l.s4 1966171168
        %v1588 = vunpack.c.0.s8 %v1587
        %v1589 = vlaneseq
        %v1590 = vshrl.u32 %v1589, 7
        %v1591 = vsub.s32 %v1588, %v1590
        %v1592 = vrot.slane %v1584, %v1591
        %v1594 = vunpack.c.l.s4 1966171168
        %v1595 = vunpack.c.0.s8 %v1594
        %v1596 = vlaneseq
        %v1597 = vshrl.u32 %v1596, 7
        %v1598 = vsub.s32 %v1595, %v1597
        %v1599 = vrot.slane %v1585, %v1598
        %v1600 = vcombine.high %v1592, %v1592
        %v1601 = vcombine.high %v1599, %v1599
        %v1603 = vunpack.c.l.s4 1966171168
        %v1604 = vunpack.c.0.s8 %v1603
        %v1605 = vlaneseq
        %v1606 = vshrl.u32 %v1605, 7
        %v1607 = vsub.s32 %v1604, %v1606
        %v1608 = vrot.slane %v1592, %v1607
        %v1610 = vunpack.c.l.s4 1966171168
        %v1611 = vunpack.c.0.s8 %v1610
        %v1612 = vlaneseq
        %v1613 = vshrl.u32 %v1612, 7
        %v1614 = vsub.s32 %v1611, %v1613
        %v1615 = vrot.slane %v1599, %v1614
        %v1617 = vunpack.c.l.s4 1966171168
        %v1618 = vunpack.c.0.s8 %v1617
        %v1619 = vlaneseq
        %v1620 = vshrl.u32 %v1619, 7
        %v1621 = vsub.s32 %v1618, %v1620
        %v1622 = vrot.slane %v1600, %v1621
        %v1624 = vunpack.c.l.s4 1966171168
        %v1625 = vunpack.c.0.s8 %v1624
        %v1626 = vlaneseq
        %v1627 = vshrl.u32 %v1626, 7
        %v1628 = vsub.s32 %v1625, %v1627
        %v1629 = vrot.slane %v1601, %v1628
        %v1630 = vcombine.high %v1608, %v1608
        %v1631 = vcombine.high %v1615, %v1615
        %v1632 = vcombine.high %v1622, %v1622
        %v1633 = vcombine.high %v1629, %v1629
        %v1634 = vlaneseq
        %v1635 = vshrl.u32 %v1634, 7
        %v1636 = vsub.s32 0, %v1635
        %v1637 = vrot.slane %v1558, %v1636
        %v1638 = vlaneseq
        %v1639 = vshrl.u32 %v1638, 7
        %v1640 = vsub.s32 1, %v1639
        %v1641 = vrot.slane %v1558, %v1640
        %v1642 = vlaneseq
        %v1643 = vshrl.u32 %v1642, 7
        %v1644 = vsub.s32 0, %v1643
        %v1645 = vrot.slane %v1572, %v1644
        %v1646 = vlaneseq
        %v1647 = vshrl.u32 %v1646, 7
        %v1648 = vsub.s32 1, %v1647
        %v1649 = vrot.slane %v1572, %v1648
        %v1650 = vlaneseq
        %v1651 = vshrl.u32 %v1650, 7
        %v1652 = vsub.s32 0, %v1651
        %v1653 = vrot.slane %v1580, %v1652
        %v1654 = vlaneseq
        %v1655 = vshrl.u32 %v1654, 7
        %v1656 = vsub.s32 1, %v1655
        %v1657 = vrot.slane %v1580, %v1656
        %v1658 = vlaneseq
        %v1659 = vshrl.u32 %v1658, 7
        %v1660 = vsub.s32 0, %v1659
        %v1661 = vrot.slane %v1582, %v1660
        %v1662 = vlaneseq
        %v1663 = vshrl.u32 %v1662, 7
        %v1664 = vsub.s32 1, %v1663
        %v1665 = vrot.slane %v1582, %v1664
        %v1666 = vlaneseq
        %v1667 = vshrl.u32 %v1666, 7
        %v1668 = vsub.s32 0, %v1667
        %v1669 = vrot.slane %v1565, %v1668
        %v1670 = vlaneseq
        %v1671 = vshrl.u32 %v1670, 7
        %v1672 = vsub.s32 1, %v1671
        %v1673 = vrot.slane %v1565, %v1672
        %v1674 = vlaneseq
        %v1675 = vshrl.u32 %v1674, 7
        %v1676 = vsub.s32 0, %v1675
        %v1677 = vrot.slane %v1579, %v1676
        %v1678 = vlaneseq
        %v1679 = vshrl.u32 %v1678, 7
        %v1680 = vsub.s32 1, %v1679
        %v1681 = vrot.slane %v1579, %v1680
        %v1682 = vlaneseq
        %v1683 = vshrl.u32 %v1682, 7
        %v1684 = vsub.s32 0, %v1683
        %v1685 = vrot.slane %v1581, %v1684
        %v1686 = vlaneseq
        %v1687 = vshrl.u32 %v1686, 7
        %v1688 = vsub.s32 1, %v1687
        %v1689 = vrot.slane %v1581, %v1688
        %v1690 = vlaneseq
        %v1691 = vshrl.u32 %v1690, 7
        %v1692 = vsub.s32 0, %v1691
        %v1693 = vrot.slane %v1583, %v1692
        %v1694 = vlaneseq
        %v1695 = vshrl.u32 %v1694, 7
        %v1696 = vsub.s32 1, %v1695
        %v1697 = vrot.slane %v1583, %v1696
        %v1698 = vlaneseq
        %v1699 = vshrl.u32 %v1698, 7
        %v1700 = vsub.s32 0, %v1699
        %v1701 = vrot.slane %v1608, %v1700
        %v1702 = vlaneseq
        %v1703 = vshrl.u32 %v1702, 7
        %v1704 = vsub.s32 1, %v1703
        %v1705 = vrot.slane %v1608, %v1704
        %v1706 = vlaneseq
        %v1707 = vshrl.u32 %v1706, 7
        %v1708 = vsub.s32 0, %v1707
        %v1709 = vrot.slane %v1622, %v1708
        %v1710 = vlaneseq
        %v1711 = vshrl.u32 %v1710, 7
        %v1712 = vsub.s32 1, %v1711
        %v1713 = vrot.slane %v1622, %v1712
        %v1714 = vlaneseq
        %v1715 = vshrl.u32 %v1714, 7
        %v1716 = vsub.s32 0, %v1715
        %v1717 = vrot.slane %v1630, %v1716
        %v1718 = vlaneseq
        %v1719 = vshrl.u32 %v1718, 7
        %v1720 = vsub.s32 1, %v1719
        %v1721 = vrot.slane %v1630, %v1720
        %v1722 = vlaneseq
        %v1723 = vshrl.u32 %v1722, 7
        %v1724 = vsub.s32 0, %v1723
        %v1725 = vrot.slane %v1632, %v1724
        %v1726 = vlaneseq
        %v1727 = vshrl.u32 %v1726, 7
        %v1728 = vsub.s32 1, %v1727
        %v1729 = vrot.slane %v1632, %v1728
        %v1730 = vlaneseq
        %v1731 = vshrl.u32 %v1730, 7
        %v1732 = vsub.s32 0, %v1731
        %v1733 = vrot.slane %v1615, %v1732
        %v1734 = vlaneseq
        %v1735 = vshrl.u32 %v1734, 7
        %v1736 = vsub.s32 1, %v1735
        %v1737 = vrot.slane %v1615, %v1736
        %v1738 = vlaneseq
        %v1739 = vshrl.u32 %v1738, 7
        %v1740 = vsub.s32 0, %v1739
        %v1741 = vrot.slane %v1629, %v1740
        %v1742 = vlaneseq
        %v1743 = vshrl.u32 %v1742, 7
        %v1744 = vsub.s32 1, %v1743
        %v1745 = vrot.slane %v1629, %v1744
        %v1746 = vlaneseq
        %v1747 = vshrl.u32 %v1746, 7
        %v1748 = vsub.s32 0, %v1747
        %v1749 = vrot.slane %v1631, %v1748
        %v1750 = vlaneseq
        %v1751 = vshrl.u32 %v1750, 7
        %v1752 = vsub.s32 1, %v1751
        %v1753 = vrot.slane %v1631, %v1752
        %v1754 = vlaneseq
        %v1755 = vshrl.u32 %v1754, 7
        %v1756 = vsub.s32 0, %v1755
        %v1757 = vrot.slane %v1633, %v1756
        %v1758 = vlaneseq
        %v1759 = vshrl.u32 %v1758, 7
        %v1760 = vsub.s32 1, %v1759
        %v1761 = vrot.slane %v1633, %v1760
        %v1794 = vmul.f32 %v1637, %v609
        %v1795 = vmul.f32 %v1641, %v610
        %v1796 = vmul.f32 %v1645, %v609
        %v1797 = vmul.f32 %v1649, %v610
        %v1798 = vmul.f32 %v1653, %v609
        %v1799 = vmul.f32 %v1657, %v610
        %v1800 = vmul.f32 %v1661, %v609
        %v1801 = vmul.f32 %v1665, %v610
        %v1802 = vmul.f32 %v1669, %v609
        %v1803 = vmul.f32 %v1673, %v610
        %v1804 = vmul.f32 %v1677, %v609
        %v1805 = vmul.f32 %v1681, %v610
        %v1806 = vmul.f32 %v1685, %v609
        %v1807 = vmul.f32 %v1689, %v610
        %v1808 = vmul.f32 %v1693, %v609
        %v1809 = vmul.f32 %v1697, %v610
        %v1810 = vmul.f32 %v1701, %v609
        %v1811 = vmul.f32 %v1705, %v610
        %v1812 = vmul.f32 %v1709, %v609
        %v1813 = vmul.f32 %v1713, %v610
        %v1814 = vmul.f32 %v1717, %v609
        %v1815 = vmul.f32 %v1721, %v610
        %v1816 = vmul.f32 %v1725, %v609
        %v1817 = vmul.f32 %v1729, %v610
        %v1818 = vmul.f32 %v1733, %v609
        %v1819 = vmul.f32 %v1737, %v610
        %v1820 = vmul.f32 %v1741, %v609
        %v1821 = vmul.f32 %v1745, %v610
        %v1822 = vmul.f32 %v1749, %v609
        %v1823 = vmul.f32 %v1753, %v610
        %v1824 = vmul.f32 %v1757, %v609
        %v1825 = vmul.f32 %v1761, %v610
        %1826 = vmatprep.subr.mxu0 %v1515
        %1827 = vmatpush1.xpose.msra.mxu0 %v1514
        %1828 = vmatprep.subr.mxu0 %v1517
        %1829 = vmatpush1.xpose.msra.mxu0 %v1516
        %1830 = vmatprep.subr.mxu0 0.0
        %1831 = vmatpush1.xpose.msra.mxu0 0.0
        %1832 = vmatprep.subr.mxu0 0.0
        %1833 = vmatpush1.xpose.msra.mxu0 0.0
        %1834 = vmatprep.subr.mxu0 0.0
        %1835 = vmatpush1.xpose.msra.mxu0 0.0
        %1836 = vmatprep.subr.mxu0 0.0
        %1837 = vmatpush1.xpose.msra.mxu0 0.0
        %1838 = vmatprep.subr.mxu0 0.0
        %1839 = vmatpush1.xpose.msra.mxu0 0.0
        %1840 = vmatprep.subr.mxu0 0.0
        %1841 = vmatpush1.xpose.msra.mxu0 0.0
        %1842 = vmatprep.subr.mxu0 0.0
        %1843 = vmatpush1.xpose.msra.mxu0 0.0
        %1844 = vmatprep.subr.mxu0 0.0
        %1845 = vmatpush1.xpose.msra.mxu0 0.0
        %1846 = vmatprep.subr.mxu0 0.0
        %1847 = vmatpush1.xpose.msra.mxu0 0.0
        %1848 = vmatprep.subr.mxu0 0.0
        %1849 = vmatpush1.xpose.msra.mxu0 0.0
        %1850 = vmatprep.subr.mxu0 0.0
        %1851 = vmatpush1.xpose.msra.mxu0 0.0
        %1852 = vmatprep.subr.mxu0 0.0
        %1853 = vmatpush1.xpose.msra.mxu0 0.0
        %1854 = vmatprep.subr.mxu0 0.0
        %1855 = vmatpush1.xpose.msra.mxu0 0.0
        %1856 = vmatprep.subr.mxu0 0.0
        %1857 = vmatpush1.xpose.msra.mxu0 0.0
        %1858 = vmatprep.subr.mxu0 0.0
        %1859 = vmatpush1.xpose.msra.mxu0 0.0
        %1860 = vmatprep.subr.mxu0 0.0
        %1861 = vmatpush1.xpose.msra.mxu0 0.0
        %1862 = vmatprep.subr.mxu0 0.0
        %1863 = vmatpush1.xpose.msra.mxu0 0.0
        %1864 = vmatprep.subr.mxu0 0.0
        %1865 = vmatpush1.xpose.msra.mxu0 0.0
        %1866 = vmatprep.subr.mxu0 0.0
        %1867 = vmatpush1.xpose.msra.mxu0 0.0
        %1868 = vmatprep.subr.mxu0 0.0
        %1869 = vmatpush1.xpose.msra.mxu0 0.0
        %1870 = vmatprep.subr.mxu0 0.0
        %1871 = vmatpush1.xpose.msra.mxu0 0.0
        %1872 = vmatprep.subr.mxu0 0.0
        %1873 = vmatpush1.xpose.msra.mxu0 0.0
        %1874 = vmatprep.subr.mxu0 0.0
        %1875 = vmatpush1.xpose.msra.mxu0 0.0
        %1876 = vmatprep.subr.mxu0 0.0
        %1877 = vmatpush1.xpose.msra.mxu0 0.0
        %1878 = vmatprep.subr.mxu0 0.0
        %1879 = vmatpush1.xpose.msra.mxu0 0.0
        %1880 = vmatprep.subr.mxu0 0.0
        %1881 = vmatpush1.xpose.msra.mxu0 0.0
        %1882 = vmatprep.subr.mxu0 0.0
        %1883 = vmatpush1.xpose.msra.mxu0 0.0
        %1884 = vmatprep.subr.mxu0 0.0
        %1885 = vmatpush1.xpose.msra.mxu0 0.0
        %1886 = vmatprep.subr.mxu0 0.0
        %1887 = vmatpush1.xpose.msra.mxu0 0.0
        %1888 = vmatprep.subr.mxu0 0.0
        %1889 = vmatpush1.xpose.msra.mxu0 0.0
        %1890 = vmatprep.mubr.f32.mxu0 %v1795
        %1891 = vmatmul.mubr.f32.gmra.mrb[0].mxu0 %v1794
        %v1892 = vpop.f32.mrb[0].mxu0
        %v1893 = vadd.f32 %v611, %v1892
        %v1894 = vpop.f32.mrb[0].mxu0
        %1895 = vmatprep.mubr.f32.mxu0 %v1797
        %1896 = vmatmul.mubr.f32.gmra.mrb[0].mxu0 %v1796
        %v1897 = vpop.f32.mrb[0].mxu0
        %v1898 = vadd.f32 %v612, %v1897
        %v1899 = vpop.f32.mrb[0].mxu0
        %1900 = vmatprep.mubr.f32.mxu0 %v1799
        %1901 = vmatmul.mubr.f32.gmra.mrb[0].mxu0 %v1798
        %v1902 = vpop.f32.mrb[0].mxu0
        %v1903 = vadd.f32 %v613, %v1902
        %v1904 = vpop.f32.mrb[0].mxu0
        %1905 = vmatprep.mubr.f32.mxu0 %v1801
        %1906 = vmatmul.mubr.f32.gmra.mrb[0].mxu0 %v1800
        %v1907 = vpop.f32.mrb[0].mxu0
        %v1908 = vadd.f32 %v614, %v1907
        %v1909 = vpop.f32.mrb[0].mxu0
        %1910 = vmatprep.mubr.f32.mxu0 %v1803
        %1911 = vmatmul.mubr.f32.gmra.mrb[0].mxu0 %v1802
        %v1912 = vpop.f32.mrb[0].mxu0
        %v1913 = vadd.f32 %v615, %v1912
        %v1914 = vpop.f32.mrb[0].mxu0
        %1915 = vmatprep.mubr.f32.mxu0 %v1805
        %1916 = vmatmul.mubr.f32.gmra.mrb[0].mxu0 %v1804
        %v1917 = vpop.f32.mrb[0].mxu0
        %v1918 = vadd.f32 %v616, %v1917
        %v1919 = vpop.f32.mrb[0].mxu0
        %1920 = vmatprep.mubr.f32.mxu0 %v1807
        %1921 = vmatmul.mubr.f32.gmra.mrb[0].mxu0 %v1806
        %v1922 = vpop.f32.mrb[0].mxu0
        %v1923 = vadd.f32 %v617, %v1922
        %v1924 = vpop.f32.mrb[0].mxu0
        %1925 = vmatprep.mubr.f32.mxu0 %v1809
        %1926 = vmatmul.mubr.f32.gmra.mrb[0].mxu0 %v1808
        %v1927 = vpop.f32.mrb[0].mxu0
        %v1928 = vadd.f32 %v618, %v1927
        %v1929 = vpop.f32.mrb[0].mxu0
        %1930 = vmatprep.mubr.f32.mxu0 %v1811
        %1931 = vmatmul.mubr.f32.gmra.mrb[0].mxu0 %v1810
        %v1932 = vpop.f32.mrb[0].mxu0
        %v1933 = vadd.f32 %v619, %v1932
        %v1934 = vpop.f32.mrb[0].mxu0
        %1935 = vmatprep.mubr.f32.mxu0 %v1813
        %1936 = vmatmul.mubr.f32.gmra.mrb[0].mxu0 %v1812
        %v1937 = vpop.f32.mrb[0].mxu0
        %v1938 = vadd.f32 %v620, %v1937
        %v1939 = vpop.f32.mrb[0].mxu0
        %1940 = vmatprep.mubr.f32.mxu0 %v1815
        %1941 = vmatmul.mubr.f32.gmra.mrb[0].mxu0 %v1814
        %v1942 = vpop.f32.mrb[0].mxu0
        %v1943 = vadd.f32 %v621, %v1942
        %v1944 = vpop.f32.mrb[0].mxu0
        %1945 = vmatprep.mubr.f32.mxu0 %v1817
        %1946 = vmatmul.mubr.f32.gmra.mrb[0].mxu0 %v1816
        %v1947 = vpop.f32.mrb[0].mxu0
        %v1948 = vadd.f32 %v622, %v1947
        %v1949 = vpop.f32.mrb[0].mxu0
        %1950 = vmatprep.mubr.f32.mxu0 %v1819
        %1951 = vmatmul.mubr.f32.gmra.mrb[0].mxu0 %v1818
        %v1952 = vpop.f32.mrb[0].mxu0
        %v1953 = vadd.f32 %v623, %v1952
        %v1954 = vpop.f32.mrb[0].mxu0
        %1955 = vmatprep.mubr.f32.mxu0 %v1821
        %1956 = vmatmul.mubr.f32.gmra.mrb[0].mxu0 %v1820
        %v1957 = vpop.f32.mrb[0].mxu0
        %v1958 = vadd.f32 %v624, %v1957
        %v1959 = vpop.f32.mrb[0].mxu0
        %1960 = vmatprep.mubr.f32.mxu0 %v1823
        %1961 = vmatmul.mubr.f32.gmra.mrb[0].mxu0 %v1822
        %v1962 = vpop.f32.mrb[0].mxu0
        %v1963 = vadd.f32 %v625, %v1962
        %v1964 = vpop.f32.mrb[0].mxu0
        %1965 = vmatprep.mubr.f32.mxu0 %v1825
        %1966 = vmatmul.mubr.f32.gmra.mrb[0].mxu0 %v1824
        %v1967 = vpop.f32.mrb[0].mxu0
        %v1968 = vadd.f32 %v626, %v1967
        %v1969 = vpop.f32.mrb[0].mxu0
        %1970 = vdwg.mxu0
        %vm1971 = vcmask 130048
        %v1972 = vsel %vm1971, %v1893, -inf
        %1973 = vmax.xlane.f32.xlu0 %v1972
        %v1974 = vpop.xlane.xlu0 %1973
        %v1975 = vsel %vm1971, %v1898, -inf
        %1976 = vmax.xlane.f32.xlu0 %v1975
        %v1977 = vpop.xlane.xlu0 %1976
        %v1978 = vsel %vm1971, %v1903, -inf
        %1979 = vmax.xlane.f32.xlu0 %v1978
        %v1980 = vpop.xlane.xlu0 %1979
        %v1981 = vsel %vm1971, %v1908, -inf
        %1982 = vmax.xlane.f32.xlu0 %v1981
        %v1983 = vpop.xlane.xlu0 %1982
        %v1984 = vsel %vm1971, %v1913, -inf
        %1985 = vmax.xlane.f32.xlu0 %v1984
        %v1986 = vpop.xlane.xlu0 %1985
        %v1987 = vsel %vm1971, %v1918, -inf
        %1988 = vmax.xlane.f32.xlu0 %v1987
        %v1989 = vpop.xlane.xlu0 %1988
        %v1990 = vsel %vm1971, %v1923, -inf
        %1991 = vmax.xlane.f32.xlu0 %v1990
        %v1992 = vpop.xlane.xlu0 %1991
        %v1993 = vsel %vm1971, %v1928, -inf
        %1994 = vmax.xlane.f32.xlu0 %v1993
        %v1995 = vpop.xlane.xlu0 %1994
        %v1996 = vsel %vm1971, %v1933, -inf
        %1997 = vmax.xlane.f32.xlu0 %v1996
        %v1998 = vpop.xlane.xlu0 %1997
        %v1999 = vsel %vm1971, %v1938, -inf
        %2000 = vmax.xlane.f32.xlu0 %v1999
        %v2001 = vpop.xlane.xlu0 %2000
        %v2002 = vsel %vm1971, %v1943, -inf
        %2003 = vmax.xlane.f32.xlu0 %v2002
        %v2004 = vpop.xlane.xlu0 %2003
        %v2005 = vsel %vm1971, %v1948, -inf
        %2006 = vmax.xlane.f32.xlu0 %v2005
        %v2007 = vpop.xlane.xlu0 %2006
        %v2008 = vsel %vm1971, %v1953, -inf
        %2009 = vmax.xlane.f32.xlu0 %v2008
        %v2010 = vpop.xlane.xlu0 %2009
        %v2011 = vsel %vm1971, %v1958, -inf
        %2012 = vmax.xlane.f32.xlu0 %v2011
        %v2013 = vpop.xlane.xlu0 %2012
        %v2014 = vsel %vm1971, %v1963, -inf
        %2015 = vmax.xlane.f32.xlu0 %v2014
        %v2016 = vpop.xlane.xlu0 %2015
        %v2017 = vsel %vm1971, %v1968, -inf
        %2018 = vmax.xlane.f32.xlu0 %v2017
        %v2019 = vpop.xlane.xlu0 %2018
        %v2020 = vsub.f32 %v1893, %v1974
        %v2021 = vsub.f32 %v1898, %v1977
        %v2022 = vsub.f32 %v1903, %v1980
        %v2023 = vsub.f32 %v1908, %v1983
        %v2024 = vsub.f32 %v1913, %v1986
        %v2025 = vsub.f32 %v1918, %v1989
        %v2026 = vsub.f32 %v1923, %v1992
        %v2027 = vsub.f32 %v1928, %v1995
        %v2028 = vsub.f32 %v1933, %v1998
        %v2029 = vsub.f32 %v1938, %v2001
        %v2030 = vsub.f32 %v1943, %v2004
        %v2031 = vsub.f32 %v1948, %v2007
        %v2032 = vsub.f32 %v1953, %v2010
        %v2033 = vsub.f32 %v1958, %v2013
        %v2034 = vsub.f32 %v1963, %v2016
        %v2035 = vsub.f32 %v1968, %v2019
        %v2036 = vmul.f32 %v2020, 1.442695
        %v2037 = vpow.pop %v2036
        %v2038 = vmul.f32 %v2021, 1.442695
        %v2039 = vpow.pop %v2038
        %v2040 = vmul.f32 %v2022, 1.442695
        %v2041 = vpow.pop %v2040
        %v2042 = vmul.f32 %v2023, 1.442695
        %v2043 = vpow.pop %v2042
        %v2044 = vmul.f32 %v2024, 1.442695
        %v2045 = vpow.pop %v2044
        %v2046 = vmul.f32 %v2025, 1.442695
        %v2047 = vpow.pop %v2046
        %v2048 = vmul.f32 %v2026, 1.442695
        %v2049 = vpow.pop %v2048
        %v2050 = vmul.f32 %v2027, 1.442695
        %v2051 = vpow.pop %v2050
        %v2052 = vmul.f32 %v2028, 1.442695
        %v2053 = vpow.pop %v2052
        %v2054 = vmul.f32 %v2029, 1.442695
        %v2055 = vpow.pop %v2054
        %v2056 = vmul.f32 %v2030, 1.442695
        %v2057 = vpow.pop %v2056
        %v2058 = vmul.f32 %v2031, 1.442695
        %v2059 = vpow.pop %v2058
        %v2060 = vmul.f32 %v2032, 1.442695
        %v2061 = vpow.pop %v2060
        %v2062 = vmul.f32 %v2033, 1.442695
        %v2063 = vpow.pop %v2062
        %v2064 = vmul.f32 %v2034, 1.442695
        %v2065 = vpow.pop %v2064
        %v2066 = vmul.f32 %v2035, 1.442695
        %v2067 = vpow.pop %v2066
        %v2068 = vsel %vm1971, %v2037, 0.0
        %2069 = vadd.xlane.f32.xlu0 %v2068
        %v2070 = vpop.xlane.xlu0 %2069
        %v2071 = vsel %vm1971, %v2039, 0.0
        %2072 = vadd.xlane.f32.xlu0 %v2071
        %v2073 = vpop.xlane.xlu0 %2072
        %v2074 = vsel %vm1971, %v2041, 0.0
        %2075 = vadd.xlane.f32.xlu0 %v2074
        %v2076 = vpop.xlane.xlu0 %2075
        %v2077 = vsel %vm1971, %v2043, 0.0
        %2078 = vadd.xlane.f32.xlu0 %v2077
        %v2079 = vpop.xlane.xlu0 %2078
        %v2080 = vsel %vm1971, %v2045, 0.0
        %2081 = vadd.xlane.f32.xlu0 %v2080
        %v2082 = vpop.xlane.xlu0 %2081
        %v2083 = vsel %vm1971, %v2047, 0.0
        %2084 = vadd.xlane.f32.xlu0 %v2083
        %v2085 = vpop.xlane.xlu0 %2084
        %v2086 = vsel %vm1971, %v2049, 0.0
        %2087 = vadd.xlane.f32.xlu0 %v2086
        %v2088 = vpop.xlane.xlu0 %2087
        %v2089 = vsel %vm1971, %v2051, 0.0
        %2090 = vadd.xlane.f32.xlu0 %v2089
        %v2091 = vpop.xlane.xlu0 %2090
        %v2092 = vsel %vm1971, %v2053, 0.0
        %2093 = vadd.xlane.f32.xlu0 %v2092
        %v2094 = vpop.xlane.xlu0 %2093
        %v2095 = vsel %vm1971, %v2055, 0.0
        %2096 = vadd.xlane.f32.xlu0 %v2095
        %v2097 = vpop.xlane.xlu0 %2096
        %v2098 = vsel %vm1971, %v2057, 0.0
        %2099 = vadd.xlane.f32.xlu0 %v2098
        %v2100 = vpop.xlane.xlu0 %2099
        %v2101 = vsel %vm1971, %v2059, 0.0
        %2102 = vadd.xlane.f32.xlu0 %v2101
        %v2103 = vpop.xlane.xlu0 %2102
        %v2104 = vsel %vm1971, %v2061, 0.0
        %2105 = vadd.xlane.f32.xlu0 %v2104
        %v2106 = vpop.xlane.xlu0 %2105
        %v2107 = vsel %vm1971, %v2063, 0.0
        %2108 = vadd.xlane.f32.xlu0 %v2107
        %v2109 = vpop.xlane.xlu0 %2108
        %v2110 = vsel %vm1971, %v2065, 0.0
        %2111 = vadd.xlane.f32.xlu0 %v2110
        %v2112 = vpop.xlane.xlu0 %2111
        %v2113 = vsel %vm1971, %v2067, 0.0
        %2114 = vadd.xlane.f32.xlu0 %v2113
        %v2115 = vpop.xlane.xlu0 %2114
        %v2116 = vrcp.pop %v2070
        %v2117 = vrcp.pop %v2073
        %v2118 = vrcp.pop %v2076
        %v2119 = vrcp.pop %v2079
        %v2120 = vrcp.pop %v2082
        %v2121 = vrcp.pop %v2085
        %v2122 = vrcp.pop %v2088
        %v2123 = vrcp.pop %v2091
        %v2124 = vrcp.pop %v2094
        %v2125 = vrcp.pop %v2097
        %v2126 = vrcp.pop %v2100
        %v2127 = vrcp.pop %v2103
        %v2128 = vrcp.pop %v2106
        %v2129 = vrcp.pop %v2109
        %v2130 = vrcp.pop %v2112
        %v2131 = vrcp.pop %v2115
        %v2132 = vmul.f32 %v2037, %v2116
        %v2133 = vmul.f32 %v2039, %v2117
        %v2134 = vmul.f32 %v2041, %v2118
        %v2135 = vmul.f32 %v2043, %v2119
        %v2136 = vmul.f32 %v2045, %v2120
        %v2137 = vmul.f32 %v2047, %v2121
        %v2138 = vmul.f32 %v2049, %v2122
        %v2139 = vmul.f32 %v2051, %v2123
        %v2140 = vmul.f32 %v2053, %v2124
        %v2141 = vmul.f32 %v2055, %v2125
        %v2142 = vmul.f32 %v2057, %v2126
        %v2143 = vmul.f32 %v2059, %v2127
        %v2144 = vmul.f32 %v2061, %v2128
        %v2145 = vmul.f32 %v2063, %v2129
        %v2146 = vmul.f32 %v2065, %v2130
        %v2147 = vmul.f32 %v2067, %v2131
        %v2149 = vsel %vm1971, %v2132, 0
        %v2152 = vsel %vm1971, %v2133, 0
        %v2155 = vsel %vm1971, %v2134, 0
        %v2158 = vsel %vm1971, %v2135, 0
        %v2161 = vsel %vm1971, %v2136, 0
        %v2164 = vsel %vm1971, %v2137, 0
        %v2167 = vsel %vm1971, %v2138, 0
        %v2170 = vsel %vm1971, %v2139, 0
        %v2173 = vsel %vm1971, %v2140, 0
        %v2176 = vsel %vm1971, %v2141, 0
        %v2179 = vsel %vm1971, %v2142, 0
        %v2182 = vsel %vm1971, %v2143, 0
        %v2185 = vsel %vm1971, %v2144, 0
        %v2188 = vsel %vm1971, %v2145, 0
        %v2191 = vsel %vm1971, %v2146, 0
        %v2194 = vsel %vm1971, %v2147, 0
        %2196 = vmatprep.subr.mxu0 %v1527
        %2197 = vmatpush1.msra.mxu0 %v1526
        %2198 = vmatprep.subr.mxu0 %v1529
        %2199 = vmatpush1.msra.mxu0 %v1528
        %2200 = vmatprep.subr.mxu0 0.0
        %2201 = vmatpush1.msra.mxu0 0.0
        %2202 = vmatprep.subr.mxu0 0.0
        %2203 = vmatpush1.msra.mxu0 0.0
        %2204 = vmatprep.subr.mxu0 0.0
        %2205 = vmatpush1.msra.mxu0 0.0
        %2206 = vmatprep.subr.mxu0 0.0
        %2207 = vmatpush1.msra.mxu0 0.0
        %2208 = vmatprep.subr.mxu0 0.0
        %2209 = vmatpush1.msra.mxu0 0.0
        %2210 = vmatprep.subr.mxu0 0.0
        %2211 = vmatpush1.msra.mxu0 0.0
        %2212 = vmatprep.subr.mxu0 0.0
        %2213 = vmatpush1.msra.mxu0 0.0
        %2214 = vmatprep.subr.mxu0 0.0
        %2215 = vmatpush1.msra.mxu0 0.0
        %2216 = vmatprep.subr.mxu0 0.0
        %2217 = vmatpush1.msra.mxu0 0.0
        %2218 = vmatprep.subr.mxu0 0.0
        %2219 = vmatpush1.msra.mxu0 0.0
        %2220 = vmatprep.subr.mxu0 0.0
        %2221 = vmatpush1.msra.mxu0 0.0
        %2222 = vmatprep.subr.mxu0 0.0
        %2223 = vmatpush1.msra.mxu0 0.0
        %2224 = vmatprep.subr.mxu0 0.0
        %2225 = vmatpush1.msra.mxu0 0.0
        %2226 = vmatprep.subr.mxu0 0.0
        %2227 = vmatpush1.msra.mxu0 0.0
        %2228 = vmatprep.subr.mxu0 0.0
        %2229 = vmatpush1.msra.mxu0 0.0
        %2230 = vmatprep.subr.mxu0 0.0
        %2231 = vmatpush1.msra.mxu0 0.0
        %2232 = vmatprep.subr.mxu0 0.0
        %2233 = vmatpush1.msra.mxu0 0.0
        %2234 = vmatprep.subr.mxu0 0.0
        %2235 = vmatpush1.msra.mxu0 0.0
        %2236 = vmatprep.subr.mxu0 0.0
        %2237 = vmatpush1.msra.mxu0 0.0
        %2238 = vmatprep.subr.mxu0 0.0
        %2239 = vmatpush1.msra.mxu0 0.0
        %2240 = vmatprep.subr.mxu0 0.0
        %2241 = vmatpush1.msra.mxu0 0.0
        %2242 = vmatprep.subr.mxu0 0.0
        %2243 = vmatpush1.msra.mxu0 0.0
        %2244 = vmatprep.subr.mxu0 0.0
        %2245 = vmatpush1.msra.mxu0 0.0
        %2246 = vmatprep.subr.mxu0 0.0
        %2247 = vmatpush1.msra.mxu0 0.0
        %2248 = vmatprep.subr.mxu0 0.0
        %2249 = vmatpush1.msra.mxu0 0.0
        %2250 = vmatprep.subr.mxu0 0.0
        %2251 = vmatpush1.msra.mxu0 0.0
        %2252 = vmatprep.subr.mxu0 0.0
        %2253 = vmatpush1.msra.mxu0 0.0
        %2254 = vmatprep.subr.mxu0 0.0
        %2255 = vmatpush1.msra.mxu0 0.0
        %2256 = vmatprep.subr.mxu0 0.0
        %2257 = vmatpush1.msra.mxu0 0.0
        %2258 = vmatprep.subr.mxu0 0.0
        %2259 = vmatpush1.msra.mxu0 0.0
        %2260 = vmatprep.mubr.f32.mxu0 0.0
        %2261 = vmatmul.mubr.f32.gmra.mrb[0].mxu0 %v2149
        %v2262 = vpop.f32.mrb[0].mxu0
        %v2263 = vadd.f32 0.0, %v2262
        %v2264 = vpop.f32.mrb[0].mxu0
        %v2265 = vadd.f32 0.0, %v2264
        %2266 = vmatprep.mubr.f32.mxu0 0.0
        %2267 = vmatmul.mubr.f32.gmra.mrb[0].mxu0 %v2152
        %v2268 = vpop.f32.mrb[0].mxu0
        %v2269 = vadd.f32 0.0, %v2268
        %v2270 = vpop.f32.mrb[0].mxu0
        %v2271 = vadd.f32 0.0, %v2270
        %2272 = vmatprep.mubr.f32.mxu0 0.0
        %2273 = vmatmul.mubr.f32.gmra.mrb[0].mxu0 %v2155
        %v2274 = vpop.f32.mrb[0].mxu0
        %v2275 = vadd.f32 0.0, %v2274
        %v2276 = vpop.f32.mrb[0].mxu0
        %v2277 = vadd.f32 0.0, %v2276
        %2278 = vmatprep.mubr.f32.mxu0 0.0
        %2279 = vmatmul.mubr.f32.gmra.mrb[0].mxu0 %v2158
        %v2280 = vpop.f32.mrb[0].mxu0
        %v2281 = vadd.f32 0.0, %v2280
        %v2282 = vpop.f32.mrb[0].mxu0
        %v2283 = vadd.f32 0.0, %v2282
        %2284 = vmatprep.mubr.f32.mxu0 0.0
        %2285 = vmatmul.mubr.f32.gmra.mrb[0].mxu0 %v2161
        %v2286 = vpop.f32.mrb[0].mxu0
        %v2287 = vadd.f32 0.0, %v2286
        %v2288 = vpop.f32.mrb[0].mxu0
        %v2289 = vadd.f32 0.0, %v2288
        %2290 = vmatprep.mubr.f32.mxu0 0.0
        %2291 = vmatmul.mubr.f32.gmra.mrb[0].mxu0 %v2164
        %v2292 = vpop.f32.mrb[0].mxu0
        %v2293 = vadd.f32 0.0, %v2292
        %v2294 = vpop.f32.mrb[0].mxu0
        %v2295 = vadd.f32 0.0, %v2294
        %2296 = vmatprep.mubr.f32.mxu0 0.0
        %2297 = vmatmul.mubr.f32.gmra.mrb[0].mxu0 %v2167
        %v2298 = vpop.f32.mrb[0].mxu0
        %v2299 = vadd.f32 0.0, %v2298
        %v2300 = vpop.f32.mrb[0].mxu0
        %v2301 = vadd.f32 0.0, %v2300
        %2302 = vmatprep.mubr.f32.mxu0 0.0
        %2303 = vmatmul.mubr.f32.gmra.mrb[0].mxu0 %v2170
        %v2304 = vpop.f32.mrb[0].mxu0
        %v2305 = vadd.f32 0.0, %v2304
        %v2306 = vpop.f32.mrb[0].mxu0
        %v2307 = vadd.f32 0.0, %v2306
        %2308 = vmatprep.mubr.f32.mxu0 0.0
        %2309 = vmatmul.mubr.f32.gmra.mrb[0].mxu0 %v2173
        %v2310 = vpop.f32.mrb[0].mxu0
        %v2311 = vadd.f32 0.0, %v2310
        %v2312 = vpop.f32.mrb[0].mxu0
        %v2313 = vadd.f32 0.0, %v2312
        %2314 = vmatprep.mubr.f32.mxu0 0.0
        %2315 = vmatmul.mubr.f32.gmra.mrb[0].mxu0 %v2176
        %v2316 = vpop.f32.mrb[0].mxu0
        %v2317 = vadd.f32 0.0, %v2316
        %v2318 = vpop.f32.mrb[0].mxu0
        %v2319 = vadd.f32 0.0, %v2318
        %2320 = vmatprep.mubr.f32.mxu0 0.0
        %2321 = vmatmul.mubr.f32.gmra.mrb[0].mxu0 %v2179
        %v2322 = vpop.f32.mrb[0].mxu0
        %v2323 = vadd.f32 0.0, %v2322
        %v2324 = vpop.f32.mrb[0].mxu0
        %v2325 = vadd.f32 0.0, %v2324
        %2326 = vmatprep.mubr.f32.mxu0 0.0
        %2327 = vmatmul.mubr.f32.gmra.mrb[0].mxu0 %v2182
        %v2328 = vpop.f32.mrb[0].mxu0
        %v2329 = vadd.f32 0.0, %v2328
        %v2330 = vpop.f32.mrb[0].mxu0
        %v2331 = vadd.f32 0.0, %v2330
        %2332 = vmatprep.mubr.f32.mxu0 0.0
        %2333 = vmatmul.mubr.f32.gmra.mrb[0].mxu0 %v2185
        %v2334 = vpop.f32.mrb[0].mxu0
        %v2335 = vadd.f32 0.0, %v2334
        %v2336 = vpop.f32.mrb[0].mxu0
        %v2337 = vadd.f32 0.0, %v2336
        %2338 = vmatprep.mubr.f32.mxu0 0.0
        %2339 = vmatmul.mubr.f32.gmra.mrb[0].mxu0 %v2188
        %v2340 = vpop.f32.mrb[0].mxu0
        %v2341 = vadd.f32 0.0, %v2340
        %v2342 = vpop.f32.mrb[0].mxu0
        %v2343 = vadd.f32 0.0, %v2342
        %2344 = vmatprep.mubr.f32.mxu0 0.0
        %2345 = vmatmul.mubr.f32.gmra.mrb[0].mxu0 %v2191
        %v2346 = vpop.f32.mrb[0].mxu0
        %v2347 = vadd.f32 0.0, %v2346
        %v2348 = vpop.f32.mrb[0].mxu0
        %v2349 = vadd.f32 0.0, %v2348
        %2350 = vmatprep.mubr.f32.mxu0 0.0
        %2351 = vmatmul.mubr.f32.gmra.mrb[0].mxu0 %v2194
        %v2352 = vpop.f32.mrb[0].mxu0
        %v2353 = vadd.f32 0.0, %v2352
        %v2354 = vpop.f32.mrb[0].mxu0
        %v2355 = vadd.f32 0.0, %v2354
        %2356 = vdwg.mxu0
        %v2357 = vmul.f32 %v2263, %v609
        %v2358 = vmul.f32 %v2265, %v610
        %v2359 = vmul.f32 %v2269, %v609
        %v2360 = vmul.f32 %v2271, %v610
        %v2361 = vmul.f32 %v2275, %v609
        %v2362 = vmul.f32 %v2277, %v610
        %v2363 = vmul.f32 %v2281, %v609
        %v2364 = vmul.f32 %v2283, %v610
        %v2365 = vmul.f32 %v2287, %v609
        %v2366 = vmul.f32 %v2289, %v610
        %v2367 = vmul.f32 %v2293, %v609
        %v2368 = vmul.f32 %v2295, %v610
        %v2369 = vmul.f32 %v2299, %v609
        %v2370 = vmul.f32 %v2301, %v610
        %v2371 = vmul.f32 %v2305, %v609
        %v2372 = vmul.f32 %v2307, %v610
        %v2373 = vmul.f32 %v2311, %v609
        %v2374 = vmul.f32 %v2313, %v610
        %v2375 = vmul.f32 %v2317, %v609
        %v2376 = vmul.f32 %v2319, %v610
        %v2377 = vmul.f32 %v2323, %v609
        %v2378 = vmul.f32 %v2325, %v610
        %v2379 = vmul.f32 %v2329, %v609
        %v2380 = vmul.f32 %v2331, %v610
        %v2381 = vmul.f32 %v2335, %v609
        %v2382 = vmul.f32 %v2337, %v610
        %v2383 = vmul.f32 %v2341, %v609
        %v2384 = vmul.f32 %v2343, %v610
        %v2385 = vmul.f32 %v2347, %v609
        %v2386 = vmul.f32 %v2349, %v610
        %v2387 = vmul.f32 %v2353, %v609
        %v2388 = vmul.f32 %v2355, %v610
        %v2389 = vrot.slane %v2357, 4
        %v2390 = vadd.f32 %v2357, %v2389
        %v2391 = vrot.slane %v2390, 2
        %v2392 = vadd.f32 %v2390, %v2391
        %v2393 = vrot.slane %v2392, 1
        %v2394 = vadd.f32 %v2392, %v2393
        %v2395 = vrot.slane %v2358, 4
        %v2396 = vadd.f32 %v2358, %v2395
        %v2397 = vrot.slane %v2396, 2
        %v2398 = vadd.f32 %v2396, %v2397
        %v2399 = vrot.slane %v2398, 1
        %v2400 = vadd.f32 %v2398, %v2399
        %v2401 = vrot.slane %v2359, 4
        %v2402 = vadd.f32 %v2359, %v2401
        %v2403 = vrot.slane %v2402, 2
        %v2404 = vadd.f32 %v2402, %v2403
        %v2405 = vrot.slane %v2404, 1
        %v2406 = vadd.f32 %v2404, %v2405
        %v2407 = vrot.slane %v2360, 4
        %v2408 = vadd.f32 %v2360, %v2407
        %v2409 = vrot.slane %v2408, 2
        %v2410 = vadd.f32 %v2408, %v2409
        %v2411 = vrot.slane %v2410, 1
        %v2412 = vadd.f32 %v2410, %v2411
        %v2413 = vrot.slane %v2361, 4
        %v2414 = vadd.f32 %v2361, %v2413
        %v2415 = vrot.slane %v2414, 2
        %v2416 = vadd.f32 %v2414, %v2415
        %v2417 = vrot.slane %v2416, 1
        %v2418 = vadd.f32 %v2416, %v2417
        %v2419 = vrot.slane %v2362, 4
        %v2420 = vadd.f32 %v2362, %v2419
        %v2421 = vrot.slane %v2420, 2
        %v2422 = vadd.f32 %v2420, %v2421
        %v2423 = vrot.slane %v2422, 1
        %v2424 = vadd.f32 %v2422, %v2423
        %v2425 = vrot.slane %v2363, 4
        %v2426 = vadd.f32 %v2363, %v2425
        %v2427 = vrot.slane %v2426, 2
        %v2428 = vadd.f32 %v2426, %v2427
        %v2429 = vrot.slane %v2428, 1
        %v2430 = vadd.f32 %v2428, %v2429
        %v2431 = vrot.slane %v2364, 4
        %v2432 = vadd.f32 %v2364, %v2431
        %v2433 = vrot.slane %v2432, 2
        %v2434 = vadd.f32 %v2432, %v2433
        %v2435 = vrot.slane %v2434, 1
        %v2436 = vadd.f32 %v2434, %v2435
        %v2437 = vrot.slane %v2365, 4
        %v2438 = vadd.f32 %v2365, %v2437
        %v2439 = vrot.slane %v2438, 2
        %v2440 = vadd.f32 %v2438, %v2439
        %v2441 = vrot.slane %v2440, 1
        %v2442 = vadd.f32 %v2440, %v2441
        %v2443 = vrot.slane %v2366, 4
        %v2444 = vadd.f32 %v2366, %v2443
        %v2445 = vrot.slane %v2444, 2
        %v2446 = vadd.f32 %v2444, %v2445
        %v2447 = vrot.slane %v2446, 1
        %v2448 = vadd.f32 %v2446, %v2447
        %v2449 = vrot.slane %v2367, 4
        %v2450 = vadd.f32 %v2367, %v2449
        %v2451 = vrot.slane %v2450, 2
        %v2452 = vadd.f32 %v2450, %v2451
        %v2453 = vrot.slane %v2452, 1
        %v2454 = vadd.f32 %v2452, %v2453
        %v2455 = vrot.slane %v2368, 4
        %v2456 = vadd.f32 %v2368, %v2455
        %v2457 = vrot.slane %v2456, 2
        %v2458 = vadd.f32 %v2456, %v2457
        %v2459 = vrot.slane %v2458, 1
        %v2460 = vadd.f32 %v2458, %v2459
        %v2461 = vrot.slane %v2369, 4
        %v2462 = vadd.f32 %v2369, %v2461
        %v2463 = vrot.slane %v2462, 2
        %v2464 = vadd.f32 %v2462, %v2463
        %v2465 = vrot.slane %v2464, 1
        %v2466 = vadd.f32 %v2464, %v2465
        %v2467 = vrot.slane %v2370, 4
        %v2468 = vadd.f32 %v2370, %v2467
        %v2469 = vrot.slane %v2468, 2
        %v2470 = vadd.f32 %v2468, %v2469
        %v2471 = vrot.slane %v2470, 1
        %v2472 = vadd.f32 %v2470, %v2471
        %v2473 = vrot.slane %v2371, 4
        %v2474 = vadd.f32 %v2371, %v2473
        %v2475 = vrot.slane %v2474, 2
        %v2476 = vadd.f32 %v2474, %v2475
        %v2477 = vrot.slane %v2476, 1
        %v2478 = vadd.f32 %v2476, %v2477
        %v2479 = vrot.slane %v2372, 4
        %v2480 = vadd.f32 %v2372, %v2479
        %v2481 = vrot.slane %v2480, 2
        %v2482 = vadd.f32 %v2480, %v2481
        %v2483 = vrot.slane %v2482, 1
        %v2484 = vadd.f32 %v2482, %v2483
        %v2485 = vrot.slane %v2373, 4
        %v2486 = vadd.f32 %v2373, %v2485
        %v2487 = vrot.slane %v2486, 2
        %v2488 = vadd.f32 %v2486, %v2487
        %v2489 = vrot.slane %v2488, 1
        %v2490 = vadd.f32 %v2488, %v2489
        %v2491 = vrot.slane %v2374, 4
        %v2492 = vadd.f32 %v2374, %v2491
        %v2493 = vrot.slane %v2492, 2
        %v2494 = vadd.f32 %v2492, %v2493
        %v2495 = vrot.slane %v2494, 1
        %v2496 = vadd.f32 %v2494, %v2495
        %v2497 = vrot.slane %v2375, 4
        %v2498 = vadd.f32 %v2375, %v2497
        %v2499 = vrot.slane %v2498, 2
        %v2500 = vadd.f32 %v2498, %v2499
        %v2501 = vrot.slane %v2500, 1
        %v2502 = vadd.f32 %v2500, %v2501
        %v2503 = vrot.slane %v2376, 4
        %v2504 = vadd.f32 %v2376, %v2503
        %v2505 = vrot.slane %v2504, 2
        %v2506 = vadd.f32 %v2504, %v2505
        %v2507 = vrot.slane %v2506, 1
        %v2508 = vadd.f32 %v2506, %v2507
        %v2509 = vrot.slane %v2377, 4
        %v2510 = vadd.f32 %v2377, %v2509
        %v2511 = vrot.slane %v2510, 2
        %v2512 = vadd.f32 %v2510, %v2511
        %v2513 = vrot.slane %v2512, 1
        %v2514 = vadd.f32 %v2512, %v2513
        %v2515 = vrot.slane %v2378, 4
        %v2516 = vadd.f32 %v2378, %v2515
        %v2517 = vrot.slane %v2516, 2
        %v2518 = vadd.f32 %v2516, %v2517
        %v2519 = vrot.slane %v2518, 1
        %v2520 = vadd.f32 %v2518, %v2519
        %v2521 = vrot.slane %v2379, 4
        %v2522 = vadd.f32 %v2379, %v2521
        %v2523 = vrot.slane %v2522, 2
        %v2524 = vadd.f32 %v2522, %v2523
        %v2525 = vrot.slane %v2524, 1
        %v2526 = vadd.f32 %v2524, %v2525
        %v2527 = vrot.slane %v2380, 4
        %v2528 = vadd.f32 %v2380, %v2527
        %v2529 = vrot.slane %v2528, 2
        %v2530 = vadd.f32 %v2528, %v2529
        %v2531 = vrot.slane %v2530, 1
        %v2532 = vadd.f32 %v2530, %v2531
        %v2533 = vrot.slane %v2381, 4
        %v2534 = vadd.f32 %v2381, %v2533
        %v2535 = vrot.slane %v2534, 2
        %v2536 = vadd.f32 %v2534, %v2535
        %v2537 = vrot.slane %v2536, 1
        %v2538 = vadd.f32 %v2536, %v2537
        %v2539 = vrot.slane %v2382, 4
        %v2540 = vadd.f32 %v2382, %v2539
        %v2541 = vrot.slane %v2540, 2
        %v2542 = vadd.f32 %v2540, %v2541
        %v2543 = vrot.slane %v2542, 1
        %v2544 = vadd.f32 %v2542, %v2543
        %v2545 = vrot.slane %v2383, 4
        %v2546 = vadd.f32 %v2383, %v2545
        %v2547 = vrot.slane %v2546, 2
        %v2548 = vadd.f32 %v2546, %v2547
        %v2549 = vrot.slane %v2548, 1
        %v2550 = vadd.f32 %v2548, %v2549
        %v2551 = vrot.slane %v2384, 4
        %v2552 = vadd.f32 %v2384, %v2551
        %v2553 = vrot.slane %v2552, 2
        %v2554 = vadd.f32 %v2552, %v2553
        %v2555 = vrot.slane %v2554, 1
        %v2556 = vadd.f32 %v2554, %v2555
        %v2557 = vrot.slane %v2385, 4
        %v2558 = vadd.f32 %v2385, %v2557
        %v2559 = vrot.slane %v2558, 2
        %v2560 = vadd.f32 %v2558, %v2559
        %v2561 = vrot.slane %v2560, 1
        %v2562 = vadd.f32 %v2560, %v2561
        %v2563 = vrot.slane %v2386, 4
        %v2564 = vadd.f32 %v2386, %v2563
        %v2565 = vrot.slane %v2564, 2
        %v2566 = vadd.f32 %v2564, %v2565
        %v2567 = vrot.slane %v2566, 1
        %v2568 = vadd.f32 %v2566, %v2567
        %v2569 = vrot.slane %v2387, 4
        %v2570 = vadd.f32 %v2387, %v2569
        %v2571 = vrot.slane %v2570, 2
        %v2572 = vadd.f32 %v2570, %v2571
        %v2573 = vrot.slane %v2572, 1
        %v2574 = vadd.f32 %v2572, %v2573
        %v2575 = vrot.slane %v2388, 4
        %v2576 = vadd.f32 %v2388, %v2575
        %v2577 = vrot.slane %v2576, 2
        %v2578 = vadd.f32 %v2576, %v2577
        %v2579 = vrot.slane %v2578, 1
        %v2580 = vadd.f32 %v2578, %v2579
        %v2581 = vpack.c.bf16 %v2394, %v2394
        %v2582 = vpack.c.bf16 %v2400, %v2400
        %v2583 = vpack.c.bf16 %v2406, %v2406
        %v2584 = vpack.c.bf16 %v2412, %v2412
        %v2585 = vpack.c.bf16 %v2418, %v2418
        %v2586 = vpack.c.bf16 %v2424, %v2424
        %v2587 = vpack.c.bf16 %v2430, %v2430
        %v2588 = vpack.c.bf16 %v2436, %v2436
        %v2589 = vpack.c.bf16 %v2442, %v2442
        %v2590 = vpack.c.bf16 %v2448, %v2448
        %v2591 = vpack.c.bf16 %v2454, %v2454
        %v2592 = vpack.c.bf16 %v2460, %v2460
        %v2593 = vpack.c.bf16 %v2466, %v2466
        %v2594 = vpack.c.bf16 %v2472, %v2472
        %v2595 = vpack.c.bf16 %v2478, %v2478
        %v2596 = vpack.c.bf16 %v2484, %v2484
        %v2597 = vpack.c.bf16 %v2490, %v2490
        %v2598 = vpack.c.bf16 %v2496, %v2496
        %v2599 = vpack.c.bf16 %v2502, %v2502
        %v2600 = vpack.c.bf16 %v2508, %v2508
        %v2601 = vpack.c.bf16 %v2514, %v2514
        %v2602 = vpack.c.bf16 %v2520, %v2520
        %v2603 = vpack.c.bf16 %v2526, %v2526
        %v2604 = vpack.c.bf16 %v2532, %v2532
        %v2605 = vpack.c.bf16 %v2538, %v2538
        %v2606 = vpack.c.bf16 %v2544, %v2544
        %v2607 = vpack.c.bf16 %v2550, %v2550
        %v2608 = vpack.c.bf16 %v2556, %v2556
        %v2609 = vpack.c.bf16 %v2562, %v2562
        %v2610 = vpack.c.bf16 %v2568, %v2568
        %v2611 = vpack.c.bf16 %v2574, %v2574
        %v2612 = vpack.c.bf16 %v2580, %v2580
        %v2613 = vlaneseq
        %v2614 = vshrl.u32 %v2613, 7
        %v2615 = vsub.s32 3, %v2614
        %v2616 = vrot.slane %v605, %v2615
        %v2617 = vlaneseq
        %v2618 = vshrl.u32 %v2617, 7
        %v2619 = vsub.s32 3, %v2618
        %v2620 = vrot.slane %v606, %v2619
        %v2653 = vunpack.c.l.b16 %v2581
        %v2654 = vunpack.c.l.b16 %v2582
        %v2655 = vunpack.c.l.b16 %v2583
        %v2656 = vunpack.c.l.b16 %v2584
        %v2657 = vunpack.c.l.b16 %v2585
        %v2658 = vunpack.c.l.b16 %v2586
        %v2659 = vunpack.c.l.b16 %v2587
        %v2660 = vunpack.c.l.b16 %v2588
        %v2661 = vunpack.c.l.b16 %v2589
        %v2662 = vunpack.c.l.b16 %v2590
        %v2663 = vunpack.c.l.b16 %v2591
        %v2664 = vunpack.c.l.b16 %v2592
        %v2665 = vunpack.c.l.b16 %v2593
        %v2666 = vunpack.c.l.b16 %v2594
        %v2667 = vunpack.c.l.b16 %v2595
        %v2668 = vunpack.c.l.b16 %v2596
        %v2669 = vunpack.c.l.b16 %v2597
        %v2670 = vunpack.c.l.b16 %v2598
        %v2671 = vunpack.c.l.b16 %v2599
        %v2672 = vunpack.c.l.b16 %v2600
        %v2673 = vunpack.c.l.b16 %v2601
        %v2674 = vunpack.c.l.b16 %v2602
        %v2675 = vunpack.c.l.b16 %v2603
        %v2676 = vunpack.c.l.b16 %v2604
        %v2677 = vunpack.c.l.b16 %v2605
        %v2678 = vunpack.c.l.b16 %v2606
        %v2679 = vunpack.c.l.b16 %v2607
        %v2680 = vunpack.c.l.b16 %v2608
        %v2681 = vunpack.c.l.b16 %v2609
        %v2682 = vunpack.c.l.b16 %v2610
        %v2683 = vunpack.c.l.b16 %v2611
        %v2684 = vunpack.c.l.b16 %v2612
        %vm2685 = vcmask 1041409
        %v2686 = vsel %vm2685, %v2655, %v2653
        %vm2687 = vcmask 1042434
        %v2688 = vsel %vm2687, %v2657, %v2686
        %vm2689 = vcmask 1043459
        %v2690 = vsel %vm2689, %v2659, %v2688
        %vm2691 = vcmask 1044484
        %v2692 = vsel %vm2691, %v2661, %v2690
        %vm2693 = vcmask 1045509
        %v2694 = vsel %vm2693, %v2663, %v2692
        %vm2695 = vcmask 1046534
        %v2696 = vsel %vm2695, %v2665, %v2694
        %vm2697 = vcmask 1047559
        %v2698 = vsel %vm2697, %v2667, %v2696
        %v2699 = vsel %vm2685, %v2656, %v2654
        %v2700 = vsel %vm2687, %v2658, %v2699
        %v2701 = vsel %vm2689, %v2660, %v2700
        %v2702 = vsel %vm2691, %v2662, %v2701
        %v2703 = vsel %vm2693, %v2664, %v2702
        %v2704 = vsel %vm2695, %v2666, %v2703
        %v2705 = vsel %vm2697, %v2668, %v2704
        %v2706 = vsel %vm2685, %v2671, %v2669
        %v2707 = vsel %vm2687, %v2673, %v2706
        %v2708 = vsel %vm2689, %v2675, %v2707
        %v2709 = vsel %vm2691, %v2677, %v2708
        %v2710 = vsel %vm2693, %v2679, %v2709
        %v2711 = vsel %vm2695, %v2681, %v2710
        %v2712 = vsel %vm2697, %v2683, %v2711
        %v2713 = vsel %vm2685, %v2672, %v2670
        %v2714 = vsel %vm2687, %v2674, %v2713
        %v2715 = vsel %vm2689, %v2676, %v2714
        %v2716 = vsel %vm2691, %v2678, %v2715
        %v2717 = vsel %vm2693, %v2680, %v2716
        %v2718 = vsel %vm2695, %v2682, %v2717
        %v2719 = vsel %vm2697, %v2684, %v2718
        %v2720 = vpack.c.b16 %v2712, %v2698
        %v2721 = vpack.c.b16 %v2719, %v2705
        %v2756 = vunpack.c.l.b16 %v723
        %v2757 = vunpack.c.h.b16 %v723
        %v2758 = vunpack.c.l.b16 %v724
        %v2759 = vunpack.c.h.b16 %v724
        %v2760 = vunpack.c.l.b16 %v725
        %v2761 = vunpack.c.h.b16 %v725
        %v2762 = vunpack.c.l.b16 %v726
        %v2763 = vunpack.c.h.b16 %v726
        %v2764 = vunpack.c.l.b16 %v727
        %v2765 = vunpack.c.h.b16 %v727
        %v2766 = vunpack.c.l.b16 %v728
        %v2767 = vunpack.c.h.b16 %v728
        %v2768 = vunpack.c.l.b16 %v729
        %v2769 = vunpack.c.h.b16 %v729
        %v2770 = vunpack.c.l.b16 %v730
        %v2771 = vunpack.c.h.b16 %v730
        %v2772 = vunpack.c.l.b16 %v731
        %v2773 = vunpack.c.h.b16 %v731
        %v2774 = vunpack.c.l.b16 %v732
        %v2775 = vunpack.c.h.b16 %v732
        %v2776 = vunpack.c.l.b16 %v733
        %v2777 = vunpack.c.h.b16 %v733
        %v2778 = vunpack.c.l.b16 %v734
        %v2779 = vunpack.c.h.b16 %v734
        %v2780 = vunpack.c.l.b16 %v735
        %v2781 = vunpack.c.h.b16 %v735
        %v2782 = vunpack.c.l.b16 %v736
        %v2783 = vunpack.c.h.b16 %v736
        %v2784 = vunpack.c.l.b16 %v737
        %v2785 = vunpack.c.h.b16 %v737
        %v2786 = vunpack.c.l.b16 %v738
        %v2787 = vunpack.c.h.b16 %v738
        %v2788 = vunpack.c.l.b16 %v739
        %v2789 = vunpack.c.h.b16 %v739
        %v2790 = vunpack.c.l.b16 %v740
        %v2791 = vunpack.c.h.b16 %v740
        %v2792 = vunpack.c.l.b16 %v741
        %v2793 = vunpack.c.h.b16 %v741
        %v2794 = vunpack.c.l.b16 %v742
        %v2795 = vunpack.c.h.b16 %v742
        %v2796 = vunpack.c.l.b16 %v743
        %v2797 = vunpack.c.h.b16 %v743
        %v2798 = vunpack.c.l.b16 %v744
        %v2799 = vunpack.c.h.b16 %v744
        %v2800 = vunpack.c.l.b16 %v745
        %v2801 = vunpack.c.h.b16 %v745
        %v2802 = vunpack.c.l.b16 %v746
        %v2803 = vunpack.c.h.b16 %v746
        %v2804 = vunpack.c.l.b16 %v747
        %v2805 = vunpack.c.h.b16 %v747
        %v2806 = vunpack.c.l.b16 %v748
        %v2807 = vunpack.c.h.b16 %v748
        %v2808 = vunpack.c.l.b16 %v749
        %v2809 = vunpack.c.h.b16 %v749
        %v2810 = vunpack.c.l.b16 %v750
        %v2811 = vunpack.c.h.b16 %v750
        %v2812 = vunpack.c.l.b16 %v751
        %v2813 = vunpack.c.h.b16 %v751
        %v2814 = vunpack.c.l.b16 %v752
        %v2815 = vunpack.c.h.b16 %v752
        %v2816 = vunpack.c.l.b16 %v753
        %v2817 = vunpack.c.h.b16 %v753
        %v2818 = vunpack.c.l.b16 %v754
        %v2819 = vunpack.c.h.b16 %v754
        %v2820 = vpack.c.b16 %v2758, %v2756
        %v2821 = vpack.c.b16 %v2759, %v2757
        %v2822 = vpack.c.b16 %v2762, %v2760
        %v2823 = vpack.c.b16 %v2763, %v2761
        %v2824 = vpack.c.b16 %v2766, %v2764
        %v2825 = vpack.c.b16 %v2767, %v2765
        %v2826 = vpack.c.b16 %v2770, %v2768
        %v2827 = vpack.c.b16 %v2771, %v2769
        %v2828 = vpack.c.b16 %v2774, %v2772
        %v2829 = vpack.c.b16 %v2775, %v2773
        %v2830 = vpack.c.b16 %v2778, %v2776
        %v2831 = vpack.c.b16 %v2779, %v2777
        %v2832 = vpack.c.b16 %v2782, %v2780
        %v2833 = vpack.c.b16 %v2783, %v2781
        %v2834 = vpack.c.b16 %v2786, %v2784
        %v2835 = vpack.c.b16 %v2787, %v2785
        %v2836 = vpack.c.b16 %v2790, %v2788
        %v2837 = vpack.c.b16 %v2791, %v2789
        %v2838 = vpack.c.b16 %v2794, %v2792
        %v2839 = vpack.c.b16 %v2795, %v2793
        %v2840 = vpack.c.b16 %v2798, %v2796
        %v2841 = vpack.c.b16 %v2799, %v2797
        %v2842 = vpack.c.b16 %v2802, %v2800
        %v2843 = vpack.c.b16 %v2803, %v2801
        %v2844 = vpack.c.b16 %v2806, %v2804
        %v2845 = vpack.c.b16 %v2807, %v2805
        %v2846 = vpack.c.b16 %v2810, %v2808
        %v2847 = vpack.c.b16 %v2811, %v2809
        %v2848 = vpack.c.b16 %v2814, %v2812
        %v2849 = vpack.c.b16 %v2815, %v2813
        %v2850 = vpack.c.b16 %v2818, %v2816
        %v2851 = vpack.c.b16 %v2819, %v2817
        %2884 = vmatprep.subr.bf16.mxu0 %v2821
        %2885 = vmatpush1.bf16.msra.mxu0 %v2820
        %2886 = vmatprep.subr.bf16.mxu0 %v2823
        %2887 = vmatpush1.bf16.msra.mxu0 %v2822
        %2888 = vmatprep.subr.bf16.mxu0 %v2825
        %2889 = vmatpush1.bf16.msra.mxu0 %v2824
        %2890 = vmatprep.subr.bf16.mxu0 %v2827
        %2891 = vmatpush1.bf16.msra.mxu0 %v2826
        %2892 = vmatprep.subr.bf16.mxu0 %v2829
        %2893 = vmatpush1.bf16.msra.mxu0 %v2828
        %2894 = vmatprep.subr.bf16.mxu0 %v2831
        %2895 = vmatpush1.bf16.msra.mxu0 %v2830
        %2896 = vmatprep.subr.bf16.mxu0 %v2833
        %2897 = vmatpush1.bf16.msra.mxu0 %v2832
        %2898 = vmatprep.subr.bf16.mxu0 %v2835
        %2899 = vmatpush1.bf16.msra.mxu0 %v2834
        %2900 = vmatprep.subr.bf16.mxu0 %v2837
        %2901 = vmatpush1.bf16.msra.mxu0 %v2836
        %2902 = vmatprep.subr.bf16.mxu0 %v2839
        %2903 = vmatpush1.bf16.msra.mxu0 %v2838
        %2904 = vmatprep.subr.bf16.mxu0 %v2841
        %2905 = vmatpush1.bf16.msra.mxu0 %v2840
        %2906 = vmatprep.subr.bf16.mxu0 %v2843
        %2907 = vmatpush1.bf16.msra.mxu0 %v2842
        %2908 = vmatprep.subr.bf16.mxu0 %v2845
        %2909 = vmatpush1.bf16.msra.mxu0 %v2844
        %2910 = vmatprep.subr.bf16.mxu0 %v2847
        %2911 = vmatpush1.bf16.msra.mxu0 %v2846
        %2912 = vmatprep.subr.bf16.mxu0 %v2849
        %2913 = vmatpush1.bf16.msra.mxu0 %v2848
        %2914 = vmatprep.subr.bf16.mxu0 %v2851
        %2915 = vmatpush1.bf16.msra.mxu0 %v2850
        %2916 = vmatprep.mubr.bf16.mxu0 %v2721
        %2917 = vmatmul.mubr.bf16.gmra.mrb[0].mxu0 %v2720
        %v2918 = vpop.f32.mrb[0].mxu0
        %v2919 = vadd.f32 %v2616, %v2918
        %v2920 = vpop.f32.mrb[0].mxu0
        %v2921 = vadd.f32 %v2620, %v2920
        %v2922 = vpop.f32.mrb[0].mxu0
        %v2923 = vadd.f32 %v2616, %v2922
        %v2924 = vpop.f32.mrb[0].mxu0
        %v2925 = vadd.f32 %v2620, %v2924
        %2926 = vdwg.mxu0
        %v2927 = vadd.f32 %v601, %v2919
        %v2928 = vadd.f32 %v602, %v2921
        %v2929 = vadd.f32 %v603, %v2923
        %v2930 = vadd.f32 %v604, %v2925
        %v2931 = vadd.f32 %v2927, %v2928
        %2932 = vadd.xlane.f32.xlu0 %v2931
        %v2933 = vpop.xlane.xlu0 %2932
        %v2934 = vadd.f32 %v2929, %v2930
        %2935 = vadd.xlane.f32.xlu0 %v2934
        %v2936 = vpop.xlane.xlu0 %2935
        %v2937 = vrcp.pop 256.0
        %v2938 = vmul.f32 %v2933, %v2937
        %v2939 = vmul.f32 %v2936, %v2937
        %v2940 = vsub.f32 %v2927, %v2938
        %v2941 = vsub.f32 %v2928, %v2938
        %v2942 = vsub.f32 %v2929, %v2939
        %v2943 = vsub.f32 %v2930, %v2939
        %v2944 = vmul.f32 %v2940, %v2940
        %v2945 = vmul.f32 %v2941, %v2941
        %v2946 = vmul.f32 %v2942, %v2942
        %v2947 = vmul.f32 %v2943, %v2943
        %v2948 = vadd.f32 %v2944, %v2945
        %2949 = vadd.xlane.f32.xlu0 %v2948
        %v2950 = vpop.xlane.xlu0 %2949
        %v2951 = vadd.f32 %v2946, %v2947
        %2952 = vadd.xlane.f32.xlu0 %v2951
        %v2953 = vpop.xlane.xlu0 %2952
        %v2954 = vmul.f32 %v2950, %v2937
        %v2955 = vmul.f32 %v2953, %v2937
        %v2956 = vadd.f32 %v2954, 1e-05
        %v2957 = vadd.f32 %v2955, 1e-05
        %v2958 = vrsqrt.pop %v2956
        %v2959 = vrsqrt.pop %v2957
        %v2960 = vmul.f32 %v2940, %v2958
        %v2961 = vmul.f32 %v2941, %v2958
        %v2962 = vmul.f32 %v2942, %v2959
        %v2963 = vmul.f32 %v2943, %v2959
        %v2964 = vlaneseq
        %v2965 = vshrl.u32 %v2964, 7
        %v2966 = vsub.s32 4, %v2965
        %v2967 = vrot.slane %v605, %v2966
        %v2968 = vlaneseq
        %v2969 = vshrl.u32 %v2968, 7
        %v2970 = vsub.s32 4, %v2969
        %v2971 = vrot.slane %v606, %v2970
        %v2972 = vmul.f32 %v2960, %v2967
        %v2973 = vmul.f32 %v2961, %v2971
        %v2974 = vmul.f32 %v2962, %v2967
        %v2975 = vmul.f32 %v2963, %v2971
        %v2976 = vlaneseq
        %v2977 = vshrl.u32 %v2976, 7
        %v2978 = vsub.s32 5, %v2977
        %v2979 = vrot.slane %v605, %v2978
        %v2980 = vlaneseq
        %v2981 = vshrl.u32 %v2980, 7
        %v2982 = vsub.s32 5, %v2981
        %v2983 = vrot.slane %v606, %v2982
        %v2984 = vadd.f32 %v2972, %v2979
        %v2985 = vadd.f32 %v2973, %v2983
        %v2986 = vadd.f32 %v2974, %v2979
        %v2987 = vadd.f32 %v2975, %v2983
        %v2988 = vpack.c.bf16 %v2986, %v2984
        %v2989 = vpack.c.bf16 %v2987, %v2985
        %v2990 = vld [vmem:[%s521] sm:$0xff]
        %v2992 = vlaneseq
        %v2993 = vshrl.u32 %v2992, 7
        %v2994 = vsub.s32 0, %v2993
        %v2995 = vrot.slane %v2990, %v2994
        %v2996 = vlaneseq
        %v2997 = vshrl.u32 %v2996, 7
        %v2998 = vsub.s32 1, %v2997
        %v2999 = vrot.slane %v2990, %v2998
        %v3000 = vlaneseq
        %v3001 = vshrl.u32 %v3000, 7
        %v3002 = vsub.s32 2, %v3001
        %v3003 = vrot.slane %v2990, %v3002
        %v3004 = vlaneseq
        %v3005 = vshrl.u32 %v3004, 7
        %v3006 = vsub.s32 3, %v3005
        %v3007 = vrot.slane %v2990, %v3006
        %v3008 = vlaneseq
        %v3009 = vshrl.u32 %v3008, 7
        %v3010 = vsub.s32 4, %v3009
        %v3011 = vrot.slane %v2990, %v3010
        %v3012 = vlaneseq
        %v3013 = vshrl.u32 %v3012, 7
        %v3014 = vsub.s32 5, %v3013
        %v3015 = vrot.slane %v2990, %v3014
        %v3016 = vlaneseq
        %v3017 = vshrl.u32 %v3016, 7
        %v3018 = vsub.s32 6, %v3017
        %v3019 = vrot.slane %v2990, %v3018
        %v3020 = vlaneseq
        %v3021 = vshrl.u32 %v3020, 7
        %v3022 = vsub.s32 7, %v3021
        %v3023 = vrot.slane %v2990, %v3022
        %v3160 = vunpack.c.l.b16 %v755
        %v3161 = vunpack.c.h.b16 %v755
        %v3162 = vunpack.c.l.b16 %v756
        %v3163 = vunpack.c.h.b16 %v756
        %v3164 = vunpack.c.l.b16 %v757
        %v3165 = vunpack.c.h.b16 %v757
        %v3166 = vunpack.c.l.b16 %v758
        %v3167 = vunpack.c.h.b16 %v758
        %v3168 = vunpack.c.l.b16 %v759
        %v3169 = vunpack.c.h.b16 %v759
        %v3170 = vunpack.c.l.b16 %v760
        %v3171 = vunpack.c.h.b16 %v760
        %v3172 = vunpack.c.l.b16 %v761
        %v3173 = vunpack.c.h.b16 %v761
        %v3174 = vunpack.c.l.b16 %v762
        %v3175 = vunpack.c.h.b16 %v762
        %v3176 = vunpack.c.l.b16 %v763
        %v3177 = vunpack.c.h.b16 %v763
        %v3178 = vunpack.c.l.b16 %v764
        %v3179 = vunpack.c.h.b16 %v764
        %v3180 = vunpack.c.l.b16 %v765
        %v3181 = vunpack.c.h.b16 %v765
        %v3182 = vunpack.c.l.b16 %v766
        %v3183 = vunpack.c.h.b16 %v766
        %v3184 = vunpack.c.l.b16 %v767
        %v3185 = vunpack.c.h.b16 %v767
        %v3186 = vunpack.c.l.b16 %v768
        %v3187 = vunpack.c.h.b16 %v768
        %v3188 = vunpack.c.l.b16 %v769
        %v3189 = vunpack.c.h.b16 %v769
        %v3190 = vunpack.c.l.b16 %v770
        %v3191 = vunpack.c.h.b16 %v770
        %v3192 = vunpack.c.l.b16 %v771
        %v3193 = vunpack.c.h.b16 %v771
        %v3194 = vunpack.c.l.b16 %v772
        %v3195 = vunpack.c.h.b16 %v772
        %v3196 = vunpack.c.l.b16 %v773
        %v3197 = vunpack.c.h.b16 %v773
        %v3198 = vunpack.c.l.b16 %v774
        %v3199 = vunpack.c.h.b16 %v774
        %v3200 = vunpack.c.l.b16 %v775
        %v3201 = vunpack.c.h.b16 %v775
        %v3202 = vunpack.c.l.b16 %v776
        %v3203 = vunpack.c.h.b16 %v776
        %v3204 = vunpack.c.l.b16 %v777
        %v3205 = vunpack.c.h.b16 %v777
        %v3206 = vunpack.c.l.b16 %v778
        %v3207 = vunpack.c.h.b16 %v778
        %v3208 = vunpack.c.l.b16 %v779
        %v3209 = vunpack.c.h.b16 %v779
        %v3210 = vunpack.c.l.b16 %v780
        %v3211 = vunpack.c.h.b16 %v780
        %v3212 = vunpack.c.l.b16 %v781
        %v3213 = vunpack.c.h.b16 %v781
        %v3214 = vunpack.c.l.b16 %v782
        %v3215 = vunpack.c.h.b16 %v782
        %v3216 = vunpack.c.l.b16 %v783
        %v3217 = vunpack.c.h.b16 %v783
        %v3218 = vunpack.c.l.b16 %v784
        %v3219 = vunpack.c.h.b16 %v784
        %v3220 = vunpack.c.l.b16 %v785
        %v3221 = vunpack.c.h.b16 %v785
        %v3222 = vunpack.c.l.b16 %v786
        %v3223 = vunpack.c.h.b16 %v786
        %v3224 = vunpack.c.l.b16 %v787
        %v3225 = vunpack.c.h.b16 %v787
        %v3226 = vunpack.c.l.b16 %v788
        %v3227 = vunpack.c.h.b16 %v788
        %v3228 = vunpack.c.l.b16 %v789
        %v3229 = vunpack.c.h.b16 %v789
        %v3230 = vunpack.c.l.b16 %v790
        %v3231 = vunpack.c.h.b16 %v790
        %v3232 = vunpack.c.l.b16 %v791
        %v3233 = vunpack.c.h.b16 %v791
        %v3234 = vunpack.c.l.b16 %v792
        %v3235 = vunpack.c.h.b16 %v792
        %v3236 = vunpack.c.l.b16 %v793
        %v3237 = vunpack.c.h.b16 %v793
        %v3238 = vunpack.c.l.b16 %v794
        %v3239 = vunpack.c.h.b16 %v794
        %v3240 = vunpack.c.l.b16 %v795
        %v3241 = vunpack.c.h.b16 %v795
        %v3242 = vunpack.c.l.b16 %v796
        %v3243 = vunpack.c.h.b16 %v796
        %v3244 = vunpack.c.l.b16 %v797
        %v3245 = vunpack.c.h.b16 %v797
        %v3246 = vunpack.c.l.b16 %v798
        %v3247 = vunpack.c.h.b16 %v798
        %v3248 = vunpack.c.l.b16 %v799
        %v3249 = vunpack.c.h.b16 %v799
        %v3250 = vunpack.c.l.b16 %v800
        %v3251 = vunpack.c.h.b16 %v800
        %v3252 = vunpack.c.l.b16 %v801
        %v3253 = vunpack.c.h.b16 %v801
        %v3254 = vunpack.c.l.b16 %v802
        %v3255 = vunpack.c.h.b16 %v802
        %v3256 = vunpack.c.l.b16 %v803
        %v3257 = vunpack.c.h.b16 %v803
        %v3258 = vunpack.c.l.b16 %v804
        %v3259 = vunpack.c.h.b16 %v804
        %v3260 = vunpack.c.l.b16 %v805
        %v3261 = vunpack.c.h.b16 %v805
        %v3262 = vunpack.c.l.b16 %v806
        %v3263 = vunpack.c.h.b16 %v806
        %v3264 = vunpack.c.l.b16 %v807
        %v3265 = vunpack.c.h.b16 %v807
        %v3266 = vunpack.c.l.b16 %v808
        %v3267 = vunpack.c.h.b16 %v808
        %v3268 = vunpack.c.l.b16 %v809
        %v3269 = vunpack.c.h.b16 %v809
        %v3270 = vunpack.c.l.b16 %v810
        %v3271 = vunpack.c.h.b16 %v810
        %v3272 = vunpack.c.l.b16 %v811
        %v3273 = vunpack.c.h.b16 %v811
        %v3274 = vunpack.c.l.b16 %v812
        %v3275 = vunpack.c.h.b16 %v812
        %v3276 = vunpack.c.l.b16 %v813
        %v3277 = vunpack.c.h.b16 %v813
        %v3278 = vunpack.c.l.b16 %v814
        %v3279 = vunpack.c.h.b16 %v814
        %v3280 = vunpack.c.l.b16 %v815
        %v3281 = vunpack.c.h.b16 %v815
        %v3282 = vunpack.c.l.b16 %v816
        %v3283 = vunpack.c.h.b16 %v816
        %v3284 = vunpack.c.l.b16 %v817
        %v3285 = vunpack.c.h.b16 %v817
        %v3286 = vunpack.c.l.b16 %v818
        %v3287 = vunpack.c.h.b16 %v818
        %v3288 = vunpack.c.l.b16 %v819
        %v3289 = vunpack.c.h.b16 %v819
        %v3290 = vunpack.c.l.b16 %v820
        %v3291 = vunpack.c.h.b16 %v820
        %v3292 = vunpack.c.l.b16 %v821
        %v3293 = vunpack.c.h.b16 %v821
        %v3294 = vunpack.c.l.b16 %v822
        %v3295 = vunpack.c.h.b16 %v822
        %v3296 = vunpack.c.l.b16 %v823
        %v3297 = vunpack.c.h.b16 %v823
        %v3298 = vunpack.c.l.b16 %v824
        %v3299 = vunpack.c.h.b16 %v824
        %v3300 = vunpack.c.l.b16 %v825
        %v3301 = vunpack.c.h.b16 %v825
        %v3302 = vunpack.c.l.b16 %v826
        %v3303 = vunpack.c.h.b16 %v826
        %v3304 = vunpack.c.l.b16 %v827
        %v3305 = vunpack.c.h.b16 %v827
        %v3306 = vunpack.c.l.b16 %v828
        %v3307 = vunpack.c.h.b16 %v828
        %v3308 = vunpack.c.l.b16 %v829
        %v3309 = vunpack.c.h.b16 %v829
        %v3310 = vunpack.c.l.b16 %v830
        %v3311 = vunpack.c.h.b16 %v830
        %v3312 = vunpack.c.l.b16 %v831
        %v3313 = vunpack.c.h.b16 %v831
        %v3314 = vunpack.c.l.b16 %v832
        %v3315 = vunpack.c.h.b16 %v832
        %v3316 = vunpack.c.l.b16 %v833
        %v3317 = vunpack.c.h.b16 %v833
        %v3318 = vunpack.c.l.b16 %v834
        %v3319 = vunpack.c.h.b16 %v834
        %v3320 = vunpack.c.l.b16 %v835
        %v3321 = vunpack.c.h.b16 %v835
        %v3322 = vunpack.c.l.b16 %v836
        %v3323 = vunpack.c.h.b16 %v836
        %v3324 = vunpack.c.l.b16 %v837
        %v3325 = vunpack.c.h.b16 %v837
        %v3326 = vunpack.c.l.b16 %v838
        %v3327 = vunpack.c.h.b16 %v838
        %v3328 = vunpack.c.l.b16 %v839
        %v3329 = vunpack.c.h.b16 %v839
        %v3330 = vunpack.c.l.b16 %v840
        %v3331 = vunpack.c.h.b16 %v840
        %v3332 = vunpack.c.l.b16 %v841
        %v3333 = vunpack.c.h.b16 %v841
        %v3334 = vunpack.c.l.b16 %v842
        %v3335 = vunpack.c.h.b16 %v842
        %v3336 = vunpack.c.l.b16 %v843
        %v3337 = vunpack.c.h.b16 %v843
        %v3338 = vunpack.c.l.b16 %v844
        %v3339 = vunpack.c.h.b16 %v844
        %v3340 = vunpack.c.l.b16 %v845
        %v3341 = vunpack.c.h.b16 %v845
        %v3342 = vunpack.c.l.b16 %v846
        %v3343 = vunpack.c.h.b16 %v846
        %v3344 = vunpack.c.l.b16 %v847
        %v3345 = vunpack.c.h.b16 %v847
        %v3346 = vunpack.c.l.b16 %v848
        %v3347 = vunpack.c.h.b16 %v848
        %v3348 = vunpack.c.l.b16 %v849
        %v3349 = vunpack.c.h.b16 %v849
        %v3350 = vunpack.c.l.b16 %v850
        %v3351 = vunpack.c.h.b16 %v850
        %v3352 = vunpack.c.l.b16 %v851
        %v3353 = vunpack.c.h.b16 %v851
        %v3354 = vunpack.c.l.b16 %v852
        %v3355 = vunpack.c.h.b16 %v852
        %v3356 = vunpack.c.l.b16 %v853
        %v3357 = vunpack.c.h.b16 %v853
        %v3358 = vunpack.c.l.b16 %v854
        %v3359 = vunpack.c.h.b16 %v854
        %v3360 = vunpack.c.l.b16 %v855
        %v3361 = vunpack.c.h.b16 %v855
        %v3362 = vunpack.c.l.b16 %v856
        %v3363 = vunpack.c.h.b16 %v856
        %v3364 = vunpack.c.l.b16 %v857
        %v3365 = vunpack.c.h.b16 %v857
        %v3366 = vunpack.c.l.b16 %v858
        %v3367 = vunpack.c.h.b16 %v858
        %v3368 = vunpack.c.l.b16 %v859
        %v3369 = vunpack.c.h.b16 %v859
        %v3370 = vunpack.c.l.b16 %v860
        %v3371 = vunpack.c.h.b16 %v860
        %v3372 = vunpack.c.l.b16 %v861
        %v3373 = vunpack.c.h.b16 %v861
        %v3374 = vunpack.c.l.b16 %v862
        %v3375 = vunpack.c.h.b16 %v862
        %v3376 = vunpack.c.l.b16 %v863
        %v3377 = vunpack.c.h.b16 %v863
        %v3378 = vunpack.c.l.b16 %v864
        %v3379 = vunpack.c.h.b16 %v864
        %v3380 = vunpack.c.l.b16 %v865
        %v3381 = vunpack.c.h.b16 %v865
        %v3382 = vunpack.c.l.b16 %v866
        %v3383 = vunpack.c.h.b16 %v866
        %v3384 = vunpack.c.l.b16 %v867
        %v3385 = vunpack.c.h.b16 %v867
        %v3386 = vunpack.c.l.b16 %v868
        %v3387 = vunpack.c.h.b16 %v868
        %v3388 = vunpack.c.l.b16 %v869
        %v3389 = vunpack.c.h.b16 %v869
        %v3390 = vunpack.c.l.b16 %v870
        %v3391 = vunpack.c.h.b16 %v870
        %v3392 = vunpack.c.l.b16 %v871
        %v3393 = vunpack.c.h.b16 %v871
        %v3394 = vunpack.c.l.b16 %v872
        %v3395 = vunpack.c.h.b16 %v872
        %v3396 = vunpack.c.l.b16 %v873
        %v3397 = vunpack.c.h.b16 %v873
        %v3398 = vunpack.c.l.b16 %v874
        %v3399 = vunpack.c.h.b16 %v874
        %v3400 = vunpack.c.l.b16 %v875
        %v3401 = vunpack.c.h.b16 %v875
        %v3402 = vunpack.c.l.b16 %v876
        %v3403 = vunpack.c.h.b16 %v876
        %v3404 = vunpack.c.l.b16 %v877
        %v3405 = vunpack.c.h.b16 %v877
        %v3406 = vunpack.c.l.b16 %v878
        %v3407 = vunpack.c.h.b16 %v878
        %v3408 = vunpack.c.l.b16 %v879
        %v3409 = vunpack.c.h.b16 %v879
        %v3410 = vunpack.c.l.b16 %v880
        %v3411 = vunpack.c.h.b16 %v880
        %v3412 = vunpack.c.l.b16 %v881
        %v3413 = vunpack.c.h.b16 %v881
        %v3414 = vunpack.c.l.b16 %v882
        %v3415 = vunpack.c.h.b16 %v882
        %v3416 = vpack.c.b16 %v3168, %v3160
        %v3417 = vpack.c.b16 %v3169, %v3161
        %v3418 = vpack.c.b16 %v3170, %v3162
        %v3419 = vpack.c.b16 %v3171, %v3163
        %v3420 = vpack.c.b16 %v3172, %v3164
        %v3421 = vpack.c.b16 %v3173, %v3165
        %v3422 = vpack.c.b16 %v3174, %v3166
        %v3423 = vpack.c.b16 %v3175, %v3167
        %v3424 = vpack.c.b16 %v3184, %v3176
        %v3425 = vpack.c.b16 %v3185, %v3177
        %v3426 = vpack.c.b16 %v3186, %v3178
        %v3427 = vpack.c.b16 %v3187, %v3179
        %v3428 = vpack.c.b16 %v3188, %v3180
        %v3429 = vpack.c.b16 %v3189, %v3181
        %v3430 = vpack.c.b16 %v3190, %v3182
        %v3431 = vpack.c.b16 %v3191, %v3183
        %v3432 = vpack.c.b16 %v3200, %v3192
        %v3433 = vpack.c.b16 %v3201, %v3193
        %v3434 = vpack.c.b16 %v3202, %v3194
        %v3435 = vpack.c.b16 %v3203, %v3195
        %v3436 = vpack.c.b16 %v3204, %v3196
        %v3437 = vpack.c.b16 %v3205, %v3197
        %v3438 = vpack.c.b16 %v3206, %v3198
        %v3439 = vpack.c.b16 %v3207, %v3199
        %v3440 = vpack.c.b16 %v3216, %v3208
        %v3441 = vpack.c.b16 %v3217, %v3209
        %v3442 = vpack.c.b16 %v3218, %v3210
        %v3443 = vpack.c.b16 %v3219, %v3211
        %v3444 = vpack.c.b16 %v3220, %v3212
        %v3445 = vpack.c.b16 %v3221, %v3213
        %v3446 = vpack.c.b16 %v3222, %v3214
        %v3447 = vpack.c.b16 %v3223, %v3215
        %v3448 = vpack.c.b16 %v3232, %v3224
        %v3449 = vpack.c.b16 %v3233, %v3225
        %v3450 = vpack.c.b16 %v3234, %v3226
        %v3451 = vpack.c.b16 %v3235, %v3227
        %v3452 = vpack.c.b16 %v3236, %v3228
        %v3453 = vpack.c.b16 %v3237, %v3229
        %v3454 = vpack.c.b16 %v3238, %v3230
        %v3455 = vpack.c.b16 %v3239, %v3231
        %v3456 = vpack.c.b16 %v3248, %v3240
        %v3457 = vpack.c.b16 %v3249, %v3241
        %v3458 = vpack.c.b16 %v3250, %v3242
        %v3459 = vpack.c.b16 %v3251, %v3243
        %v3460 = vpack.c.b16 %v3252, %v3244
        %v3461 = vpack.c.b16 %v3253, %v3245
        %v3462 = vpack.c.b16 %v3254, %v3246
        %v3463 = vpack.c.b16 %v3255, %v3247
        %v3464 = vpack.c.b16 %v3264, %v3256
        %v3465 = vpack.c.b16 %v3265, %v3257
        %v3466 = vpack.c.b16 %v3266, %v3258
        %v3467 = vpack.c.b16 %v3267, %v3259
        %v3468 = vpack.c.b16 %v3268, %v3260
        %v3469 = vpack.c.b16 %v3269, %v3261
        %v3470 = vpack.c.b16 %v3270, %v3262
        %v3471 = vpack.c.b16 %v3271, %v3263
        %v3472 = vpack.c.b16 %v3280, %v3272
        %v3473 = vpack.c.b16 %v3281, %v3273
        %v3474 = vpack.c.b16 %v3282, %v3274
        %v3475 = vpack.c.b16 %v3283, %v3275
        %v3476 = vpack.c.b16 %v3284, %v3276
        %v3477 = vpack.c.b16 %v3285, %v3277
        %v3478 = vpack.c.b16 %v3286, %v3278
        %v3479 = vpack.c.b16 %v3287, %v3279
        %v3480 = vpack.c.b16 %v3296, %v3288
        %v3481 = vpack.c.b16 %v3297, %v3289
        %v3482 = vpack.c.b16 %v3298, %v3290
        %v3483 = vpack.c.b16 %v3299, %v3291
        %v3484 = vpack.c.b16 %v3300, %v3292
        %v3485 = vpack.c.b16 %v3301, %v3293
        %v3486 = vpack.c.b16 %v3302, %v3294
        %v3487 = vpack.c.b16 %v3303, %v3295
        %v3488 = vpack.c.b16 %v3312, %v3304
        %v3489 = vpack.c.b16 %v3313, %v3305
        %v3490 = vpack.c.b16 %v3314, %v3306
        %v3491 = vpack.c.b16 %v3315, %v3307
        %v3492 = vpack.c.b16 %v3316, %v3308
        %v3493 = vpack.c.b16 %v3317, %v3309
        %v3494 = vpack.c.b16 %v3318, %v3310
        %v3495 = vpack.c.b16 %v3319, %v3311
        %v3496 = vpack.c.b16 %v3328, %v3320
        %v3497 = vpack.c.b16 %v3329, %v3321
        %v3498 = vpack.c.b16 %v3330, %v3322
        %v3499 = vpack.c.b16 %v3331, %v3323
        %v3500 = vpack.c.b16 %v3332, %v3324
        %v3501 = vpack.c.b16 %v3333, %v3325
        %v3502 = vpack.c.b16 %v3334, %v3326
        %v3503 = vpack.c.b16 %v3335, %v3327
        %v3504 = vpack.c.b16 %v3344, %v3336
        %v3505 = vpack.c.b16 %v3345, %v3337
        %v3506 = vpack.c.b16 %v3346, %v3338
        %v3507 = vpack.c.b16 %v3347, %v3339
        %v3508 = vpack.c.b16 %v3348, %v3340
        %v3509 = vpack.c.b16 %v3349, %v3341
        %v3510 = vpack.c.b16 %v3350, %v3342
        %v3511 = vpack.c.b16 %v3351, %v3343
        %v3512 = vpack.c.b16 %v3360, %v3352
        %v3513 = vpack.c.b16 %v3361, %v3353
        %v3514 = vpack.c.b16 %v3362, %v3354
        %v3515 = vpack.c.b16 %v3363, %v3355
        %v3516 = vpack.c.b16 %v3364, %v3356
        %v3517 = vpack.c.b16 %v3365, %v3357
        %v3518 = vpack.c.b16 %v3366, %v3358
        %v3519 = vpack.c.b16 %v3367, %v3359
        %v3520 = vpack.c.b16 %v3376, %v3368
        %v3521 = vpack.c.b16 %v3377, %v3369
        %v3522 = vpack.c.b16 %v3378, %v3370
        %v3523 = vpack.c.b16 %v3379, %v3371
        %v3524 = vpack.c.b16 %v3380, %v3372
        %v3525 = vpack.c.b16 %v3381, %v3373
        %v3526 = vpack.c.b16 %v3382, %v3374
        %v3527 = vpack.c.b16 %v3383, %v3375
        %v3528 = vpack.c.b16 %v3392, %v3384
        %v3529 = vpack.c.b16 %v3393, %v3385
        %v3530 = vpack.c.b16 %v3394, %v3386
        %v3531 = vpack.c.b16 %v3395, %v3387
        %v3532 = vpack.c.b16 %v3396, %v3388
        %v3533 = vpack.c.b16 %v3397, %v3389
        %v3534 = vpack.c.b16 %v3398, %v3390
        %v3535 = vpack.c.b16 %v3399, %v3391
        %v3536 = vpack.c.b16 %v3408, %v3400
        %v3537 = vpack.c.b16 %v3409, %v3401
        %v3538 = vpack.c.b16 %v3410, %v3402
        %v3539 = vpack.c.b16 %v3411, %v3403
        %v3540 = vpack.c.b16 %v3412, %v3404
        %v3541 = vpack.c.b16 %v3413, %v3405
        %v3542 = vpack.c.b16 %v3414, %v3406
        %v3543 = vpack.c.b16 %v3415, %v3407
        %3672 = vmatprep.subr.bf16.mxu0 %v3417
        %3673 = vmatpush1.bf16.msra.mxu0 %v3416
        %3674 = vmatprep.subr.bf16.mxu0 %v3425
        %3675 = vmatpush1.bf16.msra.mxu0 %v3424
        %3676 = vmatprep.subr.bf16.mxu0 %v3433
        %3677 = vmatpush1.bf16.msra.mxu0 %v3432
        %3678 = vmatprep.subr.bf16.mxu0 %v3441
        %3679 = vmatpush1.bf16.msra.mxu0 %v3440
        %3680 = vmatprep.subr.bf16.mxu0 %v3449
        %3681 = vmatpush1.bf16.msra.mxu0 %v3448
        %3682 = vmatprep.subr.bf16.mxu0 %v3457
        %3683 = vmatpush1.bf16.msra.mxu0 %v3456
        %3684 = vmatprep.subr.bf16.mxu0 %v3465
        %3685 = vmatpush1.bf16.msra.mxu0 %v3464
        %3686 = vmatprep.subr.bf16.mxu0 %v3473
        %3687 = vmatpush1.bf16.msra.mxu0 %v3472
        %3688 = vmatprep.subr.bf16.mxu0 %v3481
        %3689 = vmatpush1.bf16.msra.mxu0 %v3480
        %3690 = vmatprep.subr.bf16.mxu0 %v3489
        %3691 = vmatpush1.bf16.msra.mxu0 %v3488
        %3692 = vmatprep.subr.bf16.mxu0 %v3497
        %3693 = vmatpush1.bf16.msra.mxu0 %v3496
        %3694 = vmatprep.subr.bf16.mxu0 %v3505
        %3695 = vmatpush1.bf16.msra.mxu0 %v3504
        %3696 = vmatprep.subr.bf16.mxu0 %v3513
        %3697 = vmatpush1.bf16.msra.mxu0 %v3512
        %3698 = vmatprep.subr.bf16.mxu0 %v3521
        %3699 = vmatpush1.bf16.msra.mxu0 %v3520
        %3700 = vmatprep.subr.bf16.mxu0 %v3529
        %3701 = vmatpush1.bf16.msra.mxu0 %v3528
        %3702 = vmatprep.subr.bf16.mxu0 %v3537
        %3703 = vmatpush1.bf16.msra.mxu0 %v3536
        %3704 = vmatprep.mubr.bf16.mxu0 %v2989
        %3705 = vmatmul.mubr.bf16.gmra.mrb[0].mxu0 %v2988
        %v3706 = vpop.f32.mrb[0].mxu0
        %v3707 = vadd.f32 %v2995, %v3706
        %v3708 = vpop.f32.mrb[0].mxu0
        %v3709 = vadd.f32 %v2999, %v3708
        %v3710 = vpop.f32.mrb[0].mxu0
        %v3711 = vadd.f32 %v2995, %v3710
        %v3712 = vpop.f32.mrb[0].mxu0
        %v3713 = vadd.f32 %v2999, %v3712
        %3714 = vdwg.mxu0
        %3715 = vmatprep.subr.bf16.mxu0 %v3419
        %3716 = vmatpush1.bf16.msra.mxu0 %v3418
        %3717 = vmatprep.subr.bf16.mxu0 %v3427
        %3718 = vmatpush1.bf16.msra.mxu0 %v3426
        %3719 = vmatprep.subr.bf16.mxu0 %v3435
        %3720 = vmatpush1.bf16.msra.mxu0 %v3434
        %3721 = vmatprep.subr.bf16.mxu0 %v3443
        %3722 = vmatpush1.bf16.msra.mxu0 %v3442
        %3723 = vmatprep.subr.bf16.mxu0 %v3451
        %3724 = vmatpush1.bf16.msra.mxu0 %v3450
        %3725 = vmatprep.subr.bf16.mxu0 %v3459
        %3726 = vmatpush1.bf16.msra.mxu0 %v3458
        %3727 = vmatprep.subr.bf16.mxu0 %v3467
        %3728 = vmatpush1.bf16.msra.mxu0 %v3466
        %3729 = vmatprep.subr.bf16.mxu0 %v3475
        %3730 = vmatpush1.bf16.msra.mxu0 %v3474
        %3731 = vmatprep.subr.bf16.mxu0 %v3483
        %3732 = vmatpush1.bf16.msra.mxu0 %v3482
        %3733 = vmatprep.subr.bf16.mxu0 %v3491
        %3734 = vmatpush1.bf16.msra.mxu0 %v3490
        %3735 = vmatprep.subr.bf16.mxu0 %v3499
        %3736 = vmatpush1.bf16.msra.mxu0 %v3498
        %3737 = vmatprep.subr.bf16.mxu0 %v3507
        %3738 = vmatpush1.bf16.msra.mxu0 %v3506
        %3739 = vmatprep.subr.bf16.mxu0 %v3515
        %3740 = vmatpush1.bf16.msra.mxu0 %v3514
        %3741 = vmatprep.subr.bf16.mxu0 %v3523
        %3742 = vmatpush1.bf16.msra.mxu0 %v3522
        %3743 = vmatprep.subr.bf16.mxu0 %v3531
        %3744 = vmatpush1.bf16.msra.mxu0 %v3530
        %3745 = vmatprep.subr.bf16.mxu0 %v3539
        %3746 = vmatpush1.bf16.msra.mxu0 %v3538
        %3747 = vmatprep.mubr.bf16.mxu0 %v2989
        %3748 = vmatmul.mubr.bf16.gmra.mrb[0].mxu0 %v2988
        %v3749 = vpop.f32.mrb[0].mxu0
        %v3750 = vadd.f32 %v3003, %v3749
        %v3751 = vpop.f32.mrb[0].mxu0
        %v3752 = vadd.f32 %v3007, %v3751
        %v3753 = vpop.f32.mrb[0].mxu0
        %v3754 = vadd.f32 %v3003, %v3753
        %v3755 = vpop.f32.mrb[0].mxu0
        %v3756 = vadd.f32 %v3007, %v3755
        %3757 = vdwg.mxu0
        %3758 = vmatprep.subr.bf16.mxu0 %v3421
        %3759 = vmatpush1.bf16.msra.mxu0 %v3420
        %3760 = vmatprep.subr.bf16.mxu0 %v3429
        %3761 = vmatpush1.bf16.msra.mxu0 %v3428
        %3762 = vmatprep.subr.bf16.mxu0 %v3437
        %3763 = vmatpush1.bf16.msra.mxu0 %v3436
        %3764 = vmatprep.subr.bf16.mxu0 %v3445
        %3765 = vmatpush1.bf16.msra.mxu0 %v3444
        %3766 = vmatprep.subr.bf16.mxu0 %v3453
        %3767 = vmatpush1.bf16.msra.mxu0 %v3452
        %3768 = vmatprep.subr.bf16.mxu0 %v3461
        %3769 = vmatpush1.bf16.msra.mxu0 %v3460
        %3770 = vmatprep.subr.bf16.mxu0 %v3469
        %3771 = vmatpush1.bf16.msra.mxu0 %v3468
        %3772 = vmatprep.subr.bf16.mxu0 %v3477
        %3773 = vmatpush1.bf16.msra.mxu0 %v3476
        %3774 = vmatprep.subr.bf16.mxu0 %v3485
        %3775 = vmatpush1.bf16.msra.mxu0 %v3484
        %3776 = vmatprep.subr.bf16.mxu0 %v3493
        %3777 = vmatpush1.bf16.msra.mxu0 %v3492
        %3778 = vmatprep.subr.bf16.mxu0 %v3501
        %3779 = vmatpush1.bf16.msra.mxu0 %v3500
        %3780 = vmatprep.subr.bf16.mxu0 %v3509
        %3781 = vmatpush1.bf16.msra.mxu0 %v3508
        %3782 = vmatprep.subr.bf16.mxu0 %v3517
        %3783 = vmatpush1.bf16.msra.mxu0 %v3516
        %3784 = vmatprep.subr.bf16.mxu0 %v3525
        %3785 = vmatpush1.bf16.msra.mxu0 %v3524
        %3786 = vmatprep.subr.bf16.mxu0 %v3533
        %3787 = vmatpush1.bf16.msra.mxu0 %v3532
        %3788 = vmatprep.subr.bf16.mxu0 %v3541
        %3789 = vmatpush1.bf16.msra.mxu0 %v3540
        %3790 = vmatprep.mubr.bf16.mxu0 %v2989
        %3791 = vmatmul.mubr.bf16.gmra.mrb[0].mxu0 %v2988
        %v3792 = vpop.f32.mrb[0].mxu0
        %v3793 = vadd.f32 %v3011, %v3792
        %v3794 = vpop.f32.mrb[0].mxu0
        %v3795 = vadd.f32 %v3015, %v3794
        %v3796 = vpop.f32.mrb[0].mxu0
        %v3797 = vadd.f32 %v3011, %v3796
        %v3798 = vpop.f32.mrb[0].mxu0
        %v3799 = vadd.f32 %v3015, %v3798
        %3800 = vdwg.mxu0
        %3801 = vmatprep.subr.bf16.mxu0 %v3423
        %3802 = vmatpush1.bf16.msra.mxu0 %v3422
        %3803 = vmatprep.subr.bf16.mxu0 %v3431
        %3804 = vmatpush1.bf16.msra.mxu0 %v3430
        %3805 = vmatprep.subr.bf16.mxu0 %v3439
        %3806 = vmatpush1.bf16.msra.mxu0 %v3438
        %3807 = vmatprep.subr.bf16.mxu0 %v3447
        %3808 = vmatpush1.bf16.msra.mxu0 %v3446
        %3809 = vmatprep.subr.bf16.mxu0 %v3455
        %3810 = vmatpush1.bf16.msra.mxu0 %v3454
        %3811 = vmatprep.subr.bf16.mxu0 %v3463
        %3812 = vmatpush1.bf16.msra.mxu0 %v3462
        %3813 = vmatprep.subr.bf16.mxu0 %v3471
        %3814 = vmatpush1.bf16.msra.mxu0 %v3470
        %3815 = vmatprep.subr.bf16.mxu0 %v3479
        %3816 = vmatpush1.bf16.msra.mxu0 %v3478
        %3817 = vmatprep.subr.bf16.mxu0 %v3487
        %3818 = vmatpush1.bf16.msra.mxu0 %v3486
        %3819 = vmatprep.subr.bf16.mxu0 %v3495
        %3820 = vmatpush1.bf16.msra.mxu0 %v3494
        %3821 = vmatprep.subr.bf16.mxu0 %v3503
        %3822 = vmatpush1.bf16.msra.mxu0 %v3502
        %3823 = vmatprep.subr.bf16.mxu0 %v3511
        %3824 = vmatpush1.bf16.msra.mxu0 %v3510
        %3825 = vmatprep.subr.bf16.mxu0 %v3519
        %3826 = vmatpush1.bf16.msra.mxu0 %v3518
        %3827 = vmatprep.subr.bf16.mxu0 %v3527
        %3828 = vmatpush1.bf16.msra.mxu0 %v3526
        %3829 = vmatprep.subr.bf16.mxu0 %v3535
        %3830 = vmatpush1.bf16.msra.mxu0 %v3534
        %3831 = vmatprep.subr.bf16.mxu0 %v3543
        %3832 = vmatpush1.bf16.msra.mxu0 %v3542
        %3833 = vmatprep.mubr.bf16.mxu0 %v2989
        %3834 = vmatmul.mubr.bf16.gmra.mrb[0].mxu0 %v2988
        %v3835 = vpop.f32.mrb[0].mxu0
        %v3836 = vadd.f32 %v3019, %v3835
        %v3837 = vpop.f32.mrb[0].mxu0
        %v3838 = vadd.f32 %v3023, %v3837
        %v3839 = vpop.f32.mrb[0].mxu0
        %v3840 = vadd.f32 %v3019, %v3839
        %v3841 = vpop.f32.mrb[0].mxu0
        %v3842 = vadd.f32 %v3023, %v3841
        %3843 = vdwg.mxu0
        %v3844 = vmax.f32 %v3707, 0.0
        %v3845 = vmax.f32 %v3709, 0.0
        %v3846 = vmax.f32 %v3750, 0.0
        %v3847 = vmax.f32 %v3752, 0.0
        %v3848 = vmax.f32 %v3793, 0.0
        %v3849 = vmax.f32 %v3795, 0.0
        %v3850 = vmax.f32 %v3836, 0.0
        %v3851 = vmax.f32 %v3838, 0.0
        %v3852 = vmax.f32 %v3711, 0.0
        %v3853 = vmax.f32 %v3713, 0.0
        %v3854 = vmax.f32 %v3754, 0.0
        %v3855 = vmax.f32 %v3756, 0.0
        %v3856 = vmax.f32 %v3797, 0.0
        %v3857 = vmax.f32 %v3799, 0.0
        %v3858 = vmax.f32 %v3840, 0.0
        %v3859 = vmax.f32 %v3842, 0.0
        %v3860 = vpack.c.bf16 %v3852, %v3844
        %v3861 = vpack.c.bf16 %v3853, %v3845
        %v3862 = vpack.c.bf16 %v3854, %v3846
        %v3863 = vpack.c.bf16 %v3855, %v3847
        %v3864 = vpack.c.bf16 %v3856, %v3848
        %v3865 = vpack.c.bf16 %v3857, %v3849
        %v3866 = vpack.c.bf16 %v3858, %v3850
        %v3867 = vpack.c.bf16 %v3859, %v3851
        %v3868 = vld [vmem:[%s503] sm:$0xff]
        %v3869 = vld [vmem:[%s503 + $0x8] sm:$0xff]
        %v3870 = vld [vmem:[%s503 + $0x10] sm:$0xff]
        %v3871 = vld [vmem:[%s503 + $0x18] sm:$0xff]
        %v3872 = vld [vmem:[%s503 + $0x20] sm:$0xff]
        %v3873 = vld [vmem:[%s503 + $0x28] sm:$0xff]
        %v3874 = vld [vmem:[%s503 + $0x30] sm:$0xff]
        %v3875 = vld [vmem:[%s503 + $0x38] sm:$0xff]
        %v3876 = vld [vmem:[%s503 + $0x40] sm:$0xff]
        %v3877 = vld [vmem:[%s503 + $0x48] sm:$0xff]
        %v3878 = vld [vmem:[%s503 + $0x50] sm:$0xff]
        %v3879 = vld [vmem:[%s503 + $0x58] sm:$0xff]
        %v3880 = vld [vmem:[%s503 + $0x60] sm:$0xff]
        %v3881 = vld [vmem:[%s503 + $0x68] sm:$0xff]
        %v3882 = vld [vmem:[%s503 + $0x70] sm:$0xff]
        %v3883 = vld [vmem:[%s503 + $0x78] sm:$0xff]
        %v3884 = vld [vmem:[%s503 + $0x80] sm:$0xff]
        %v3885 = vld [vmem:[%s503 + $0x88] sm:$0xff]
        %v3886 = vld [vmem:[%s503 + $0x90] sm:$0xff]
        %v3887 = vld [vmem:[%s503 + $0x98] sm:$0xff]
        %v3888 = vld [vmem:[%s503 + $0xa0] sm:$0xff]
        %v3889 = vld [vmem:[%s503 + $0xa8] sm:$0xff]
        %v3890 = vld [vmem:[%s503 + $0xb0] sm:$0xff]
        %v3891 = vld [vmem:[%s503 + $0xb8] sm:$0xff]
        %v3892 = vld [vmem:[%s503 + $0xc0] sm:$0xff]
        %v3893 = vld [vmem:[%s503 + $0xc8] sm:$0xff]
        %v3894 = vld [vmem:[%s503 + $0xd0] sm:$0xff]
        %v3895 = vld [vmem:[%s503 + $0xd8] sm:$0xff]
        %v3896 = vld [vmem:[%s503 + $0xe0] sm:$0xff]
        %v3897 = vld [vmem:[%s503 + $0xe8] sm:$0xff]
        %v3898 = vld [vmem:[%s503 + $0xf0] sm:$0xff]
        %v3899 = vld [vmem:[%s503 + $0xf8] sm:$0xff]
        %v3900 = vld [vmem:[%s503 + $0x100] sm:$0xff]
        %v3901 = vld [vmem:[%s503 + $0x108] sm:$0xff]
        %v3902 = vld [vmem:[%s503 + $0x110] sm:$0xff]
        %v3903 = vld [vmem:[%s503 + $0x118] sm:$0xff]
        %v3904 = vld [vmem:[%s503 + $0x120] sm:$0xff]
        %v3905 = vld [vmem:[%s503 + $0x128] sm:$0xff]
        %v3906 = vld [vmem:[%s503 + $0x130] sm:$0xff]
        %v3907 = vld [vmem:[%s503 + $0x138] sm:$0xff]
        %v3908 = vld [vmem:[%s503 + $0x140] sm:$0xff]
        %v3909 = vld [vmem:[%s503 + $0x148] sm:$0xff]
        %v3910 = vld [vmem:[%s503 + $0x150] sm:$0xff]
        %v3911 = vld [vmem:[%s503 + $0x158] sm:$0xff]
        %v3912 = vld [vmem:[%s503 + $0x160] sm:$0xff]
        %v3913 = vld [vmem:[%s503 + $0x168] sm:$0xff]
        %v3914 = vld [vmem:[%s503 + $0x170] sm:$0xff]
        %v3915 = vld [vmem:[%s503 + $0x178] sm:$0xff]
        %v3916 = vld [vmem:[%s503 + $0x180] sm:$0xff]
        %v3917 = vld [vmem:[%s503 + $0x188] sm:$0xff]
        %v3918 = vld [vmem:[%s503 + $0x190] sm:$0xff]
        %v3919 = vld [vmem:[%s503 + $0x198] sm:$0xff]
        %v3920 = vld [vmem:[%s503 + $0x1a0] sm:$0xff]
        %v3921 = vld [vmem:[%s503 + $0x1a8] sm:$0xff]
        %v3922 = vld [vmem:[%s503 + $0x1b0] sm:$0xff]
        %v3923 = vld [vmem:[%s503 + $0x1b8] sm:$0xff]
        %v3924 = vld [vmem:[%s503 + $0x1c0] sm:$0xff]
        %v3925 = vld [vmem:[%s503 + $0x1c8] sm:$0xff]
        %v3926 = vld [vmem:[%s503 + $0x1d0] sm:$0xff]
        %v3927 = vld [vmem:[%s503 + $0x1d8] sm:$0xff]
        %v3928 = vld [vmem:[%s503 + $0x1e0] sm:$0xff]
        %v3929 = vld [vmem:[%s503 + $0x1e8] sm:$0xff]
        %v3930 = vld [vmem:[%s503 + $0x1f0] sm:$0xff]
        %v3931 = vld [vmem:[%s503 + $0x1f8] sm:$0xff]
        %v3932 = vld [vmem:[%s503 + $0x200] sm:$0xff]
        %v3933 = vld [vmem:[%s503 + $0x208] sm:$0xff]
        %v3934 = vld [vmem:[%s503 + $0x210] sm:$0xff]
        %v3935 = vld [vmem:[%s503 + $0x218] sm:$0xff]
        %v3936 = vld [vmem:[%s503 + $0x220] sm:$0xff]
        %v3937 = vld [vmem:[%s503 + $0x228] sm:$0xff]
        %v3938 = vld [vmem:[%s503 + $0x230] sm:$0xff]
        %v3939 = vld [vmem:[%s503 + $0x238] sm:$0xff]
        %v3940 = vld [vmem:[%s503 + $0x240] sm:$0xff]
        %v3941 = vld [vmem:[%s503 + $0x248] sm:$0xff]
        %v3942 = vld [vmem:[%s503 + $0x250] sm:$0xff]
        %v3943 = vld [vmem:[%s503 + $0x258] sm:$0xff]
        %v3944 = vld [vmem:[%s503 + $0x260] sm:$0xff]
        %v3945 = vld [vmem:[%s503 + $0x268] sm:$0xff]
        %v3946 = vld [vmem:[%s503 + $0x270] sm:$0xff]
        %v3947 = vld [vmem:[%s503 + $0x278] sm:$0xff]
        %v3948 = vld [vmem:[%s503 + $0x280] sm:$0xff]
        %v3949 = vld [vmem:[%s503 + $0x288] sm:$0xff]
        %v3950 = vld [vmem:[%s503 + $0x290] sm:$0xff]
        %v3951 = vld [vmem:[%s503 + $0x298] sm:$0xff]
        %v3952 = vld [vmem:[%s503 + $0x2a0] sm:$0xff]
        %v3953 = vld [vmem:[%s503 + $0x2a8] sm:$0xff]
        %v3954 = vld [vmem:[%s503 + $0x2b0] sm:$0xff]
        %v3955 = vld [vmem:[%s503 + $0x2b8] sm:$0xff]
        %v3956 = vld [vmem:[%s503 + $0x2c0] sm:$0xff]
        %v3957 = vld [vmem:[%s503 + $0x2c8] sm:$0xff]
        %v3958 = vld [vmem:[%s503 + $0x2d0] sm:$0xff]
        %v3959 = vld [vmem:[%s503 + $0x2d8] sm:$0xff]
        %v3960 = vld [vmem:[%s503 + $0x2e0] sm:$0xff]
        %v3961 = vld [vmem:[%s503 + $0x2e8] sm:$0xff]
        %v3962 = vld [vmem:[%s503 + $0x2f0] sm:$0xff]
        %v3963 = vld [vmem:[%s503 + $0x2f8] sm:$0xff]
        %v3964 = vld [vmem:[%s503 + $0x300] sm:$0xff]
        %v3965 = vld [vmem:[%s503 + $0x308] sm:$0xff]
        %v3966 = vld [vmem:[%s503 + $0x310] sm:$0xff]
        %v3967 = vld [vmem:[%s503 + $0x318] sm:$0xff]
        %v3968 = vld [vmem:[%s503 + $0x320] sm:$0xff]
        %v3969 = vld [vmem:[%s503 + $0x328] sm:$0xff]
        %v3970 = vld [vmem:[%s503 + $0x330] sm:$0xff]
        %v3971 = vld [vmem:[%s503 + $0x338] sm:$0xff]
        %v3972 = vld [vmem:[%s503 + $0x340] sm:$0xff]
        %v3973 = vld [vmem:[%s503 + $0x348] sm:$0xff]
        %v3974 = vld [vmem:[%s503 + $0x350] sm:$0xff]
        %v3975 = vld [vmem:[%s503 + $0x358] sm:$0xff]
        %v3976 = vld [vmem:[%s503 + $0x360] sm:$0xff]
        %v3977 = vld [vmem:[%s503 + $0x368] sm:$0xff]
        %v3978 = vld [vmem:[%s503 + $0x370] sm:$0xff]
        %v3979 = vld [vmem:[%s503 + $0x378] sm:$0xff]
        %v3980 = vld [vmem:[%s503 + $0x380] sm:$0xff]
        %v3981 = vld [vmem:[%s503 + $0x388] sm:$0xff]
        %v3982 = vld [vmem:[%s503 + $0x390] sm:$0xff]
        %v3983 = vld [vmem:[%s503 + $0x398] sm:$0xff]
        %v3984 = vld [vmem:[%s503 + $0x3a0] sm:$0xff]
        %v3985 = vld [vmem:[%s503 + $0x3a8] sm:$0xff]
        %v3986 = vld [vmem:[%s503 + $0x3b0] sm:$0xff]
        %v3987 = vld [vmem:[%s503 + $0x3b8] sm:$0xff]
        %v3988 = vld [vmem:[%s503 + $0x3c0] sm:$0xff]
        %v3989 = vld [vmem:[%s503 + $0x3c8] sm:$0xff]
        %v3990 = vld [vmem:[%s503 + $0x3d0] sm:$0xff]
        %v3991 = vld [vmem:[%s503 + $0x3d8] sm:$0xff]
        %v3992 = vld [vmem:[%s503 + $0x3e0] sm:$0xff]
        %v3993 = vld [vmem:[%s503 + $0x3e8] sm:$0xff]
        %v3994 = vld [vmem:[%s503 + $0x3f0] sm:$0xff]
        %v3995 = vld [vmem:[%s503 + $0x3f8] sm:$0xff]
        %v3996 = vlaneseq
        %v3997 = vshrl.u32 %v3996, 7
        %v3998 = vsub.s32 0, %v3997
        %v3999 = vrot.slane %v607, %v3998
        %v4000 = vlaneseq
        %v4001 = vshrl.u32 %v4000, 7
        %v4002 = vsub.s32 0, %v4001
        %v4003 = vrot.slane %v608, %v4002
        %v4132 = vunpack.c.l.b16 %v3868
        %v4133 = vunpack.c.h.b16 %v3868
        %v4134 = vunpack.c.l.b16 %v3869
        %v4135 = vunpack.c.h.b16 %v3869
        %v4136 = vunpack.c.l.b16 %v3870
        %v4137 = vunpack.c.h.b16 %v3870
        %v4138 = vunpack.c.l.b16 %v3871
        %v4139 = vunpack.c.h.b16 %v3871
        %v4140 = vunpack.c.l.b16 %v3872
        %v4141 = vunpack.c.h.b16 %v3872
        %v4142 = vunpack.c.l.b16 %v3873
        %v4143 = vunpack.c.h.b16 %v3873
        %v4144 = vunpack.c.l.b16 %v3874
        %v4145 = vunpack.c.h.b16 %v3874
        %v4146 = vunpack.c.l.b16 %v3875
        %v4147 = vunpack.c.h.b16 %v3875
        %v4148 = vunpack.c.l.b16 %v3876
        %v4149 = vunpack.c.h.b16 %v3876
        %v4150 = vunpack.c.l.b16 %v3877
        %v4151 = vunpack.c.h.b16 %v3877
        %v4152 = vunpack.c.l.b16 %v3878
        %v4153 = vunpack.c.h.b16 %v3878
        %v4154 = vunpack.c.l.b16 %v3879
        %v4155 = vunpack.c.h.b16 %v3879
        %v4156 = vunpack.c.l.b16 %v3880
        %v4157 = vunpack.c.h.b16 %v3880
        %v4158 = vunpack.c.l.b16 %v3881
        %v4159 = vunpack.c.h.b16 %v3881
        %v4160 = vunpack.c.l.b16 %v3882
        %v4161 = vunpack.c.h.b16 %v3882
        %v4162 = vunpack.c.l.b16 %v3883
        %v4163 = vunpack.c.h.b16 %v3883
        %v4164 = vunpack.c.l.b16 %v3884
        %v4165 = vunpack.c.h.b16 %v3884
        %v4166 = vunpack.c.l.b16 %v3885
        %v4167 = vunpack.c.h.b16 %v3885
        %v4168 = vunpack.c.l.b16 %v3886
        %v4169 = vunpack.c.h.b16 %v3886
        %v4170 = vunpack.c.l.b16 %v3887
        %v4171 = vunpack.c.h.b16 %v3887
        %v4172 = vunpack.c.l.b16 %v3888
        %v4173 = vunpack.c.h.b16 %v3888
        %v4174 = vunpack.c.l.b16 %v3889
        %v4175 = vunpack.c.h.b16 %v3889
        %v4176 = vunpack.c.l.b16 %v3890
        %v4177 = vunpack.c.h.b16 %v3890
        %v4178 = vunpack.c.l.b16 %v3891
        %v4179 = vunpack.c.h.b16 %v3891
        %v4180 = vunpack.c.l.b16 %v3892
        %v4181 = vunpack.c.h.b16 %v3892
        %v4182 = vunpack.c.l.b16 %v3893
        %v4183 = vunpack.c.h.b16 %v3893
        %v4184 = vunpack.c.l.b16 %v3894
        %v4185 = vunpack.c.h.b16 %v3894
        %v4186 = vunpack.c.l.b16 %v3895
        %v4187 = vunpack.c.h.b16 %v3895
        %v4188 = vunpack.c.l.b16 %v3896
        %v4189 = vunpack.c.h.b16 %v3896
        %v4190 = vunpack.c.l.b16 %v3897
        %v4191 = vunpack.c.h.b16 %v3897
        %v4192 = vunpack.c.l.b16 %v3898
        %v4193 = vunpack.c.h.b16 %v3898
        %v4194 = vunpack.c.l.b16 %v3899
        %v4195 = vunpack.c.h.b16 %v3899
        %v4196 = vunpack.c.l.b16 %v3900
        %v4197 = vunpack.c.h.b16 %v3900
        %v4198 = vunpack.c.l.b16 %v3901
        %v4199 = vunpack.c.h.b16 %v3901
        %v4200 = vunpack.c.l.b16 %v3902
        %v4201 = vunpack.c.h.b16 %v3902
        %v4202 = vunpack.c.l.b16 %v3903
        %v4203 = vunpack.c.h.b16 %v3903
        %v4204 = vunpack.c.l.b16 %v3904
        %v4205 = vunpack.c.h.b16 %v3904
        %v4206 = vunpack.c.l.b16 %v3905
        %v4207 = vunpack.c.h.b16 %v3905
        %v4208 = vunpack.c.l.b16 %v3906
        %v4209 = vunpack.c.h.b16 %v3906
        %v4210 = vunpack.c.l.b16 %v3907
        %v4211 = vunpack.c.h.b16 %v3907
        %v4212 = vunpack.c.l.b16 %v3908
        %v4213 = vunpack.c.h.b16 %v3908
        %v4214 = vunpack.c.l.b16 %v3909
        %v4215 = vunpack.c.h.b16 %v3909
        %v4216 = vunpack.c.l.b16 %v3910
        %v4217 = vunpack.c.h.b16 %v3910
        %v4218 = vunpack.c.l.b16 %v3911
        %v4219 = vunpack.c.h.b16 %v3911
        %v4220 = vunpack.c.l.b16 %v3912
        %v4221 = vunpack.c.h.b16 %v3912
        %v4222 = vunpack.c.l.b16 %v3913
        %v4223 = vunpack.c.h.b16 %v3913
        %v4224 = vunpack.c.l.b16 %v3914
        %v4225 = vunpack.c.h.b16 %v3914
        %v4226 = vunpack.c.l.b16 %v3915
        %v4227 = vunpack.c.h.b16 %v3915
        %v4228 = vunpack.c.l.b16 %v3916
        %v4229 = vunpack.c.h.b16 %v3916
        %v4230 = vunpack.c.l.b16 %v3917
        %v4231 = vunpack.c.h.b16 %v3917
        %v4232 = vunpack.c.l.b16 %v3918
        %v4233 = vunpack.c.h.b16 %v3918
        %v4234 = vunpack.c.l.b16 %v3919
        %v4235 = vunpack.c.h.b16 %v3919
        %v4236 = vunpack.c.l.b16 %v3920
        %v4237 = vunpack.c.h.b16 %v3920
        %v4238 = vunpack.c.l.b16 %v3921
        %v4239 = vunpack.c.h.b16 %v3921
        %v4240 = vunpack.c.l.b16 %v3922
        %v4241 = vunpack.c.h.b16 %v3922
        %v4242 = vunpack.c.l.b16 %v3923
        %v4243 = vunpack.c.h.b16 %v3923
        %v4244 = vunpack.c.l.b16 %v3924
        %v4245 = vunpack.c.h.b16 %v3924
        %v4246 = vunpack.c.l.b16 %v3925
        %v4247 = vunpack.c.h.b16 %v3925
        %v4248 = vunpack.c.l.b16 %v3926
        %v4249 = vunpack.c.h.b16 %v3926
        %v4250 = vunpack.c.l.b16 %v3927
        %v4251 = vunpack.c.h.b16 %v3927
        %v4252 = vunpack.c.l.b16 %v3928
        %v4253 = vunpack.c.h.b16 %v3928
        %v4254 = vunpack.c.l.b16 %v3929
        %v4255 = vunpack.c.h.b16 %v3929
        %v4256 = vunpack.c.l.b16 %v3930
        %v4257 = vunpack.c.h.b16 %v3930
        %v4258 = vunpack.c.l.b16 %v3931
        %v4259 = vunpack.c.h.b16 %v3931
        %v4260 = vunpack.c.l.b16 %v3932
        %v4261 = vunpack.c.h.b16 %v3932
        %v4262 = vunpack.c.l.b16 %v3933
        %v4263 = vunpack.c.h.b16 %v3933
        %v4264 = vunpack.c.l.b16 %v3934
        %v4265 = vunpack.c.h.b16 %v3934
        %v4266 = vunpack.c.l.b16 %v3935
        %v4267 = vunpack.c.h.b16 %v3935
        %v4268 = vunpack.c.l.b16 %v3936
        %v4269 = vunpack.c.h.b16 %v3936
        %v4270 = vunpack.c.l.b16 %v3937
        %v4271 = vunpack.c.h.b16 %v3937
        %v4272 = vunpack.c.l.b16 %v3938
        %v4273 = vunpack.c.h.b16 %v3938
        %v4274 = vunpack.c.l.b16 %v3939
        %v4275 = vunpack.c.h.b16 %v3939
        %v4276 = vunpack.c.l.b16 %v3940
        %v4277 = vunpack.c.h.b16 %v3940
        %v4278 = vunpack.c.l.b16 %v3941
        %v4279 = vunpack.c.h.b16 %v3941
        %v4280 = vunpack.c.l.b16 %v3942
        %v4281 = vunpack.c.h.b16 %v3942
        %v4282 = vunpack.c.l.b16 %v3943
        %v4283 = vunpack.c.h.b16 %v3943
        %v4284 = vunpack.c.l.b16 %v3944
        %v4285 = vunpack.c.h.b16 %v3944
        %v4286 = vunpack.c.l.b16 %v3945
        %v4287 = vunpack.c.h.b16 %v3945
        %v4288 = vunpack.c.l.b16 %v3946
        %v4289 = vunpack.c.h.b16 %v3946
        %v4290 = vunpack.c.l.b16 %v3947
        %v4291 = vunpack.c.h.b16 %v3947
        %v4292 = vunpack.c.l.b16 %v3948
        %v4293 = vunpack.c.h.b16 %v3948
        %v4294 = vunpack.c.l.b16 %v3949
        %v4295 = vunpack.c.h.b16 %v3949
        %v4296 = vunpack.c.l.b16 %v3950
        %v4297 = vunpack.c.h.b16 %v3950
        %v4298 = vunpack.c.l.b16 %v3951
        %v4299 = vunpack.c.h.b16 %v3951
        %v4300 = vunpack.c.l.b16 %v3952
        %v4301 = vunpack.c.h.b16 %v3952
        %v4302 = vunpack.c.l.b16 %v3953
        %v4303 = vunpack.c.h.b16 %v3953
        %v4304 = vunpack.c.l.b16 %v3954
        %v4305 = vunpack.c.h.b16 %v3954
        %v4306 = vunpack.c.l.b16 %v3955
        %v4307 = vunpack.c.h.b16 %v3955
        %v4308 = vunpack.c.l.b16 %v3956
        %v4309 = vunpack.c.h.b16 %v3956
        %v4310 = vunpack.c.l.b16 %v3957
        %v4311 = vunpack.c.h.b16 %v3957
        %v4312 = vunpack.c.l.b16 %v3958
        %v4313 = vunpack.c.h.b16 %v3958
        %v4314 = vunpack.c.l.b16 %v3959
        %v4315 = vunpack.c.h.b16 %v3959
        %v4316 = vunpack.c.l.b16 %v3960
        %v4317 = vunpack.c.h.b16 %v3960
        %v4318 = vunpack.c.l.b16 %v3961
        %v4319 = vunpack.c.h.b16 %v3961
        %v4320 = vunpack.c.l.b16 %v3962
        %v4321 = vunpack.c.h.b16 %v3962
        %v4322 = vunpack.c.l.b16 %v3963
        %v4323 = vunpack.c.h.b16 %v3963
        %v4324 = vunpack.c.l.b16 %v3964
        %v4325 = vunpack.c.h.b16 %v3964
        %v4326 = vunpack.c.l.b16 %v3965
        %v4327 = vunpack.c.h.b16 %v3965
        %v4328 = vunpack.c.l.b16 %v3966
        %v4329 = vunpack.c.h.b16 %v3966
        %v4330 = vunpack.c.l.b16 %v3967
        %v4331 = vunpack.c.h.b16 %v3967
        %v4332 = vunpack.c.l.b16 %v3968
        %v4333 = vunpack.c.h.b16 %v3968
        %v4334 = vunpack.c.l.b16 %v3969
        %v4335 = vunpack.c.h.b16 %v3969
        %v4336 = vunpack.c.l.b16 %v3970
        %v4337 = vunpack.c.h.b16 %v3970
        %v4338 = vunpack.c.l.b16 %v3971
        %v4339 = vunpack.c.h.b16 %v3971
        %v4340 = vunpack.c.l.b16 %v3972
        %v4341 = vunpack.c.h.b16 %v3972
        %v4342 = vunpack.c.l.b16 %v3973
        %v4343 = vunpack.c.h.b16 %v3973
        %v4344 = vunpack.c.l.b16 %v3974
        %v4345 = vunpack.c.h.b16 %v3974
        %v4346 = vunpack.c.l.b16 %v3975
        %v4347 = vunpack.c.h.b16 %v3975
        %v4348 = vunpack.c.l.b16 %v3976
        %v4349 = vunpack.c.h.b16 %v3976
        %v4350 = vunpack.c.l.b16 %v3977
        %v4351 = vunpack.c.h.b16 %v3977
        %v4352 = vunpack.c.l.b16 %v3978
        %v4353 = vunpack.c.h.b16 %v3978
        %v4354 = vunpack.c.l.b16 %v3979
        %v4355 = vunpack.c.h.b16 %v3979
        %v4356 = vunpack.c.l.b16 %v3980
        %v4357 = vunpack.c.h.b16 %v3980
        %v4358 = vunpack.c.l.b16 %v3981
        %v4359 = vunpack.c.h.b16 %v3981
        %v4360 = vunpack.c.l.b16 %v3982
        %v4361 = vunpack.c.h.b16 %v3982
        %v4362 = vunpack.c.l.b16 %v3983
        %v4363 = vunpack.c.h.b16 %v3983
        %v4364 = vunpack.c.l.b16 %v3984
        %v4365 = vunpack.c.h.b16 %v3984
        %v4366 = vunpack.c.l.b16 %v3985
        %v4367 = vunpack.c.h.b16 %v3985
        %v4368 = vunpack.c.l.b16 %v3986
        %v4369 = vunpack.c.h.b16 %v3986
        %v4370 = vunpack.c.l.b16 %v3987
        %v4371 = vunpack.c.h.b16 %v3987
        %v4372 = vunpack.c.l.b16 %v3988
        %v4373 = vunpack.c.h.b16 %v3988
        %v4374 = vunpack.c.l.b16 %v3989
        %v4375 = vunpack.c.h.b16 %v3989
        %v4376 = vunpack.c.l.b16 %v3990
        %v4377 = vunpack.c.h.b16 %v3990
        %v4378 = vunpack.c.l.b16 %v3991
        %v4379 = vunpack.c.h.b16 %v3991
        %v4380 = vunpack.c.l.b16 %v3992
        %v4381 = vunpack.c.h.b16 %v3992
        %v4382 = vunpack.c.l.b16 %v3993
        %v4383 = vunpack.c.h.b16 %v3993
        %v4384 = vunpack.c.l.b16 %v3994
        %v4385 = vunpack.c.h.b16 %v3994
        %v4386 = vunpack.c.l.b16 %v3995
        %v4387 = vunpack.c.h.b16 %v3995
        %v4388 = vpack.c.b16 %v4134, %v4132
        %v4389 = vpack.c.b16 %v4135, %v4133
        %v4390 = vpack.c.b16 %v4138, %v4136
        %v4391 = vpack.c.b16 %v4139, %v4137
        %v4392 = vpack.c.b16 %v4142, %v4140
        %v4393 = vpack.c.b16 %v4143, %v4141
        %v4394 = vpack.c.b16 %v4146, %v4144
        %v4395 = vpack.c.b16 %v4147, %v4145
        %v4396 = vpack.c.b16 %v4150, %v4148
        %v4397 = vpack.c.b16 %v4151, %v4149
        %v4398 = vpack.c.b16 %v4154, %v4152
        %v4399 = vpack.c.b16 %v4155, %v4153
        %v4400 = vpack.c.b16 %v4158, %v4156
        %v4401 = vpack.c.b16 %v4159, %v4157
        %v4402 = vpack.c.b16 %v4162, %v4160
        %v4403 = vpack.c.b16 %v4163, %v4161
        %v4404 = vpack.c.b16 %v4166, %v4164
        %v4405 = vpack.c.b16 %v4167, %v4165
        %v4406 = vpack.c.b16 %v4170, %v4168
        %v4407 = vpack.c.b16 %v4171, %v4169
        %v4408 = vpack.c.b16 %v4174, %v4172
        %v4409 = vpack.c.b16 %v4175, %v4173
        %v4410 = vpack.c.b16 %v4178, %v4176
        %v4411 = vpack.c.b16 %v4179, %v4177
        %v4412 = vpack.c.b16 %v4182, %v4180
        %v4413 = vpack.c.b16 %v4183, %v4181
        %v4414 = vpack.c.b16 %v4186, %v4184
        %v4415 = vpack.c.b16 %v4187, %v4185
        %v4416 = vpack.c.b16 %v4190, %v4188
        %v4417 = vpack.c.b16 %v4191, %v4189
        %v4418 = vpack.c.b16 %v4194, %v4192
        %v4419 = vpack.c.b16 %v4195, %v4193
        %v4420 = vpack.c.b16 %v4198, %v4196
        %v4421 = vpack.c.b16 %v4199, %v4197
        %v4422 = vpack.c.b16 %v4202, %v4200
        %v4423 = vpack.c.b16 %v4203, %v4201
        %v4424 = vpack.c.b16 %v4206, %v4204
        %v4425 = vpack.c.b16 %v4207, %v4205
        %v4426 = vpack.c.b16 %v4210, %v4208
        %v4427 = vpack.c.b16 %v4211, %v4209
        %v4428 = vpack.c.b16 %v4214, %v4212
        %v4429 = vpack.c.b16 %v4215, %v4213
        %v4430 = vpack.c.b16 %v4218, %v4216
        %v4431 = vpack.c.b16 %v4219, %v4217
        %v4432 = vpack.c.b16 %v4222, %v4220
        %v4433 = vpack.c.b16 %v4223, %v4221
        %v4434 = vpack.c.b16 %v4226, %v4224
        %v4435 = vpack.c.b16 %v4227, %v4225
        %v4436 = vpack.c.b16 %v4230, %v4228
        %v4437 = vpack.c.b16 %v4231, %v4229
        %v4438 = vpack.c.b16 %v4234, %v4232
        %v4439 = vpack.c.b16 %v4235, %v4233
        %v4440 = vpack.c.b16 %v4238, %v4236
        %v4441 = vpack.c.b16 %v4239, %v4237
        %v4442 = vpack.c.b16 %v4242, %v4240
        %v4443 = vpack.c.b16 %v4243, %v4241
        %v4444 = vpack.c.b16 %v4246, %v4244
        %v4445 = vpack.c.b16 %v4247, %v4245
        %v4446 = vpack.c.b16 %v4250, %v4248
        %v4447 = vpack.c.b16 %v4251, %v4249
        %v4448 = vpack.c.b16 %v4254, %v4252
        %v4449 = vpack.c.b16 %v4255, %v4253
        %v4450 = vpack.c.b16 %v4258, %v4256
        %v4451 = vpack.c.b16 %v4259, %v4257
        %v4452 = vpack.c.b16 %v4262, %v4260
        %v4453 = vpack.c.b16 %v4263, %v4261
        %v4454 = vpack.c.b16 %v4266, %v4264
        %v4455 = vpack.c.b16 %v4267, %v4265
        %v4456 = vpack.c.b16 %v4270, %v4268
        %v4457 = vpack.c.b16 %v4271, %v4269
        %v4458 = vpack.c.b16 %v4274, %v4272
        %v4459 = vpack.c.b16 %v4275, %v4273
        %v4460 = vpack.c.b16 %v4278, %v4276
        %v4461 = vpack.c.b16 %v4279, %v4277
        %v4462 = vpack.c.b16 %v4282, %v4280
        %v4463 = vpack.c.b16 %v4283, %v4281
        %v4464 = vpack.c.b16 %v4286, %v4284
        %v4465 = vpack.c.b16 %v4287, %v4285
        %v4466 = vpack.c.b16 %v4290, %v4288
        %v4467 = vpack.c.b16 %v4291, %v4289
        %v4468 = vpack.c.b16 %v4294, %v4292
        %v4469 = vpack.c.b16 %v4295, %v4293
        %v4470 = vpack.c.b16 %v4298, %v4296
        %v4471 = vpack.c.b16 %v4299, %v4297
        %v4472 = vpack.c.b16 %v4302, %v4300
        %v4473 = vpack.c.b16 %v4303, %v4301
        %v4474 = vpack.c.b16 %v4306, %v4304
        %v4475 = vpack.c.b16 %v4307, %v4305
        %v4476 = vpack.c.b16 %v4310, %v4308
        %v4477 = vpack.c.b16 %v4311, %v4309
        %v4478 = vpack.c.b16 %v4314, %v4312
        %v4479 = vpack.c.b16 %v4315, %v4313
        %v4480 = vpack.c.b16 %v4318, %v4316
        %v4481 = vpack.c.b16 %v4319, %v4317
        %v4482 = vpack.c.b16 %v4322, %v4320
        %v4483 = vpack.c.b16 %v4323, %v4321
        %v4484 = vpack.c.b16 %v4326, %v4324
        %v4485 = vpack.c.b16 %v4327, %v4325
        %v4486 = vpack.c.b16 %v4330, %v4328
        %v4487 = vpack.c.b16 %v4331, %v4329
        %v4488 = vpack.c.b16 %v4334, %v4332
        %v4489 = vpack.c.b16 %v4335, %v4333
        %v4490 = vpack.c.b16 %v4338, %v4336
        %v4491 = vpack.c.b16 %v4339, %v4337
        %v4492 = vpack.c.b16 %v4342, %v4340
        %v4493 = vpack.c.b16 %v4343, %v4341
        %v4494 = vpack.c.b16 %v4346, %v4344
        %v4495 = vpack.c.b16 %v4347, %v4345
        %v4496 = vpack.c.b16 %v4350, %v4348
        %v4497 = vpack.c.b16 %v4351, %v4349
        %v4498 = vpack.c.b16 %v4354, %v4352
        %v4499 = vpack.c.b16 %v4355, %v4353
        %v4500 = vpack.c.b16 %v4358, %v4356
        %v4501 = vpack.c.b16 %v4359, %v4357
        %v4502 = vpack.c.b16 %v4362, %v4360
        %v4503 = vpack.c.b16 %v4363, %v4361
        %v4504 = vpack.c.b16 %v4366, %v4364
        %v4505 = vpack.c.b16 %v4367, %v4365
        %v4506 = vpack.c.b16 %v4370, %v4368
        %v4507 = vpack.c.b16 %v4371, %v4369
        %v4508 = vpack.c.b16 %v4374, %v4372
        %v4509 = vpack.c.b16 %v4375, %v4373
        %v4510 = vpack.c.b16 %v4378, %v4376
        %v4511 = vpack.c.b16 %v4379, %v4377
        %v4512 = vpack.c.b16 %v4382, %v4380
        %v4513 = vpack.c.b16 %v4383, %v4381
        %v4514 = vpack.c.b16 %v4386, %v4384
        %v4515 = vpack.c.b16 %v4387, %v4385
        %4644 = vmatprep.subr.bf16.mxu0 %v4389
        %4645 = vmatpush1.bf16.msra.mxu0 %v4388
        %4646 = vmatprep.subr.bf16.mxu0 %v4391
        %4647 = vmatpush1.bf16.msra.mxu0 %v4390
        %4648 = vmatprep.subr.bf16.mxu0 %v4393
        %4649 = vmatpush1.bf16.msra.mxu0 %v4392
        %4650 = vmatprep.subr.bf16.mxu0 %v4395
        %4651 = vmatpush1.bf16.msra.mxu0 %v4394
        %4652 = vmatprep.subr.bf16.mxu0 %v4397
        %4653 = vmatpush1.bf16.msra.mxu0 %v4396
        %4654 = vmatprep.subr.bf16.mxu0 %v4399
        %4655 = vmatpush1.bf16.msra.mxu0 %v4398
        %4656 = vmatprep.subr.bf16.mxu0 %v4401
        %4657 = vmatpush1.bf16.msra.mxu0 %v4400
        %4658 = vmatprep.subr.bf16.mxu0 %v4403
        %4659 = vmatpush1.bf16.msra.mxu0 %v4402
        %4660 = vmatprep.subr.bf16.mxu0 %v4405
        %4661 = vmatpush1.bf16.msra.mxu0 %v4404
        %4662 = vmatprep.subr.bf16.mxu0 %v4407
        %4663 = vmatpush1.bf16.msra.mxu0 %v4406
        %4664 = vmatprep.subr.bf16.mxu0 %v4409
        %4665 = vmatpush1.bf16.msra.mxu0 %v4408
        %4666 = vmatprep.subr.bf16.mxu0 %v4411
        %4667 = vmatpush1.bf16.msra.mxu0 %v4410
        %4668 = vmatprep.subr.bf16.mxu0 %v4413
        %4669 = vmatpush1.bf16.msra.mxu0 %v4412
        %4670 = vmatprep.subr.bf16.mxu0 %v4415
        %4671 = vmatpush1.bf16.msra.mxu0 %v4414
        %4672 = vmatprep.subr.bf16.mxu0 %v4417
        %4673 = vmatpush1.bf16.msra.mxu0 %v4416
        %4674 = vmatprep.subr.bf16.mxu0 %v4419
        %4675 = vmatpush1.bf16.msra.mxu0 %v4418
        %4676 = vmatprep.mubr.bf16.mxu0 %v3861
        %4677 = vmatmul.mubr.bf16.gmra.mrb[0].mxu0 %v3860
        %v4678 = vpop.f32.mrb[0].mxu0
        %v4679 = vadd.f32 %v3999, %v4678
        %v4680 = vpop.f32.mrb[0].mxu0
        %v4681 = vadd.f32 %v4003, %v4680
        %v4682 = vpop.f32.mrb[0].mxu0
        %v4683 = vadd.f32 %v3999, %v4682
        %v4684 = vpop.f32.mrb[0].mxu0
        %v4685 = vadd.f32 %v4003, %v4684
        %4686 = vdwg.mxu0
        %4687 = vmatprep.subr.bf16.mxu0 %v4421
        %4688 = vmatpush1.bf16.msra.mxu0 %v4420
        %4689 = vmatprep.subr.bf16.mxu0 %v4423
        %4690 = vmatpush1.bf16.msra.mxu0 %v4422
        %4691 = vmatprep.subr.bf16.mxu0 %v4425
        %4692 = vmatpush1.bf16.msra.mxu0 %v4424
        %4693 = vmatprep.subr.bf16.mxu0 %v4427
        %4694 = vmatpush1.bf16.msra.mxu0 %v4426
        %4695 = vmatprep.subr.bf16.mxu0 %v4429
        %4696 = vmatpush1.bf16.msra.mxu0 %v4428
        %4697 = vmatprep.subr.bf16.mxu0 %v4431
        %4698 = vmatpush1.bf16.msra.mxu0 %v4430
        %4699 = vmatprep.subr.bf16.mxu0 %v4433
        %4700 = vmatpush1.bf16.msra.mxu0 %v4432
        %4701 = vmatprep.subr.bf16.mxu0 %v4435
        %4702 = vmatpush1.bf16.msra.mxu0 %v4434
        %4703 = vmatprep.subr.bf16.mxu0 %v4437
        %4704 = vmatpush1.bf16.msra.mxu0 %v4436
        %4705 = vmatprep.subr.bf16.mxu0 %v4439
        %4706 = vmatpush1.bf16.msra.mxu0 %v4438
        %4707 = vmatprep.subr.bf16.mxu0 %v4441
        %4708 = vmatpush1.bf16.msra.mxu0 %v4440
        %4709 = vmatprep.subr.bf16.mxu0 %v4443
        %4710 = vmatpush1.bf16.msra.mxu0 %v4442
        %4711 = vmatprep.subr.bf16.mxu0 %v4445
        %4712 = vmatpush1.bf16.msra.mxu0 %v4444
        %4713 = vmatprep.subr.bf16.mxu0 %v4447
        %4714 = vmatpush1.bf16.msra.mxu0 %v4446
        %4715 = vmatprep.subr.bf16.mxu0 %v4449
        %4716 = vmatpush1.bf16.msra.mxu0 %v4448
        %4717 = vmatprep.subr.bf16.mxu0 %v4451
        %4718 = vmatpush1.bf16.msra.mxu0 %v4450
        %4719 = vmatprep.mubr.bf16.mxu0 %v3863
        %4720 = vmatmul.mubr.bf16.gmra.mrb[0].mxu0 %v3862
        %v4721 = vpop.f32.mrb[0].mxu0
        %v4722 = vadd.f32 %v4679, %v4721
        %v4723 = vpop.f32.mrb[0].mxu0
        %v4724 = vadd.f32 %v4681, %v4723
        %v4725 = vpop.f32.mrb[0].mxu0
        %v4726 = vadd.f32 %v4683, %v4725
        %v4727 = vpop.f32.mrb[0].mxu0
        %v4728 = vadd.f32 %v4685, %v4727
        %4729 = vdwg.mxu0
        %4730 = vmatprep.subr.bf16.mxu0 %v4453
        %4731 = vmatpush1.bf16.msra.mxu0 %v4452
        %4732 = vmatprep.subr.bf16.mxu0 %v4455
        %4733 = vmatpush1.bf16.msra.mxu0 %v4454
        %4734 = vmatprep.subr.bf16.mxu0 %v4457
        %4735 = vmatpush1.bf16.msra.mxu0 %v4456
        %4736 = vmatprep.subr.bf16.mxu0 %v4459
        %4737 = vmatpush1.bf16.msra.mxu0 %v4458
        %4738 = vmatprep.subr.bf16.mxu0 %v4461
        %4739 = vmatpush1.bf16.msra.mxu0 %v4460
        %4740 = vmatprep.subr.bf16.mxu0 %v4463
        %4741 = vmatpush1.bf16.msra.mxu0 %v4462
        %4742 = vmatprep.subr.bf16.mxu0 %v4465
        %4743 = vmatpush1.bf16.msra.mxu0 %v4464
        %4744 = vmatprep.subr.bf16.mxu0 %v4467
        %4745 = vmatpush1.bf16.msra.mxu0 %v4466
        %4746 = vmatprep.subr.bf16.mxu0 %v4469
        %4747 = vmatpush1.bf16.msra.mxu0 %v4468
        %4748 = vmatprep.subr.bf16.mxu0 %v4471
        %4749 = vmatpush1.bf16.msra.mxu0 %v4470
        %4750 = vmatprep.subr.bf16.mxu0 %v4473
        %4751 = vmatpush1.bf16.msra.mxu0 %v4472
        %4752 = vmatprep.subr.bf16.mxu0 %v4475
        %4753 = vmatpush1.bf16.msra.mxu0 %v4474
        %4754 = vmatprep.subr.bf16.mxu0 %v4477
        %4755 = vmatpush1.bf16.msra.mxu0 %v4476
        %4756 = vmatprep.subr.bf16.mxu0 %v4479
        %4757 = vmatpush1.bf16.msra.mxu0 %v4478
        %4758 = vmatprep.subr.bf16.mxu0 %v4481
        %4759 = vmatpush1.bf16.msra.mxu0 %v4480
        %4760 = vmatprep.subr.bf16.mxu0 %v4483
        %4761 = vmatpush1.bf16.msra.mxu0 %v4482
        %4762 = vmatprep.mubr.bf16.mxu0 %v3865
        %4763 = vmatmul.mubr.bf16.gmra.mrb[0].mxu0 %v3864
        %v4764 = vpop.f32.mrb[0].mxu0
        %v4765 = vadd.f32 %v4722, %v4764
        %v4766 = vpop.f32.mrb[0].mxu0
        %v4767 = vadd.f32 %v4724, %v4766
        %v4768 = vpop.f32.mrb[0].mxu0
        %v4769 = vadd.f32 %v4726, %v4768
        %v4770 = vpop.f32.mrb[0].mxu0
        %v4771 = vadd.f32 %v4728, %v4770
        %4772 = vdwg.mxu0
        %4773 = vmatprep.subr.bf16.mxu0 %v4485
        %4774 = vmatpush1.bf16.msra.mxu0 %v4484
        %4775 = vmatprep.subr.bf16.mxu0 %v4487
        %4776 = vmatpush1.bf16.msra.mxu0 %v4486
        %4777 = vmatprep.subr.bf16.mxu0 %v4489
        %4778 = vmatpush1.bf16.msra.mxu0 %v4488
        %4779 = vmatprep.subr.bf16.mxu0 %v4491
        %4780 = vmatpush1.bf16.msra.mxu0 %v4490
        %4781 = vmatprep.subr.bf16.mxu0 %v4493
        %4782 = vmatpush1.bf16.msra.mxu0 %v4492
        %4783 = vmatprep.subr.bf16.mxu0 %v4495
        %4784 = vmatpush1.bf16.msra.mxu0 %v4494
        %4785 = vmatprep.subr.bf16.mxu0 %v4497
        %4786 = vmatpush1.bf16.msra.mxu0 %v4496
        %4787 = vmatprep.subr.bf16.mxu0 %v4499
        %4788 = vmatpush1.bf16.msra.mxu0 %v4498
        %4789 = vmatprep.subr.bf16.mxu0 %v4501
        %4790 = vmatpush1.bf16.msra.mxu0 %v4500
        %4791 = vmatprep.subr.bf16.mxu0 %v4503
        %4792 = vmatpush1.bf16.msra.mxu0 %v4502
        %4793 = vmatprep.subr.bf16.mxu0 %v4505
        %4794 = vmatpush1.bf16.msra.mxu0 %v4504
        %4795 = vmatprep.subr.bf16.mxu0 %v4507
        %4796 = vmatpush1.bf16.msra.mxu0 %v4506
        %4797 = vmatprep.subr.bf16.mxu0 %v4509
        %4798 = vmatpush1.bf16.msra.mxu0 %v4508
        %4799 = vmatprep.subr.bf16.mxu0 %v4511
        %4800 = vmatpush1.bf16.msra.mxu0 %v4510
        %4801 = vmatprep.subr.bf16.mxu0 %v4513
        %4802 = vmatpush1.bf16.msra.mxu0 %v4512
        %4803 = vmatprep.subr.bf16.mxu0 %v4515
        %4804 = vmatpush1.bf16.msra.mxu0 %v4514
        %4805 = vmatprep.mubr.bf16.mxu0 %v3867
        %4806 = vmatmul.mubr.bf16.gmra.mrb[0].mxu0 %v3866
        %v4807 = vpop.f32.mrb[0].mxu0
        %v4808 = vadd.f32 %v4765, %v4807
        %v4809 = vpop.f32.mrb[0].mxu0
        %v4810 = vadd.f32 %v4767, %v4809
        %v4811 = vpop.f32.mrb[0].mxu0
        %v4812 = vadd.f32 %v4769, %v4811
        %v4813 = vpop.f32.mrb[0].mxu0
        %v4814 = vadd.f32 %v4771, %v4813
        %4815 = vdwg.mxu0
        %v4816 = vadd.f32 %v2984, %v4808
        %v4817 = vadd.f32 %v2985, %v4810
        %v4818 = vadd.f32 %v2986, %v4812
        %v4819 = vadd.f32 %v2987, %v4814
        %v4820 = vadd.f32 %v4816, %v4817
        %4821 = vadd.xlane.f32.xlu0 %v4820
        %v4822 = vpop.xlane.xlu0 %4821
        %v4823 = vadd.f32 %v4818, %v4819
        %4824 = vadd.xlane.f32.xlu0 %v4823
        %v4825 = vpop.xlane.xlu0 %4824
        %v4826 = vmul.f32 %v4822, %v2937
        %v4827 = vmul.f32 %v4825, %v2937
        %v4828 = vsub.f32 %v4816, %v4826
        %v4829 = vsub.f32 %v4817, %v4826
        %v4830 = vsub.f32 %v4818, %v4827
        %v4831 = vsub.f32 %v4819, %v4827
        %v4832 = vmul.f32 %v4828, %v4828
        %v4833 = vmul.f32 %v4829, %v4829
        %v4834 = vmul.f32 %v4830, %v4830
        %v4835 = vmul.f32 %v4831, %v4831
        %v4836 = vadd.f32 %v4832, %v4833
        %4837 = vadd.xlane.f32.xlu0 %v4836
        %v4838 = vpop.xlane.xlu0 %4837
        %v4839 = vadd.f32 %v4834, %v4835
        %4840 = vadd.xlane.f32.xlu0 %v4839
        %v4841 = vpop.xlane.xlu0 %4840
        %v4842 = vmul.f32 %v4838, %v2937
        %v4843 = vmul.f32 %v4841, %v2937
        %v4844 = vadd.f32 %v4842, 1e-05
        %v4845 = vadd.f32 %v4843, 1e-05
        %v4846 = vrsqrt.pop %v4844
        %v4847 = vrsqrt.pop %v4845
        %v4848 = vmul.f32 %v4828, %v4846
        %v4849 = vmul.f32 %v4829, %v4846
        %v4850 = vmul.f32 %v4830, %v4847
        %v4851 = vmul.f32 %v4831, %v4847
        %v4852 = vlaneseq
        %v4853 = vshrl.u32 %v4852, 7
        %v4854 = vsub.s32 6, %v4853
        %v4855 = vrot.slane %v605, %v4854
        %v4856 = vlaneseq
        %v4857 = vshrl.u32 %v4856, 7
        %v4858 = vsub.s32 6, %v4857
        %v4859 = vrot.slane %v606, %v4858
        %v4860 = vmul.f32 %v4848, %v4855
        %v4861 = vmul.f32 %v4849, %v4859
        %v4862 = vmul.f32 %v4850, %v4855
        %v4863 = vmul.f32 %v4851, %v4859
        %v4864 = vlaneseq
        %v4865 = vshrl.u32 %v4864, 7
        %v4866 = vsub.s32 7, %v4865
        %v4867 = vrot.slane %v605, %v4866
        %v4868 = vlaneseq
        %v4869 = vshrl.u32 %v4868, 7
        %v4870 = vsub.s32 7, %v4869
        %v4871 = vrot.slane %v606, %v4870
        %v4872 = vadd.f32 %v4860, %v4867
        %v4873 = vadd.f32 %v4861, %v4871
        %v4874 = vadd.f32 %v4862, %v4867
        %v4875 = vadd.f32 %v4863, %v4871
        %4876 = vst [vmem:[#allocation2] sm:$0xff] %v4872
        %4877 = vst [vmem:[#allocation2 + $0x8] sm:$0xff] %v4873
        %4878 = vst [vmem:[#allocation2 + $0x10] sm:$0xff] %v4874
        %4879 = vst [vmem:[#allocation2 + $0x18] sm:$0xff] %v4875
        %p4880 = scmp.eq.s32.totalorder %s34, 5
        // Predicated region
        $region105: #{neural_contract_analyzer.1} parent=67 // pred_check
          %p4881 = pneg %p4880
        $region106: #{neural_contract_analyzer.1} parent=67 // pred_check_branch
          %4883 = sbr.rel (%p4881) target = $region108
        $region107: #{neural_contract_analyzer.1} parent=67 // pred_region
          %v4884 = vld [vmem:[%s3] sm:$0x3]
          %v4886 = vsel %vm1971, %v4884, 0
          %4888 = vmatprep.subr.mxu0 %v4873
          %4889 = vmatpush1.msra.mxu0 %v4872
          %4890 = vmatprep.subr.mxu0 %v4875
          %4891 = vmatpush1.msra.mxu0 %v4874
          %4892 = vmatprep.subr.mxu0 0.0
          %4893 = vmatpush1.msra.mxu0 0.0
          %4894 = vmatprep.subr.mxu0 0.0
          %4895 = vmatpush1.msra.mxu0 0.0
          %4896 = vmatprep.subr.mxu0 0.0
          %4897 = vmatpush1.msra.mxu0 0.0
          %4898 = vmatprep.subr.mxu0 0.0
          %4899 = vmatpush1.msra.mxu0 0.0
          %4900 = vmatprep.subr.mxu0 0.0
          %4901 = vmatpush1.msra.mxu0 0.0
          %4902 = vmatprep.subr.mxu0 0.0
          %4903 = vmatpush1.msra.mxu0 0.0
          %4904 = vmatprep.subr.mxu0 0.0
          %4905 = vmatpush1.msra.mxu0 0.0
          %4906 = vmatprep.subr.mxu0 0.0
          %4907 = vmatpush1.msra.mxu0 0.0
          %4908 = vmatprep.subr.mxu0 0.0
          %4909 = vmatpush1.msra.mxu0 0.0
          %4910 = vmatprep.subr.mxu0 0.0
          %4911 = vmatpush1.msra.mxu0 0.0
          %4912 = vmatprep.subr.mxu0 0.0
          %4913 = vmatpush1.msra.mxu0 0.0
          %4914 = vmatprep.subr.mxu0 0.0
          %4915 = vmatpush1.msra.mxu0 0.0
          %4916 = vmatprep.subr.mxu0 0.0
          %4917 = vmatpush1.msra.mxu0 0.0
          %4918 = vmatprep.subr.mxu0 0.0
          %4919 = vmatpush1.msra.mxu0 0.0
          %4920 = vmatprep.subr.mxu0 0.0
          %4921 = vmatpush1.msra.mxu0 0.0
          %4922 = vmatprep.subr.mxu0 0.0
          %4923 = vmatpush1.msra.mxu0 0.0
          %4924 = vmatprep.subr.mxu0 0.0
          %4925 = vmatpush1.msra.mxu0 0.0
          %4926 = vmatprep.subr.mxu0 0.0
          %4927 = vmatpush1.msra.mxu0 0.0
          %4928 = vmatprep.subr.mxu0 0.0
          %4929 = vmatpush1.msra.mxu0 0.0
          %4930 = vmatprep.subr.mxu0 0.0
          %4931 = vmatpush1.msra.mxu0 0.0
          %4932 = vmatprep.subr.mxu0 0.0
          %4933 = vmatpush1.msra.mxu0 0.0
          %4934 = vmatprep.subr.mxu0 0.0
          %4935 = vmatpush1.msra.mxu0 0.0
          %4936 = vmatprep.subr.mxu0 0.0
          %4937 = vmatpush1.msra.mxu0 0.0
          %4938 = vmatprep.subr.mxu0 0.0
          %4939 = vmatpush1.msra.mxu0 0.0
          %4940 = vmatprep.subr.mxu0 0.0
          %4941 = vmatpush1.msra.mxu0 0.0
          %4942 = vmatprep.subr.mxu0 0.0
          %4943 = vmatpush1.msra.mxu0 0.0
          %4944 = vmatprep.subr.mxu0 0.0
          %4945 = vmatpush1.msra.mxu0 0.0
          %4946 = vmatprep.subr.mxu0 0.0
          %4947 = vmatpush1.msra.mxu0 0.0
          %4948 = vmatprep.subr.mxu0 0.0
          %4949 = vmatpush1.msra.mxu0 0.0
          %4950 = vmatprep.subr.mxu0 0.0
          %4951 = vmatpush1.msra.mxu0 0.0
          %4952 = vmatprep.mubr.f32.mxu0 0.0
          %4953 = vmatmul.mubr.f32.gmra.mrb[0].mxu0 %v4886
          %v4954 = vpop.f32.mrb[0].mxu0
          %v4955 = vadd.f32 0.0, %v4954
          %v4956 = vpop.f32.mrb[0].mxu0
          %v4957 = vadd.f32 0.0, %v4956
          %4958 = vdwg.mxu0
          %v4959 = vpack.c.bf16 %v4955, %v4955
          %v4960 = vpack.c.bf16 %v4957, %v4957
          %v4961 = vld [vmem:[#allocation10] sm:$0xff]
          %v4962 = vld [vmem:[#allocation10 + $0x8] sm:$0xff]
          %v4963 = vld [vmem:[#allocation10 + $0x10] sm:$0xff]
          %v4964 = vld [vmem:[#allocation10 + $0x18] sm:$0xff]
          %v4965 = vld [vmem:[#allocation10 + $0x20] sm:$0xff]
          %v4966 = vld [vmem:[#allocation10 + $0x28] sm:$0xff]
          %v4967 = vld [vmem:[#allocation10 + $0x30] sm:$0xff]
          %v4968 = vld [vmem:[#allocation10 + $0x38] sm:$0xff]
          %v4969 = vld [vmem:[#allocation10 + $0x40] sm:$0xff]
          %v4970 = vld [vmem:[#allocation10 + $0x48] sm:$0xff]
          %v4971 = vld [vmem:[#allocation10 + $0x50] sm:$0xff]
          %v4972 = vld [vmem:[#allocation10 + $0x58] sm:$0xff]
          %v4973 = vld [vmem:[#allocation10 + $0x60] sm:$0xff]
          %v4974 = vld [vmem:[#allocation10 + $0x68] sm:$0xff]
          %v4975 = vld [vmem:[#allocation10 + $0x70] sm:$0xff]
          %v4976 = vld [vmem:[#allocation10 + $0x78] sm:$0xff]
          %v4977 = vld [vmem:[#allocation10 + $0x80] sm:$0xff]
          %v4978 = vld [vmem:[#allocation10 + $0x88] sm:$0xff]
          %v4979 = vld [vmem:[#allocation10 + $0x90] sm:$0xff]
          %v4980 = vld [vmem:[#allocation10 + $0x98] sm:$0xff]
          %v4981 = vld [vmem:[#allocation10 + $0xa0] sm:$0xff]
          %v4982 = vld [vmem:[#allocation10 + $0xa8] sm:$0xff]
          %v4983 = vld [vmem:[#allocation10 + $0xb0] sm:$0xff]
          %v4984 = vld [vmem:[#allocation10 + $0xb8] sm:$0xff]
          %v4985 = vld [vmem:[#allocation10 + $0xc0] sm:$0xff]
          %v4986 = vld [vmem:[#allocation10 + $0xc8] sm:$0xff]
          %v4987 = vld [vmem:[#allocation10 + $0xd0] sm:$0xff]
          %v4988 = vld [vmem:[#allocation10 + $0xd8] sm:$0xff]
          %v4989 = vld [vmem:[#allocation10 + $0xe0] sm:$0xff]
          %v4990 = vld [vmem:[#allocation10 + $0xe8] sm:$0xff]
          %v4991 = vld [vmem:[#allocation10 + $0xf0] sm:$0xff]
          %v4992 = vld [vmem:[#allocation10 + $0xf8] sm:$0xff]
          %v4993 = vld [vmem:[#allocation10 + $0x100] sm:$0xff]
          %v4994 = vld [vmem:[#allocation10 + $0x108] sm:$0xff]
          %v4995 = vld [vmem:[#allocation10 + $0x110] sm:$0xff]
          %v4996 = vld [vmem:[#allocation10 + $0x118] sm:$0xff]
          %v4997 = vld [vmem:[#allocation10 + $0x120] sm:$0xff]
          %v4998 = vld [vmem:[#allocation10 + $0x128] sm:$0xff]
          %v4999 = vld [vmem:[#allocation10 + $0x130] sm:$0xff]
          %v5000 = vld [vmem:[#allocation10 + $0x138] sm:$0xff]
          %v5001 = vld [vmem:[#allocation10 + $0x140] sm:$0xff]
          %v5002 = vld [vmem:[#allocation10 + $0x148] sm:$0xff]
          %v5003 = vld [vmem:[#allocation10 + $0x150] sm:$0xff]
          %v5004 = vld [vmem:[#allocation10 + $0x158] sm:$0xff]
          %v5005 = vld [vmem:[#allocation10 + $0x160] sm:$0xff]
          %v5006 = vld [vmem:[#allocation10 + $0x168] sm:$0xff]
          %v5007 = vld [vmem:[#allocation10 + $0x170] sm:$0xff]
          %v5008 = vld [vmem:[#allocation10 + $0x178] sm:$0xff]
          %v5009 = vld [vmem:[#allocation10 + $0x180] sm:$0xff]
          %v5010 = vld [vmem:[#allocation10 + $0x188] sm:$0xff]
          %v5011 = vld [vmem:[#allocation10 + $0x190] sm:$0xff]
          %v5012 = vld [vmem:[#allocation10 + $0x198] sm:$0xff]
          %v5013 = vld [vmem:[#allocation10 + $0x1a0] sm:$0xff]
          %v5014 = vld [vmem:[#allocation10 + $0x1a8] sm:$0xff]
          %v5015 = vld [vmem:[#allocation10 + $0x1b0] sm:$0xff]
          %v5016 = vld [vmem:[#allocation10 + $0x1b8] sm:$0xff]
          %v5017 = vld [vmem:[#allocation10 + $0x1c0] sm:$0xff]
          %v5018 = vld [vmem:[#allocation10 + $0x1c8] sm:$0xff]
          %v5019 = vld [vmem:[#allocation10 + $0x1d0] sm:$0xff]
          %v5020 = vld [vmem:[#allocation10 + $0x1d8] sm:$0xff]
          %v5021 = vld [vmem:[#allocation10 + $0x1e0] sm:$0xff]
          %v5022 = vld [vmem:[#allocation10 + $0x1e8] sm:$0xff]
          %v5023 = vld [vmem:[#allocation10 + $0x1f0] sm:$0xff]
          %v5024 = vld [vmem:[#allocation10 + $0x1f8] sm:$0xff]
          %v5025 = vld [vmem:[#allocation10 + $0x200] sm:$0xff]
          %v5026 = vld [vmem:[#allocation10 + $0x208] sm:$0xff]
          %v5027 = vld [vmem:[#allocation10 + $0x210] sm:$0xff]
          %v5028 = vld [vmem:[#allocation10 + $0x218] sm:$0xff]
          %v5029 = vld [vmem:[#allocation10 + $0x220] sm:$0xff]
          %v5030 = vld [vmem:[#allocation10 + $0x228] sm:$0xff]
          %v5031 = vld [vmem:[#allocation10 + $0x230] sm:$0xff]
          %v5032 = vld [vmem:[#allocation10 + $0x238] sm:$0xff]
          %v5033 = vld [vmem:[#allocation10 + $0x240] sm:$0xff]
          %v5034 = vld [vmem:[#allocation10 + $0x248] sm:$0xff]
          %v5035 = vld [vmem:[#allocation10 + $0x250] sm:$0xff]
          %v5036 = vld [vmem:[#allocation10 + $0x258] sm:$0xff]
          %v5037 = vld [vmem:[#allocation10 + $0x260] sm:$0xff]
          %v5038 = vld [vmem:[#allocation10 + $0x268] sm:$0xff]
          %v5039 = vld [vmem:[#allocation10 + $0x270] sm:$0xff]
          %v5040 = vld [vmem:[#allocation10 + $0x278] sm:$0xff]
          %v5041 = vld [vmem:[#allocation10 + $0x280] sm:$0xff]
          %v5042 = vld [vmem:[#allocation10 + $0x288] sm:$0xff]
          %v5043 = vld [vmem:[#allocation10 + $0x290] sm:$0xff]
          %v5044 = vld [vmem:[#allocation10 + $0x298] sm:$0xff]
          %v5045 = vld [vmem:[#allocation10 + $0x2a0] sm:$0xff]
          %v5046 = vld [vmem:[#allocation10 + $0x2a8] sm:$0xff]
          %v5047 = vld [vmem:[#allocation10 + $0x2b0] sm:$0xff]
          %v5048 = vld [vmem:[#allocation10 + $0x2b8] sm:$0xff]
          %v5049 = vld [vmem:[#allocation10 + $0x2c0] sm:$0xff]
          %v5050 = vld [vmem:[#allocation10 + $0x2c8] sm:$0xff]
          %v5051 = vld [vmem:[#allocation10 + $0x2d0] sm:$0xff]
          %v5052 = vld [vmem:[#allocation10 + $0x2d8] sm:$0xff]
          %v5053 = vld [vmem:[#allocation10 + $0x2e0] sm:$0xff]
          %v5054 = vld [vmem:[#allocation10 + $0x2e8] sm:$0xff]
          %v5055 = vld [vmem:[#allocation10 + $0x2f0] sm:$0xff]
          %v5056 = vld [vmem:[#allocation10 + $0x2f8] sm:$0xff]
          %v5057 = vld [vmem:[#allocation11] sm:$0x3f]
          %v5059 = vlaneseq
          %v5060 = vshrl.u32 %v5059, 7
          %v5061 = vsub.s32 0, %v5060
          %v5062 = vrot.slane %v5057, %v5061
          %v5063 = vlaneseq
          %v5064 = vshrl.u32 %v5063, 7
          %v5065 = vsub.s32 1, %v5064
          %v5066 = vrot.slane %v5057, %v5065
          %v5067 = vlaneseq
          %v5068 = vshrl.u32 %v5067, 7
          %v5069 = vsub.s32 2, %v5068
          %v5070 = vrot.slane %v5057, %v5069
          %v5071 = vlaneseq
          %v5072 = vshrl.u32 %v5071, 7
          %v5073 = vsub.s32 3, %v5072
          %v5074 = vrot.slane %v5057, %v5073
          %v5075 = vlaneseq
          %v5076 = vshrl.u32 %v5075, 7
          %v5077 = vsub.s32 4, %v5076
          %v5078 = vrot.slane %v5057, %v5077
          %v5079 = vlaneseq
          %v5080 = vshrl.u32 %v5079, 7
          %v5081 = vsub.s32 5, %v5080
          %v5082 = vrot.slane %v5057, %v5081
          %v5185 = vunpack.c.l.b16 %v4961
          %v5186 = vunpack.c.h.b16 %v4961
          %v5187 = vunpack.c.l.b16 %v4962
          %v5188 = vunpack.c.h.b16 %v4962
          %v5189 = vunpack.c.l.b16 %v4963
          %v5190 = vunpack.c.h.b16 %v4963
          %v5191 = vunpack.c.l.b16 %v4964
          %v5192 = vunpack.c.h.b16 %v4964
          %v5193 = vunpack.c.l.b16 %v4965
          %v5194 = vunpack.c.h.b16 %v4965
          %v5195 = vunpack.c.l.b16 %v4966
          %v5196 = vunpack.c.h.b16 %v4966
          %v5197 = vunpack.c.l.b16 %v4967
          %v5198 = vunpack.c.h.b16 %v4967
          %v5199 = vunpack.c.l.b16 %v4968
          %v5200 = vunpack.c.h.b16 %v4968
          %v5201 = vunpack.c.l.b16 %v4969
          %v5202 = vunpack.c.h.b16 %v4969
          %v5203 = vunpack.c.l.b16 %v4970
          %v5204 = vunpack.c.h.b16 %v4970
          %v5205 = vunpack.c.l.b16 %v4971
          %v5206 = vunpack.c.h.b16 %v4971
          %v5207 = vunpack.c.l.b16 %v4972
          %v5208 = vunpack.c.h.b16 %v4972
          %v5209 = vunpack.c.l.b16 %v4973
          %v5210 = vunpack.c.h.b16 %v4973
          %v5211 = vunpack.c.l.b16 %v4974
          %v5212 = vunpack.c.h.b16 %v4974
          %v5213 = vunpack.c.l.b16 %v4975
          %v5214 = vunpack.c.h.b16 %v4975
          %v5215 = vunpack.c.l.b16 %v4976
          %v5216 = vunpack.c.h.b16 %v4976
          %v5217 = vunpack.c.l.b16 %v4977
          %v5218 = vunpack.c.h.b16 %v4977
          %v5219 = vunpack.c.l.b16 %v4978
          %v5220 = vunpack.c.h.b16 %v4978
          %v5221 = vunpack.c.l.b16 %v4979
          %v5222 = vunpack.c.h.b16 %v4979
          %v5223 = vunpack.c.l.b16 %v4980
          %v5224 = vunpack.c.h.b16 %v4980
          %v5225 = vunpack.c.l.b16 %v4981
          %v5226 = vunpack.c.h.b16 %v4981
          %v5227 = vunpack.c.l.b16 %v4982
          %v5228 = vunpack.c.h.b16 %v4982
          %v5229 = vunpack.c.l.b16 %v4983
          %v5230 = vunpack.c.h.b16 %v4983
          %v5231 = vunpack.c.l.b16 %v4984
          %v5232 = vunpack.c.h.b16 %v4984
          %v5233 = vunpack.c.l.b16 %v4985
          %v5234 = vunpack.c.h.b16 %v4985
          %v5235 = vunpack.c.l.b16 %v4986
          %v5236 = vunpack.c.h.b16 %v4986
          %v5237 = vunpack.c.l.b16 %v4987
          %v5238 = vunpack.c.h.b16 %v4987
          %v5239 = vunpack.c.l.b16 %v4988
          %v5240 = vunpack.c.h.b16 %v4988
          %v5241 = vunpack.c.l.b16 %v4989
          %v5242 = vunpack.c.h.b16 %v4989
          %v5243 = vunpack.c.l.b16 %v4990
          %v5244 = vunpack.c.h.b16 %v4990
          %v5245 = vunpack.c.l.b16 %v4991
          %v5246 = vunpack.c.h.b16 %v4991
          %v5247 = vunpack.c.l.b16 %v4992
          %v5248 = vunpack.c.h.b16 %v4992
          %v5249 = vunpack.c.l.b16 %v4993
          %v5250 = vunpack.c.h.b16 %v4993
          %v5251 = vunpack.c.l.b16 %v4994
          %v5252 = vunpack.c.h.b16 %v4994
          %v5253 = vunpack.c.l.b16 %v4995
          %v5254 = vunpack.c.h.b16 %v4995
          %v5255 = vunpack.c.l.b16 %v4996
          %v5256 = vunpack.c.h.b16 %v4996
          %v5257 = vunpack.c.l.b16 %v4997
          %v5258 = vunpack.c.h.b16 %v4997
          %v5259 = vunpack.c.l.b16 %v4998
          %v5260 = vunpack.c.h.b16 %v4998
          %v5261 = vunpack.c.l.b16 %v4999
          %v5262 = vunpack.c.h.b16 %v4999
          %v5263 = vunpack.c.l.b16 %v5000
          %v5264 = vunpack.c.h.b16 %v5000
          %v5265 = vunpack.c.l.b16 %v5001
          %v5266 = vunpack.c.h.b16 %v5001
          %v5267 = vunpack.c.l.b16 %v5002
          %v5268 = vunpack.c.h.b16 %v5002
          %v5269 = vunpack.c.l.b16 %v5003
          %v5270 = vunpack.c.h.b16 %v5003
          %v5271 = vunpack.c.l.b16 %v5004
          %v5272 = vunpack.c.h.b16 %v5004
          %v5273 = vunpack.c.l.b16 %v5005
          %v5274 = vunpack.c.h.b16 %v5005
          %v5275 = vunpack.c.l.b16 %v5006
          %v5276 = vunpack.c.h.b16 %v5006
          %v5277 = vunpack.c.l.b16 %v5007
          %v5278 = vunpack.c.h.b16 %v5007
          %v5279 = vunpack.c.l.b16 %v5008
          %v5280 = vunpack.c.h.b16 %v5008
          %v5281 = vunpack.c.l.b16 %v5009
          %v5282 = vunpack.c.h.b16 %v5009
          %v5283 = vunpack.c.l.b16 %v5010
          %v5284 = vunpack.c.h.b16 %v5010
          %v5285 = vunpack.c.l.b16 %v5011
          %v5286 = vunpack.c.h.b16 %v5011
          %v5287 = vunpack.c.l.b16 %v5012
          %v5288 = vunpack.c.h.b16 %v5012
          %v5289 = vunpack.c.l.b16 %v5013
          %v5290 = vunpack.c.h.b16 %v5013
          %v5291 = vunpack.c.l.b16 %v5014
          %v5292 = vunpack.c.h.b16 %v5014
          %v5293 = vunpack.c.l.b16 %v5015
          %v5294 = vunpack.c.h.b16 %v5015
          %v5295 = vunpack.c.l.b16 %v5016
          %v5296 = vunpack.c.h.b16 %v5016
          %v5297 = vunpack.c.l.b16 %v5017
          %v5298 = vunpack.c.h.b16 %v5017
          %v5299 = vunpack.c.l.b16 %v5018
          %v5300 = vunpack.c.h.b16 %v5018
          %v5301 = vunpack.c.l.b16 %v5019
          %v5302 = vunpack.c.h.b16 %v5019
          %v5303 = vunpack.c.l.b16 %v5020
          %v5304 = vunpack.c.h.b16 %v5020
          %v5305 = vunpack.c.l.b16 %v5021
          %v5306 = vunpack.c.h.b16 %v5021
          %v5307 = vunpack.c.l.b16 %v5022
          %v5308 = vunpack.c.h.b16 %v5022
          %v5309 = vunpack.c.l.b16 %v5023
          %v5310 = vunpack.c.h.b16 %v5023
          %v5311 = vunpack.c.l.b16 %v5024
          %v5312 = vunpack.c.h.b16 %v5024
          %v5313 = vunpack.c.l.b16 %v5025
          %v5314 = vunpack.c.h.b16 %v5025
          %v5315 = vunpack.c.l.b16 %v5026
          %v5316 = vunpack.c.h.b16 %v5026
          %v5317 = vunpack.c.l.b16 %v5027
          %v5318 = vunpack.c.h.b16 %v5027
          %v5319 = vunpack.c.l.b16 %v5028
          %v5320 = vunpack.c.h.b16 %v5028
          %v5321 = vunpack.c.l.b16 %v5029
          %v5322 = vunpack.c.h.b16 %v5029
          %v5323 = vunpack.c.l.b16 %v5030
          %v5324 = vunpack.c.h.b16 %v5030
          %v5325 = vunpack.c.l.b16 %v5031
          %v5326 = vunpack.c.h.b16 %v5031
          %v5327 = vunpack.c.l.b16 %v5032
          %v5328 = vunpack.c.h.b16 %v5032
          %v5329 = vunpack.c.l.b16 %v5033
          %v5330 = vunpack.c.h.b16 %v5033
          %v5331 = vunpack.c.l.b16 %v5034
          %v5332 = vunpack.c.h.b16 %v5034
          %v5333 = vunpack.c.l.b16 %v5035
          %v5334 = vunpack.c.h.b16 %v5035
          %v5335 = vunpack.c.l.b16 %v5036
          %v5336 = vunpack.c.h.b16 %v5036
          %v5337 = vunpack.c.l.b16 %v5037
          %v5338 = vunpack.c.h.b16 %v5037
          %v5339 = vunpack.c.l.b16 %v5038
          %v5340 = vunpack.c.h.b16 %v5038
          %v5341 = vunpack.c.l.b16 %v5039
          %v5342 = vunpack.c.h.b16 %v5039
          %v5343 = vunpack.c.l.b16 %v5040
          %v5344 = vunpack.c.h.b16 %v5040
          %v5345 = vunpack.c.l.b16 %v5041
          %v5346 = vunpack.c.h.b16 %v5041
          %v5347 = vunpack.c.l.b16 %v5042
          %v5348 = vunpack.c.h.b16 %v5042
          %v5349 = vunpack.c.l.b16 %v5043
          %v5350 = vunpack.c.h.b16 %v5043
          %v5351 = vunpack.c.l.b16 %v5044
          %v5352 = vunpack.c.h.b16 %v5044
          %v5353 = vunpack.c.l.b16 %v5045
          %v5354 = vunpack.c.h.b16 %v5045
          %v5355 = vunpack.c.l.b16 %v5046
          %v5356 = vunpack.c.h.b16 %v5046
          %v5357 = vunpack.c.l.b16 %v5047
          %v5358 = vunpack.c.h.b16 %v5047
          %v5359 = vunpack.c.l.b16 %v5048
          %v5360 = vunpack.c.h.b16 %v5048
          %v5361 = vunpack.c.l.b16 %v5049
          %v5362 = vunpack.c.h.b16 %v5049
          %v5363 = vunpack.c.l.b16 %v5050
          %v5364 = vunpack.c.h.b16 %v5050
          %v5365 = vunpack.c.l.b16 %v5051
          %v5366 = vunpack.c.h.b16 %v5051
          %v5367 = vunpack.c.l.b16 %v5052
          %v5368 = vunpack.c.h.b16 %v5052
          %v5369 = vunpack.c.l.b16 %v5053
          %v5370 = vunpack.c.h.b16 %v5053
          %v5371 = vunpack.c.l.b16 %v5054
          %v5372 = vunpack.c.h.b16 %v5054
          %v5373 = vunpack.c.l.b16 %v5055
          %v5374 = vunpack.c.h.b16 %v5055
          %v5375 = vunpack.c.l.b16 %v5056
          %v5376 = vunpack.c.h.b16 %v5056
          %v5377 = vpack.c.b16 %v5191, %v5185
          %v5378 = vpack.c.b16 %v5192, %v5186
          %v5379 = vpack.c.b16 %v5193, %v5187
          %v5380 = vpack.c.b16 %v5194, %v5188
          %v5381 = vpack.c.b16 %v5195, %v5189
          %v5382 = vpack.c.b16 %v5196, %v5190
          %v5383 = vpack.c.b16 %v5203, %v5197
          %v5384 = vpack.c.b16 %v5204, %v5198
          %v5385 = vpack.c.b16 %v5205, %v5199
          %v5386 = vpack.c.b16 %v5206, %v5200
          %v5387 = vpack.c.b16 %v5207, %v5201
          %v5388 = vpack.c.b16 %v5208, %v5202
          %v5389 = vpack.c.b16 %v5215, %v5209
          %v5390 = vpack.c.b16 %v5216, %v5210
          %v5391 = vpack.c.b16 %v5217, %v5211
          %v5392 = vpack.c.b16 %v5218, %v5212
          %v5393 = vpack.c.b16 %v5219, %v5213
          %v5394 = vpack.c.b16 %v5220, %v5214
          %v5395 = vpack.c.b16 %v5227, %v5221
          %v5396 = vpack.c.b16 %v5228, %v5222
          %v5397 = vpack.c.b16 %v5229, %v5223
          %v5398 = vpack.c.b16 %v5230, %v5224
          %v5399 = vpack.c.b16 %v5231, %v5225
          %v5400 = vpack.c.b16 %v5232, %v5226
          %v5401 = vpack.c.b16 %v5239, %v5233
          %v5402 = vpack.c.b16 %v5240, %v5234
          %v5403 = vpack.c.b16 %v5241, %v5235
          %v5404 = vpack.c.b16 %v5242, %v5236
          %v5405 = vpack.c.b16 %v5243, %v5237
          %v5406 = vpack.c.b16 %v5244, %v5238
          %v5407 = vpack.c.b16 %v5251, %v5245
          %v5408 = vpack.c.b16 %v5252, %v5246
          %v5409 = vpack.c.b16 %v5253, %v5247
          %v5410 = vpack.c.b16 %v5254, %v5248
          %v5411 = vpack.c.b16 %v5255, %v5249
          %v5412 = vpack.c.b16 %v5256, %v5250
          %v5413 = vpack.c.b16 %v5263, %v5257
          %v5414 = vpack.c.b16 %v5264, %v5258
          %v5415 = vpack.c.b16 %v5265, %v5259
          %v5416 = vpack.c.b16 %v5266, %v5260
          %v5417 = vpack.c.b16 %v5267, %v5261
          %v5418 = vpack.c.b16 %v5268, %v5262
          %v5419 = vpack.c.b16 %v5275, %v5269
          %v5420 = vpack.c.b16 %v5276, %v5270
          %v5421 = vpack.c.b16 %v5277, %v5271
          %v5422 = vpack.c.b16 %v5278, %v5272
          %v5423 = vpack.c.b16 %v5279, %v5273
          %v5424 = vpack.c.b16 %v5280, %v5274
          %v5425 = vpack.c.b16 %v5287, %v5281
          %v5426 = vpack.c.b16 %v5288, %v5282
          %v5427 = vpack.c.b16 %v5289, %v5283
          %v5428 = vpack.c.b16 %v5290, %v5284
          %v5429 = vpack.c.b16 %v5291, %v5285
          %v5430 = vpack.c.b16 %v5292, %v5286
          %v5431 = vpack.c.b16 %v5299, %v5293
          %v5432 = vpack.c.b16 %v5300, %v5294
          %v5433 = vpack.c.b16 %v5301, %v5295
          %v5434 = vpack.c.b16 %v5302, %v5296
          %v5435 = vpack.c.b16 %v5303, %v5297
          %v5436 = vpack.c.b16 %v5304, %v5298
          %v5437 = vpack.c.b16 %v5311, %v5305
          %v5438 = vpack.c.b16 %v5312, %v5306
          %v5439 = vpack.c.b16 %v5313, %v5307
          %v5440 = vpack.c.b16 %v5314, %v5308
          %v5441 = vpack.c.b16 %v5315, %v5309
          %v5442 = vpack.c.b16 %v5316, %v5310
          %v5443 = vpack.c.b16 %v5323, %v5317
          %v5444 = vpack.c.b16 %v5324, %v5318
          %v5445 = vpack.c.b16 %v5325, %v5319
          %v5446 = vpack.c.b16 %v5326, %v5320
          %v5447 = vpack.c.b16 %v5327, %v5321
          %v5448 = vpack.c.b16 %v5328, %v5322
          %v5449 = vpack.c.b16 %v5335, %v5329
          %v5450 = vpack.c.b16 %v5336, %v5330
          %v5451 = vpack.c.b16 %v5337, %v5331
          %v5452 = vpack.c.b16 %v5338, %v5332
          %v5453 = vpack.c.b16 %v5339, %v5333
          %v5454 = vpack.c.b16 %v5340, %v5334
          %v5455 = vpack.c.b16 %v5347, %v5341
          %v5456 = vpack.c.b16 %v5348, %v5342
          %v5457 = vpack.c.b16 %v5349, %v5343
          %v5458 = vpack.c.b16 %v5350, %v5344
          %v5459 = vpack.c.b16 %v5351, %v5345
          %v5460 = vpack.c.b16 %v5352, %v5346
          %v5461 = vpack.c.b16 %v5359, %v5353
          %v5462 = vpack.c.b16 %v5360, %v5354
          %v5463 = vpack.c.b16 %v5361, %v5355
          %v5464 = vpack.c.b16 %v5362, %v5356
          %v5465 = vpack.c.b16 %v5363, %v5357
          %v5466 = vpack.c.b16 %v5364, %v5358
          %v5467 = vpack.c.b16 %v5371, %v5365
          %v5468 = vpack.c.b16 %v5372, %v5366
          %v5469 = vpack.c.b16 %v5373, %v5367
          %v5470 = vpack.c.b16 %v5374, %v5368
          %v5471 = vpack.c.b16 %v5375, %v5369
          %v5472 = vpack.c.b16 %v5376, %v5370
          %5569 = vmatprep.subr.bf16.mxu0 %v5378
          %5570 = vmatpush1.bf16.msra.mxu0 %v5377
          %5571 = vmatprep.subr.bf16.mxu0 %v5384
          %5572 = vmatpush1.bf16.msra.mxu0 %v5383
          %5573 = vmatprep.subr.bf16.mxu0 %v5390
          %5574 = vmatpush1.bf16.msra.mxu0 %v5389
          %5575 = vmatprep.subr.bf16.mxu0 %v5396
          %5576 = vmatpush1.bf16.msra.mxu0 %v5395
          %5577 = vmatprep.subr.bf16.mxu0 %v5402
          %5578 = vmatpush1.bf16.msra.mxu0 %v5401
          %5579 = vmatprep.subr.bf16.mxu0 %v5408
          %5580 = vmatpush1.bf16.msra.mxu0 %v5407
          %5581 = vmatprep.subr.bf16.mxu0 %v5414
          %5582 = vmatpush1.bf16.msra.mxu0 %v5413
          %5583 = vmatprep.subr.bf16.mxu0 %v5420
          %5584 = vmatpush1.bf16.msra.mxu0 %v5419
          %5585 = vmatprep.subr.bf16.mxu0 %v5426
          %5586 = vmatpush1.bf16.msra.mxu0 %v5425
          %5587 = vmatprep.subr.bf16.mxu0 %v5432
          %5588 = vmatpush1.bf16.msra.mxu0 %v5431
          %5589 = vmatprep.subr.bf16.mxu0 %v5438
          %5590 = vmatpush1.bf16.msra.mxu0 %v5437
          %5591 = vmatprep.subr.bf16.mxu0 %v5444
          %5592 = vmatpush1.bf16.msra.mxu0 %v5443
          %5593 = vmatprep.subr.bf16.mxu0 %v5450
          %5594 = vmatpush1.bf16.msra.mxu0 %v5449
          %5595 = vmatprep.subr.bf16.mxu0 %v5456
          %5596 = vmatpush1.bf16.msra.mxu0 %v5455
          %5597 = vmatprep.subr.bf16.mxu0 %v5462
          %5598 = vmatpush1.bf16.msra.mxu0 %v5461
          %5599 = vmatprep.subr.bf16.mxu0 %v5468
          %5600 = vmatpush1.bf16.msra.mxu0 %v5467
          %5601 = vmatprep.mubr.bf16.mxu0 %v4960
          %5602 = vmatmul.mubr.bf16.gmra.mrb[0].mxu0 %v4959
          %v5603 = vpop.f32.mrb[0].mxu0
          %v5604 = vadd.f32 %v5062, %v5603
          %v5605 = vpop.f32.mrb[0].mxu0
          %v5606 = vadd.f32 %v5066, %v5605
          %v5607 = vpop.f32.mrb[0].mxu0
          %v5608 = vpop.f32.mrb[0].mxu0
          %5609 = vdwg.mxu0
          %5610 = vmatprep.subr.bf16.mxu0 %v5380
          %5611 = vmatpush1.bf16.msra.mxu0 %v5379
          %5612 = vmatprep.subr.bf16.mxu0 %v5386
          %5613 = vmatpush1.bf16.msra.mxu0 %v5385
          %5614 = vmatprep.subr.bf16.mxu0 %v5392
          %5615 = vmatpush1.bf16.msra.mxu0 %v5391
          %5616 = vmatprep.subr.bf16.mxu0 %v5398
          %5617 = vmatpush1.bf16.msra.mxu0 %v5397
          %5618 = vmatprep.subr.bf16.mxu0 %v5404
          %5619 = vmatpush1.bf16.msra.mxu0 %v5403
          %5620 = vmatprep.subr.bf16.mxu0 %v5410
          %5621 = vmatpush1.bf16.msra.mxu0 %v5409
          %5622 = vmatprep.subr.bf16.mxu0 %v5416
          %5623 = vmatpush1.bf16.msra.mxu0 %v5415
          %5624 = vmatprep.subr.bf16.mxu0 %v5422
          %5625 = vmatpush1.bf16.msra.mxu0 %v5421
          %5626 = vmatprep.subr.bf16.mxu0 %v5428
          %5627 = vmatpush1.bf16.msra.mxu0 %v5427
          %5628 = vmatprep.subr.bf16.mxu0 %v5434
          %5629 = vmatpush1.bf16.msra.mxu0 %v5433
          %5630 = vmatprep.subr.bf16.mxu0 %v5440
          %5631 = vmatpush1.bf16.msra.mxu0 %v5439
          %5632 = vmatprep.subr.bf16.mxu0 %v5446
          %5633 = vmatpush1.bf16.msra.mxu0 %v5445
          %5634 = vmatprep.subr.bf16.mxu0 %v5452
          %5635 = vmatpush1.bf16.msra.mxu0 %v5451
          %5636 = vmatprep.subr.bf16.mxu0 %v5458
          %5637 = vmatpush1.bf16.msra.mxu0 %v5457
          %5638 = vmatprep.subr.bf16.mxu0 %v5464
          %5639 = vmatpush1.bf16.msra.mxu0 %v5463
          %5640 = vmatprep.subr.bf16.mxu0 %v5470
          %5641 = vmatpush1.bf16.msra.mxu0 %v5469
          %5642 = vmatprep.mubr.bf16.mxu0 %v4960
          %5643 = vmatmul.mubr.bf16.gmra.mrb[0].mxu0 %v4959
          %v5644 = vpop.f32.mrb[0].mxu0
          %v5645 = vadd.f32 %v5070, %v5644
          %v5646 = vpop.f32.mrb[0].mxu0
          %v5647 = vadd.f32 %v5074, %v5646
          %v5648 = vpop.f32.mrb[0].mxu0
          %v5649 = vpop.f32.mrb[0].mxu0
          %5650 = vdwg.mxu0
          %5651 = vmatprep.subr.bf16.mxu0 %v5382
          %5652 = vmatpush1.bf16.msra.mxu0 %v5381
          %5653 = vmatprep.subr.bf16.mxu0 %v5388
          %5654 = vmatpush1.bf16.msra.mxu0 %v5387
          %5655 = vmatprep.subr.bf16.mxu0 %v5394
          %5656 = vmatpush1.bf16.msra.mxu0 %v5393
          %5657 = vmatprep.subr.bf16.mxu0 %v5400
          %5658 = vmatpush1.bf16.msra.mxu0 %v5399
          %5659 = vmatprep.subr.bf16.mxu0 %v5406
          %5660 = vmatpush1.bf16.msra.mxu0 %v5405
          %5661 = vmatprep.subr.bf16.mxu0 %v5412
          %5662 = vmatpush1.bf16.msra.mxu0 %v5411
          %5663 = vmatprep.subr.bf16.mxu0 %v5418
          %5664 = vmatpush1.bf16.msra.mxu0 %v5417
          %5665 = vmatprep.subr.bf16.mxu0 %v5424
          %5666 = vmatpush1.bf16.msra.mxu0 %v5423
          %5667 = vmatprep.subr.bf16.mxu0 %v5430
          %5668 = vmatpush1.bf16.msra.mxu0 %v5429
          %5669 = vmatprep.subr.bf16.mxu0 %v5436
          %5670 = vmatpush1.bf16.msra.mxu0 %v5435
          %5671 = vmatprep.subr.bf16.mxu0 %v5442
          %5672 = vmatpush1.bf16.msra.mxu0 %v5441
          %5673 = vmatprep.subr.bf16.mxu0 %v5448
          %5674 = vmatpush1.bf16.msra.mxu0 %v5447
          %5675 = vmatprep.subr.bf16.mxu0 %v5454
          %5676 = vmatpush1.bf16.msra.mxu0 %v5453
          %5677 = vmatprep.subr.bf16.mxu0 %v5460
          %5678 = vmatpush1.bf16.msra.mxu0 %v5459
          %5679 = vmatprep.subr.bf16.mxu0 %v5466
          %5680 = vmatpush1.bf16.msra.mxu0 %v5465
          %5681 = vmatprep.subr.bf16.mxu0 %v5472
          %5682 = vmatpush1.bf16.msra.mxu0 %v5471
          %5683 = vmatprep.mubr.bf16.mxu0 %v4960
          %5684 = vmatmul.mubr.bf16.gmra.mrb[0].mxu0 %v4959
          %v5685 = vpop.f32.mrb[0].mxu0
          %v5686 = vadd.f32 %v5078, %v5685
          %v5687 = vpop.f32.mrb[0].mxu0
          %v5688 = vadd.f32 %v5082, %v5687
          %v5689 = vpop.f32.mrb[0].mxu0
          %v5690 = vpop.f32.mrb[0].mxu0
          %5691 = vdwg.mxu0
          %v5692 = vmax.f32 %v5604, 0.0
          %v5693 = vmax.f32 %v5606, 0.0
          %v5694 = vmax.f32 %v5645, 0.0
          %v5695 = vmax.f32 %v5647, 0.0
          %v5696 = vmax.f32 %v5686, 0.0
          %v5697 = vmax.f32 %v5688, 0.0
          %v5698 = vpack.c.bf16 %v5692, %v5692
          %v5699 = vpack.c.bf16 %v5693, %v5693
          %v5700 = vpack.c.bf16 %v5694, %v5694
          %v5701 = vpack.c.bf16 %v5695, %v5695
          %v5702 = vpack.c.bf16 %v5696, %v5696
          %v5703 = vpack.c.bf16 %v5697, %v5697
          %v5704 = vld [vmem:[#allocation13] sm:$0xf]
          %v5705 = vld [vmem:[#allocation13 + $0x4] sm:$0xf]
          %v5706 = vld [vmem:[#allocation13 + $0x8] sm:$0xf]
          %v5707 = vld [vmem:[#allocation13 + $0xc] sm:$0xf]
          %v5708 = vld [vmem:[#allocation13 + $0x10] sm:$0xf]
          %v5709 = vld [vmem:[#allocation13 + $0x14] sm:$0xf]
          %v5710 = vld [vmem:[#allocation13 + $0x18] sm:$0xf]
          %v5711 = vld [vmem:[#allocation13 + $0x1c] sm:$0xf]
          %v5712 = vld [vmem:[#allocation13 + $0x20] sm:$0xf]
          %v5713 = vld [vmem:[#allocation13 + $0x24] sm:$0xf]
          %v5714 = vld [vmem:[#allocation13 + $0x28] sm:$0xf]
          %v5715 = vld [vmem:[#allocation13 + $0x2c] sm:$0xf]
          %v5716 = vld [vmem:[#allocation13 + $0x30] sm:$0xf]
          %v5717 = vld [vmem:[#allocation13 + $0x34] sm:$0xf]
          %v5718 = vld [vmem:[#allocation13 + $0x38] sm:$0xf]
          %v5719 = vld [vmem:[#allocation13 + $0x3c] sm:$0xf]
          %v5720 = vld [vmem:[#allocation13 + $0x40] sm:$0xf]
          %v5721 = vld [vmem:[#allocation13 + $0x44] sm:$0xf]
          %v5722 = vld [vmem:[#allocation13 + $0x48] sm:$0xf]
          %v5723 = vld [vmem:[#allocation13 + $0x4c] sm:$0xf]
          %v5724 = vld [vmem:[#allocation13 + $0x50] sm:$0xf]
          %v5725 = vld [vmem:[#allocation13 + $0x54] sm:$0xf]
          %v5726 = vld [vmem:[#allocation13 + $0x58] sm:$0xf]
          %v5727 = vld [vmem:[#allocation13 + $0x5c] sm:$0xf]
          %v5728 = vld [vmem:[#allocation13 + $0x60] sm:$0xf]
          %v5729 = vld [vmem:[#allocation13 + $0x64] sm:$0xf]
          %v5730 = vld [vmem:[#allocation13 + $0x68] sm:$0xf]
          %v5731 = vld [vmem:[#allocation13 + $0x6c] sm:$0xf]
          %v5732 = vld [vmem:[#allocation13 + $0x70] sm:$0xf]
          %v5733 = vld [vmem:[#allocation13 + $0x74] sm:$0xf]
          %v5734 = vld [vmem:[#allocation13 + $0x78] sm:$0xf]
          %v5735 = vld [vmem:[#allocation13 + $0x7c] sm:$0xf]
          %v5736 = vld [vmem:[#allocation13 + $0x80] sm:$0xf]
          %v5737 = vld [vmem:[#allocation13 + $0x84] sm:$0xf]
          %v5738 = vld [vmem:[#allocation13 + $0x88] sm:$0xf]
          %v5739 = vld [vmem:[#allocation13 + $0x8c] sm:$0xf]
          %v5740 = vld [vmem:[#allocation13 + $0x90] sm:$0xf]
          %v5741 = vld [vmem:[#allocation13 + $0x94] sm:$0xf]
          %v5742 = vld [vmem:[#allocation13 + $0x98] sm:$0xf]
          %v5743 = vld [vmem:[#allocation13 + $0x9c] sm:$0xf]
          %v5744 = vld [vmem:[#allocation13 + $0xa0] sm:$0xf]
          %v5745 = vld [vmem:[#allocation13 + $0xa4] sm:$0xf]
          %v5746 = vld [vmem:[#allocation13 + $0xa8] sm:$0xf]
          %v5747 = vld [vmem:[#allocation13 + $0xac] sm:$0xf]
          %v5748 = vld [vmem:[#allocation13 + $0xb0] sm:$0xf]
          %v5749 = vld [vmem:[#allocation13 + $0xb4] sm:$0xf]
          %v5750 = vld [vmem:[#allocation13 + $0xb8] sm:$0xf]
          %v5751 = vld [vmem:[#allocation13 + $0xbc] sm:$0xf]
          %v5752 = vld [vmem:[#allocation13 + $0xc0] sm:$0xf]
          %v5753 = vld [vmem:[#allocation13 + $0xc4] sm:$0xf]
          %v5754 = vld [vmem:[#allocation13 + $0xc8] sm:$0xf]
          %v5755 = vld [vmem:[#allocation13 + $0xcc] sm:$0xf]
          %v5756 = vld [vmem:[#allocation13 + $0xd0] sm:$0xf]
          %v5757 = vld [vmem:[#allocation13 + $0xd4] sm:$0xf]
          %v5758 = vld [vmem:[#allocation13 + $0xd8] sm:$0xf]
          %v5759 = vld [vmem:[#allocation13 + $0xdc] sm:$0xf]
          %v5760 = vld [vmem:[#allocation13 + $0xe0] sm:$0xf]
          %v5761 = vld [vmem:[#allocation13 + $0xe4] sm:$0xf]
          %v5762 = vld [vmem:[#allocation13 + $0xe8] sm:$0xf]
          %v5763 = vld [vmem:[#allocation13 + $0xec] sm:$0xf]
          %v5764 = vld [vmem:[#allocation13 + $0xf0] sm:$0xf]
          %v5765 = vld [vmem:[#allocation13 + $0xf4] sm:$0xf]
          %v5766 = vld [vmem:[#allocation13 + $0xf8] sm:$0xf]
          %v5767 = vld [vmem:[#allocation13 + $0xfc] sm:$0xf]
          %v5768 = vld [vmem:[#allocation13 + $0x100] sm:$0xf]
          %v5769 = vld [vmem:[#allocation13 + $0x104] sm:$0xf]
          %v5770 = vld [vmem:[#allocation13 + $0x108] sm:$0xf]
          %v5771 = vld [vmem:[#allocation13 + $0x10c] sm:$0xf]
          %v5772 = vld [vmem:[#allocation13 + $0x110] sm:$0xf]
          %v5773 = vld [vmem:[#allocation13 + $0x114] sm:$0xf]
          %v5774 = vld [vmem:[#allocation13 + $0x118] sm:$0xf]
          %v5775 = vld [vmem:[#allocation13 + $0x11c] sm:$0xf]
          %v5776 = vld [vmem:[#allocation13 + $0x120] sm:$0xf]
          %v5777 = vld [vmem:[#allocation13 + $0x124] sm:$0xf]
          %v5778 = vld [vmem:[#allocation13 + $0x128] sm:$0xf]
          %v5779 = vld [vmem:[#allocation13 + $0x12c] sm:$0xf]
          %v5780 = vld [vmem:[#allocation13 + $0x130] sm:$0xf]
          %v5781 = vld [vmem:[#allocation13 + $0x134] sm:$0xf]
          %v5782 = vld [vmem:[#allocation13 + $0x138] sm:$0xf]
          %v5783 = vld [vmem:[#allocation13 + $0x13c] sm:$0xf]
          %v5784 = vld [vmem:[#allocation13 + $0x140] sm:$0xf]
          %v5785 = vld [vmem:[#allocation13 + $0x144] sm:$0xf]
          %v5786 = vld [vmem:[#allocation13 + $0x148] sm:$0xf]
          %v5787 = vld [vmem:[#allocation13 + $0x14c] sm:$0xf]
          %v5788 = vld [vmem:[#allocation13 + $0x150] sm:$0xf]
          %v5789 = vld [vmem:[#allocation13 + $0x154] sm:$0xf]
          %v5790 = vld [vmem:[#allocation13 + $0x158] sm:$0xf]
          %v5791 = vld [vmem:[#allocation13 + $0x15c] sm:$0xf]
          %v5792 = vld [vmem:[#allocation13 + $0x160] sm:$0xf]
          %v5793 = vld [vmem:[#allocation13 + $0x164] sm:$0xf]
          %v5794 = vld [vmem:[#allocation13 + $0x168] sm:$0xf]
          %v5795 = vld [vmem:[#allocation13 + $0x16c] sm:$0xf]
          %v5796 = vld [vmem:[#allocation13 + $0x170] sm:$0xf]
          %v5797 = vld [vmem:[#allocation13 + $0x174] sm:$0xf]
          %v5798 = vld [vmem:[#allocation13 + $0x178] sm:$0xf]
          %v5799 = vld [vmem:[#allocation13 + $0x17c] sm:$0xf]
          %v5800 = vld [vmem:[#allocation14] sm:$0x1]
          %v5802 = vlaneseq
          %v5803 = vshrl.u32 %v5802, 7
          %v5804 = vsub.s32 0, %v5803
          %v5805 = vrot.slane %v5800, %v5804
          %v5903 = vunpack.c.l.b16 %v5704
          %v5904 = vunpack.c.l.b16 %v5705
          %v5905 = vunpack.c.l.b16 %v5706
          %v5906 = vunpack.c.l.b16 %v5707
          %v5907 = vunpack.c.l.b16 %v5708
          %v5908 = vunpack.c.l.b16 %v5709
          %v5909 = vunpack.c.l.b16 %v5710
          %v5910 = vunpack.c.l.b16 %v5711
          %v5911 = vunpack.c.l.b16 %v5712
          %v5912 = vunpack.c.l.b16 %v5713
          %v5913 = vunpack.c.l.b16 %v5714
          %v5914 = vunpack.c.l.b16 %v5715
          %v5915 = vunpack.c.l.b16 %v5716
          %v5916 = vunpack.c.l.b16 %v5717
          %v5917 = vunpack.c.l.b16 %v5718
          %v5918 = vunpack.c.l.b16 %v5719
          %v5919 = vunpack.c.l.b16 %v5720
          %v5920 = vunpack.c.l.b16 %v5721
          %v5921 = vunpack.c.l.b16 %v5722
          %v5922 = vunpack.c.l.b16 %v5723
          %v5923 = vunpack.c.l.b16 %v5724
          %v5924 = vunpack.c.l.b16 %v5725
          %v5925 = vunpack.c.l.b16 %v5726
          %v5926 = vunpack.c.l.b16 %v5727
          %v5927 = vunpack.c.l.b16 %v5728
          %v5928 = vunpack.c.l.b16 %v5729
          %v5929 = vunpack.c.l.b16 %v5730
          %v5930 = vunpack.c.l.b16 %v5731
          %v5931 = vunpack.c.l.b16 %v5732
          %v5932 = vunpack.c.l.b16 %v5733
          %v5933 = vunpack.c.l.b16 %v5734
          %v5934 = vunpack.c.l.b16 %v5735
          %v5935 = vunpack.c.l.b16 %v5736
          %v5936 = vunpack.c.l.b16 %v5737
          %v5937 = vunpack.c.l.b16 %v5738
          %v5938 = vunpack.c.l.b16 %v5739
          %v5939 = vunpack.c.l.b16 %v5740
          %v5940 = vunpack.c.l.b16 %v5741
          %v5941 = vunpack.c.l.b16 %v5742
          %v5942 = vunpack.c.l.b16 %v5743
          %v5943 = vunpack.c.l.b16 %v5744
          %v5944 = vunpack.c.l.b16 %v5745
          %v5945 = vunpack.c.l.b16 %v5746
          %v5946 = vunpack.c.l.b16 %v5747
          %v5947 = vunpack.c.l.b16 %v5748
          %v5948 = vunpack.c.l.b16 %v5749
          %v5949 = vunpack.c.l.b16 %v5750
          %v5950 = vunpack.c.l.b16 %v5751
          %v5951 = vunpack.c.l.b16 %v5752
          %v5952 = vunpack.c.l.b16 %v5753
          %v5953 = vunpack.c.l.b16 %v5754
          %v5954 = vunpack.c.l.b16 %v5755
          %v5955 = vunpack.c.l.b16 %v5756
          %v5956 = vunpack.c.l.b16 %v5757
          %v5957 = vunpack.c.l.b16 %v5758
          %v5958 = vunpack.c.l.b16 %v5759
          %v5959 = vunpack.c.l.b16 %v5760
          %v5960 = vunpack.c.l.b16 %v5761
          %v5961 = vunpack.c.l.b16 %v5762
          %v5962 = vunpack.c.l.b16 %v5763
          %v5963 = vunpack.c.l.b16 %v5764
          %v5964 = vunpack.c.l.b16 %v5765
          %v5965 = vunpack.c.l.b16 %v5766
          %v5966 = vunpack.c.l.b16 %v5767
          %v5967 = vunpack.c.l.b16 %v5768
          %v5968 = vunpack.c.l.b16 %v5769
          %v5969 = vunpack.c.l.b16 %v5770
          %v5970 = vunpack.c.l.b16 %v5771
          %v5971 = vunpack.c.l.b16 %v5772
          %v5972 = vunpack.c.l.b16 %v5773
          %v5973 = vunpack.c.l.b16 %v5774
          %v5974 = vunpack.c.l.b16 %v5775
          %v5975 = vunpack.c.l.b16 %v5776
          %v5976 = vunpack.c.l.b16 %v5777
          %v5977 = vunpack.c.l.b16 %v5778
          %v5978 = vunpack.c.l.b16 %v5779
          %v5979 = vunpack.c.l.b16 %v5780
          %v5980 = vunpack.c.l.b16 %v5781
          %v5981 = vunpack.c.l.b16 %v5782
          %v5982 = vunpack.c.l.b16 %v5783
          %v5983 = vunpack.c.l.b16 %v5784
          %v5984 = vunpack.c.l.b16 %v5785
          %v5985 = vunpack.c.l.b16 %v5786
          %v5986 = vunpack.c.l.b16 %v5787
          %v5987 = vunpack.c.l.b16 %v5788
          %v5988 = vunpack.c.l.b16 %v5789
          %v5989 = vunpack.c.l.b16 %v5790
          %v5990 = vunpack.c.l.b16 %v5791
          %v5991 = vunpack.c.l.b16 %v5792
          %v5992 = vunpack.c.l.b16 %v5793
          %v5993 = vunpack.c.l.b16 %v5794
          %v5994 = vunpack.c.l.b16 %v5795
          %v5995 = vunpack.c.l.b16 %v5796
          %v5996 = vunpack.c.l.b16 %v5797
          %v5997 = vunpack.c.l.b16 %v5798
          %v5998 = vunpack.c.l.b16 %v5799
          %v5999 = vpack.c.b16 %v5904, %v5903
          %v6000 = vpack.c.b16 %v5906, %v5905
          %v6001 = vpack.c.b16 %v5908, %v5907
          %v6002 = vpack.c.b16 %v5910, %v5909
          %v6003 = vpack.c.b16 %v5912, %v5911
          %v6004 = vpack.c.b16 %v5914, %v5913
          %v6005 = vpack.c.b16 %v5916, %v5915
          %v6006 = vpack.c.b16 %v5918, %v5917
          %v6007 = vpack.c.b16 %v5920, %v5919
          %v6008 = vpack.c.b16 %v5922, %v5921
          %v6009 = vpack.c.b16 %v5924, %v5923
          %v6010 = vpack.c.b16 %v5926, %v5925
          %v6011 = vpack.c.b16 %v5928, %v5927
          %v6012 = vpack.c.b16 %v5930, %v5929
          %v6013 = vpack.c.b16 %v5932, %v5931
          %v6014 = vpack.c.b16 %v5934, %v5933
          %v6015 = vpack.c.b16 %v5936, %v5935
          %v6016 = vpack.c.b16 %v5938, %v5937
          %v6017 = vpack.c.b16 %v5940, %v5939
          %v6018 = vpack.c.b16 %v5942, %v5941
          %v6019 = vpack.c.b16 %v5944, %v5943
          %v6020 = vpack.c.b16 %v5946, %v5945
          %v6021 = vpack.c.b16 %v5948, %v5947
          %v6022 = vpack.c.b16 %v5950, %v5949
          %v6023 = vpack.c.b16 %v5952, %v5951
          %v6024 = vpack.c.b16 %v5954, %v5953
          %v6025 = vpack.c.b16 %v5956, %v5955
          %v6026 = vpack.c.b16 %v5958, %v5957
          %v6027 = vpack.c.b16 %v5960, %v5959
          %v6028 = vpack.c.b16 %v5962, %v5961
          %v6029 = vpack.c.b16 %v5964, %v5963
          %v6030 = vpack.c.b16 %v5966, %v5965
          %v6031 = vpack.c.b16 %v5968, %v5967
          %v6032 = vpack.c.b16 %v5970, %v5969
          %v6033 = vpack.c.b16 %v5972, %v5971
          %v6034 = vpack.c.b16 %v5974, %v5973
          %v6035 = vpack.c.b16 %v5976, %v5975
          %v6036 = vpack.c.b16 %v5978, %v5977
          %v6037 = vpack.c.b16 %v5980, %v5979
          %v6038 = vpack.c.b16 %v5982, %v5981
          %v6039 = vpack.c.b16 %v5984, %v5983
          %v6040 = vpack.c.b16 %v5986, %v5985
          %v6041 = vpack.c.b16 %v5988, %v5987
          %v6042 = vpack.c.b16 %v5990, %v5989
          %v6043 = vpack.c.b16 %v5992, %v5991
          %v6044 = vpack.c.b16 %v5994, %v5993
          %v6045 = vpack.c.b16 %v5996, %v5995
          %v6046 = vpack.c.b16 %v5998, %v5997
          %6095 = vmatprep.subr.bf16.mxu0 0
          %6096 = vmatpush1.bf16.msra.mxu0 %v5999
          %6097 = vmatprep.subr.bf16.mxu0 0
          %6098 = vmatpush1.bf16.msra.mxu0 %v6000
          %6099 = vmatprep.subr.bf16.mxu0 0
          %6100 = vmatpush1.bf16.msra.mxu0 %v6001
          %6101 = vmatprep.subr.bf16.mxu0 0
          %6102 = vmatpush1.bf16.msra.mxu0 %v6002
          %6103 = vmatprep.subr.bf16.mxu0 0
          %6104 = vmatpush1.bf16.msra.mxu0 %v6003
          %6105 = vmatprep.subr.bf16.mxu0 0
          %6106 = vmatpush1.bf16.msra.mxu0 %v6004
          %6107 = vmatprep.subr.bf16.mxu0 0
          %6108 = vmatpush1.bf16.msra.mxu0 %v6005
          %6109 = vmatprep.subr.bf16.mxu0 0
          %6110 = vmatpush1.bf16.msra.mxu0 %v6006
          %6111 = vmatprep.subr.bf16.mxu0 0
          %6112 = vmatpush1.bf16.msra.mxu0 %v6007
          %6113 = vmatprep.subr.bf16.mxu0 0
          %6114 = vmatpush1.bf16.msra.mxu0 %v6008
          %6115 = vmatprep.subr.bf16.mxu0 0
          %6116 = vmatpush1.bf16.msra.mxu0 %v6009
          %6117 = vmatprep.subr.bf16.mxu0 0
          %6118 = vmatpush1.bf16.msra.mxu0 %v6010
          %6119 = vmatprep.subr.bf16.mxu0 0
          %6120 = vmatpush1.bf16.msra.mxu0 %v6011
          %6121 = vmatprep.subr.bf16.mxu0 0
          %6122 = vmatpush1.bf16.msra.mxu0 %v6012
          %6123 = vmatprep.subr.bf16.mxu0 0
          %6124 = vmatpush1.bf16.msra.mxu0 %v6013
          %6125 = vmatprep.subr.bf16.mxu0 0
          %6126 = vmatpush1.bf16.msra.mxu0 %v6014
          %6127 = vmatprep.mubr.bf16.mxu0 %v5699
          %6128 = vmatmul.mubr.bf16.gmra.mrb[0].mxu0 %v5698
          %v6129 = vpop.f32.mrb[0].mxu0
          %v6130 = vadd.f32 %v5805, %v6129
          %v6131 = vpop.f32.mrb[0].mxu0
          %v6132 = vpop.f32.mrb[0].mxu0
          %v6133 = vpop.f32.mrb[0].mxu0
          %6134 = vdwg.mxu0
          %6135 = vmatprep.subr.bf16.mxu0 0
          %6136 = vmatpush1.bf16.msra.mxu0 %v6015
          %6137 = vmatprep.subr.bf16.mxu0 0
          %6138 = vmatpush1.bf16.msra.mxu0 %v6016
          %6139 = vmatprep.subr.bf16.mxu0 0
          %6140 = vmatpush1.bf16.msra.mxu0 %v6017
          %6141 = vmatprep.subr.bf16.mxu0 0
          %6142 = vmatpush1.bf16.msra.mxu0 %v6018
          %6143 = vmatprep.subr.bf16.mxu0 0
          %6144 = vmatpush1.bf16.msra.mxu0 %v6019
          %6145 = vmatprep.subr.bf16.mxu0 0
          %6146 = vmatpush1.bf16.msra.mxu0 %v6020
          %6147 = vmatprep.subr.bf16.mxu0 0
          %6148 = vmatpush1.bf16.msra.mxu0 %v6021
          %6149 = vmatprep.subr.bf16.mxu0 0
          %6150 = vmatpush1.bf16.msra.mxu0 %v6022
          %6151 = vmatprep.subr.bf16.mxu0 0
          %6152 = vmatpush1.bf16.msra.mxu0 %v6023
          %6153 = vmatprep.subr.bf16.mxu0 0
          %6154 = vmatpush1.bf16.msra.mxu0 %v6024
          %6155 = vmatprep.subr.bf16.mxu0 0
          %6156 = vmatpush1.bf16.msra.mxu0 %v6025
          %6157 = vmatprep.subr.bf16.mxu0 0
          %6158 = vmatpush1.bf16.msra.mxu0 %v6026
          %6159 = vmatprep.subr.bf16.mxu0 0
          %6160 = vmatpush1.bf16.msra.mxu0 %v6027
          %6161 = vmatprep.subr.bf16.mxu0 0
          %6162 = vmatpush1.bf16.msra.mxu0 %v6028
          %6163 = vmatprep.subr.bf16.mxu0 0
          %6164 = vmatpush1.bf16.msra.mxu0 %v6029
          %6165 = vmatprep.subr.bf16.mxu0 0
          %6166 = vmatpush1.bf16.msra.mxu0 %v6030
          %6167 = vmatprep.mubr.bf16.mxu0 %v5701
          %6168 = vmatmul.mubr.bf16.gmra.mrb[0].mxu0 %v5700
          %v6169 = vpop.f32.mrb[0].mxu0
          %v6170 = vadd.f32 %v6130, %v6169
          %v6171 = vpop.f32.mrb[0].mxu0
          %v6172 = vpop.f32.mrb[0].mxu0
          %v6173 = vpop.f32.mrb[0].mxu0
          %6174 = vdwg.mxu0
          %6175 = vmatprep.subr.bf16.mxu0 0
          %6176 = vmatpush1.bf16.msra.mxu0 %v6031
          %6177 = vmatprep.subr.bf16.mxu0 0
          %6178 = vmatpush1.bf16.msra.mxu0 %v6032
          %6179 = vmatprep.subr.bf16.mxu0 0
          %6180 = vmatpush1.bf16.msra.mxu0 %v6033
          %6181 = vmatprep.subr.bf16.mxu0 0
          %6182 = vmatpush1.bf16.msra.mxu0 %v6034
          %6183 = vmatprep.subr.bf16.mxu0 0
          %6184 = vmatpush1.bf16.msra.mxu0 %v6035
          %6185 = vmatprep.subr.bf16.mxu0 0
          %6186 = vmatpush1.bf16.msra.mxu0 %v6036
          %6187 = vmatprep.subr.bf16.mxu0 0
          %6188 = vmatpush1.bf16.msra.mxu0 %v6037
          %6189 = vmatprep.subr.bf16.mxu0 0
          %6190 = vmatpush1.bf16.msra.mxu0 %v6038
          %6191 = vmatprep.subr.bf16.mxu0 0
          %6192 = vmatpush1.bf16.msra.mxu0 %v6039
          %6193 = vmatprep.subr.bf16.mxu0 0
          %6194 = vmatpush1.bf16.msra.mxu0 %v6040
          %6195 = vmatprep.subr.bf16.mxu0 0
          %6196 = vmatpush1.bf16.msra.mxu0 %v6041
          %6197 = vmatprep.subr.bf16.mxu0 0
          %6198 = vmatpush1.bf16.msra.mxu0 %v6042
          %6199 = vmatprep.subr.bf16.mxu0 0
          %6200 = vmatpush1.bf16.msra.mxu0 %v6043
          %6201 = vmatprep.subr.bf16.mxu0 0
          %6202 = vmatpush1.bf16.msra.mxu0 %v6044
          %6203 = vmatprep.subr.bf16.mxu0 0
          %6204 = vmatpush1.bf16.msra.mxu0 %v6045
          %6205 = vmatprep.subr.bf16.mxu0 0
          %6206 = vmatpush1.bf16.msra.mxu0 %v6046
          %6207 = vmatprep.mubr.bf16.mxu0 %v5703
          %6208 = vmatmul.mubr.bf16.gmra.mrb[0].mxu0 %v5702
          %v6209 = vpop.f32.mrb[0].mxu0
          %v6210 = vadd.f32 %v6170, %v6209
          %v6211 = vpop.f32.mrb[0].mxu0
          %v6212 = vpop.f32.mrb[0].mxu0
          %v6213 = vpop.f32.mrb[0].mxu0
          %6214 = vdwg.mxu0
          %6215 = vst [vmem:[%s12] sm:$0x3] %v6210
        $region108: #{neural_contract_analyzer.1} parent=67 // pred_fallthru
          _
        // Predicated region
        $region109: #{neural_contract_analyzer.1} parent=67 // pred_check
          %p6216 = pneg %p319
        $region110: #{neural_contract_analyzer.1} parent=67 // pred_check_branch
          %6218 = sbr.rel (%p6216) target = $region112
        $region111: #{neural_contract_analyzer.1} parent=67 // pred_region
          _
        $region112: #{neural_contract_analyzer.1} parent=67 // pred_fallthru
          _
        // Predicated region
        $region113: #{neural_contract_analyzer.1} parent=67 // pred_check
          %p6219 = pneg %p319
        $region114: #{neural_contract_analyzer.1} parent=67 // pred_check_branch
          %6221 = sbr.rel (%p6219) target = $region116
        $region115: #{neural_contract_analyzer.1} parent=67 // pred_region
          _
        $region116: #{neural_contract_analyzer.1} parent=67 // pred_fallthru
          _
      $region68: #{neural_contract_analyzer.1} parent=5 // pred_fallthru
        _
      %p6222 = scmp.le.s32.totalorder 2, %s29
      // Predicated region
      $region117: #{neural_contract_analyzer.1} parent=5 // pred_check
        %p6223 = pneg %p6222
      $region118: #{neural_contract_analyzer.1} parent=5 // pred_check_branch
        %6225 = sbr.rel (%p6223) target = $region120
      $region119: #{neural_contract_analyzer.1} parent=5 // pred_region
        %s6226 = ssub.s32 %s29, 2
      $region120: #{neural_contract_analyzer.1} parent=5 // pred_fallthru
        _
    $region6: #{neural_contract_analyzer.1} parent=1 // loop_footer
      %s33 = sadd.s32 1, %s29
    $region7: #{neural_contract_analyzer.1} parent=1 // loop_footer_branch
      %28 = sbr.rel target = $region3
    $region8: #{neural_contract_analyzer.1} parent=1 // loop_exit
      _
    %6227 = vsyncpa [#allocation4], 1
    %s6228 = scalar_lea.sflag [#allocation4], 1
    %6229 = vsyncpa %s6228, 1
    %6230 = vsyncpa [#allocation6], 1
    %s6231 = scalar_lea.sflag [#allocation6], 1
    %6232 = vsyncpa %s6231, 1
    %6233 = vsyncpa [#allocation9], 1
    %s6234 = scalar_lea.sflag [#allocation9], 1
    %6235 = vsyncpa %s6234, 1
    %6236 = vsyncpa [#allocation12], 1
    %6237 = vsyncpa [#allocation15], 1

</llo_original>
